<compile_context>
chip_gen: v7x
topology: tpu7x:2x2x1
jax: 0.10.0
libtpu: 0.0.40
codegen_flags: <defaults>
</compile_context>

<pallas_src>
import functools

import jax
import jax.numpy as jnp
from jax import lax
from jax.experimental import pallas as pl
from jax.experimental.pallas import tpu as pltpu

_BN_EPS = 1e-5
_LANE = 128
_VMEM_FLOOR = 32 * 1024 * 1024   # above v5e's 16 MiB scoped default
_VMEM_CEIL = 48 * 1024 * 1024    # headroom inside v7x's 64 MiB physical VMEM


def _vmem_limit(bytes_needed):
    return int(min(max(2 * bytes_needed, _VMEM_FLOOR), _VMEM_CEIL))


# --------------------------------------------------------------------------
# Kernel 1: fused  conv(im2col GEMM)  +  BatchNorm(train)  +  ReLU
# --------------------------------------------------------------------------
def _conv_bn_relu_kernel(x_ref, w_ref, gamma_ref, beta_ref, o_ref,
                         sum_ref, ssq_ref, *, inv_m, tm):
    """Grid: (M // tm,) over rows of the patch matrix, axis marked "arbitrary".

    x_ref:     (tm, K)    bf16 patch tile for this grid step (pipelined)
    w_ref:     (K, Cpad)  bf16 weight matrix (resident, lane-padded to 128)
    gamma/beta:(1, Cpad)  f32 BN affine parameters (zero on padded lanes)
    o_ref:     (M, Cpad)  bf16 FULL output, resident across the grid
    sum_ref:   (1, Cpad)  f32 scratch: per-channel running sum
    ssq_ref:   (1, Cpad)  f32 scratch: per-channel running sum of squares
    """
    i = pl.program_id(0)

    @pl.when(i == 0)
    def _init():
        sum_ref[...] = jnp.zeros_like(sum_ref)
        ssq_ref[...] = jnp.zeros_like(ssq_ref)

    # bf16 x bf16 -> f32 accumulate on the MXU.
    acc = jnp.dot(x_ref[...], w_ref[...], preferred_element_type=jnp.float32)

    # Single-pass BN statistics in f32 (before the bf16 downcast of the tile).
    # NOTE: E[x^2]-E[x]^2 is cancellation-prone for large |mean|/std; fine for
    # a GAN discriminator at these magnitudes.
    sum_ref[...] += jnp.sum(acc, axis=0, keepdims=True)
    ssq_ref[...] += jnp.sum(acc * acc, axis=0, keepdims=True)

    # Stash the pre-BN conv tile into the VMEM-resident bf16 output.
    row0 = pl.multiple_of(i * tm, tm)
    o_ref[pl.ds(row0, tm), :] = acc.astype(o_ref.dtype)

    # Finalize on the last grid step: normalize + ReLU the whole resident output.
    @pl.when(i == pl.num_programs(0) - 1)
    def _finalize():
        mean = sum_ref[...] * inv_m
        var = jnp.maximum(ssq_ref[...] * inv_m - mean * mean, 0.0)  # biased (train)
        scale = gamma_ref[...] * lax.rsqrt(var + _BN_EPS)
        shift = beta_ref[...] - mean * scale
        y = o_ref[...].astype(jnp.float32) * scale + shift
        o_ref[...] = jnp.maximum(y, 0.0).astype(o_ref.dtype)


def _im2col(x_nhwc, ksize, stride, pad, dtype=jnp.bfloat16):
    """XLA-side patch extraction; rows ordered (b, i, j), columns (kh, kw, c)."""
    # TODO(synk): move patch formation in-kernel (strided taps) to avoid the
    # ~4x patch replication through HBM; strided 2-axis VMEM slicing is not
    # reliably lowerable today.
    B, H, W, C = x_nhwc.shape
    xp = jnp.pad(x_nhwc.astype(dtype), ((0, 0), (pad, pad), (pad, pad), (0, 0)))
    Ho = (H + 2 * pad - ksize) // stride + 1
    Wo = (W + 2 * pad - ksize) // stride + 1
    cols = []
    for kh in range(ksize):
        for kw in range(ksize):
            cols.append(
                xp[:, kh: kh + stride * Ho: stride, kw: kw + stride * Wo: stride, :]
            )
    patches = jnp.concatenate(cols, axis=-1)        # (B, Ho, Wo, k*k*C)
    return patches.reshape(B * Ho * Wo, ksize * ksize * C), B, Ho, Wo


def _pick_tm(m, tm_max=512):
    """Largest row-tile <= tm_max dividing M, preferring multiples of 16 (bf16)."""
    if m <= tm_max:
        return m
    top16 = tm_max - (tm_max % 16)
    for cand in range(top16, 15, -16):
        if m % cand == 0:
            return cand
    for cand in range(tm_max, 1, -1):
        if m % cand == 0:
            return cand
    return m  # prime M > tm_max: single tile (no M-pipelining)


def conv_bn_relu(x_nhwc, w_oihw, gamma, beta, *, stride=2, pad=1):
    """One downsampler layer: spectral-normed 4x4/s2 conv (no bias) + BN + ReLU."""
    Cout, Cin, kh, kw = w_oihw.shape
    patches, B, Ho, Wo = _im2col(x_nhwc, kh, stride, pad)
    M, K = patches.shape

    # Lane-dense output: pad Cout up to a multiple of 128 lanes.
    Cpad = ((Cout + _LANE - 1) // _LANE) * _LANE
    wmat = jnp.transpose(w_oihw, (2, 3, 1, 0)).reshape(K, Cout)
    wmat = jnp.pad(wmat, ((0, 0), (0, Cpad - Cout))).astype(jnp.bfloat16)
    gpad = jnp.pad(gamma.astype(jnp.float32), (0, Cpad - Cout)).reshape(1, Cpad)
    bpad = jnp.pad(beta.astype(jnp.float32), (0, Cpad - Cout)).reshape(1, Cpad)

    tm = _pick_tm(M)
    n_tiles = M // tm
    kern = functools.partial(_conv_bn_relu_kernel, inv_m=1.0 / float(M), tm=tm)

    # VMEM budget derived from actual buffers (resident bf16 output, bf16
    # weight, 2x double-buffered bf16 patch tile, small f32 vectors).
    bytes_needed = (M * Cpad * 2          # resident output (bf16)
                    + K * Cpad * 2        # weight (bf16)
                    + 2 * tm * K * 2      # double-buffered patch tile (bf16)
                    + 6 * Cpad * 4)       # gamma/beta/sum/ssq (f32)

    y = pl.pallas_call(
        kern,
        out_shape=jax.ShapeDtypeStruct((M, Cpad), jnp.bfloat16),
        grid=(n_tiles,),
        in_specs=[
            pl.BlockSpec((tm, K), lambda i: (i, 0)),       # patch tile (pipelined)
            pl.BlockSpec((K, Cpad), lambda i: (0, 0)),     # weight (resident)
            pl.BlockSpec((1, Cpad), lambda i: (0, 0)),     # gamma
            pl.BlockSpec((1, Cpad), lambda i: (0, 0)),     # beta
        ],
        out_specs=pl.BlockSpec((M, Cpad), lambda i: (0, 0)),   # resident output
        scratch_shapes=[pltpu.VMEM((1, Cpad), jnp.float32),
                        pltpu.VMEM((1, Cpad), jnp.float32)],
        compiler_params=pltpu.CompilerParams(
            dimension_semantics=("arbitrary",),            # BN couples all M tiles
            vmem_limit_bytes=_vmem_limit(bytes_needed)),
    )(patches, wmat, gpad, bpad)
    return y[:, :Cout].reshape(B, Ho, Wo, Cout)            # bf16 feature map


# --------------------------------------------------------------------------
# Kernel 2: fused output head
#   lab  = relu(label @ enc_wT + enc_b)
#   h1   = relu(xfeat @ w1x + broadcast_S(lab @ w1l))        (1x1 conv + ReLU)
#   out  = sigmoid( sum_{s,c} h1[b,s,c] * w2[s,c] + b2 )     (4x4 valid conv)
# No bcast/pool/w2_tiled helper matrices; lab broadcast and the final
# reduction are done with a tiny static per-batch epilogue.
# --------------------------------------------------------------------------
def _head_kernel(label_ref, encw_ref, encb_ref, x_ref, w1x_ref, w1l_ref,
                 w2_ref, b2_ref, o_ref, *, batch, s):
    f32 = jnp.float32
    # Encoder: Linear + ReLU (bf16 MXU, f32 accumulate + epilogue).
    lab = jnp.maximum(
        jnp.dot(label_ref[...], encw_ref[...], preferred_element_type=f32)
        + encb_ref[...], 0.0)                                          # (B, E)
    # Label half of the 1x1 conv.
    lab_half = jnp.dot(lab.astype(jnp.bfloat16), w1l_ref[...],
                       preferred_element_type=f32)                     # (B, Cf)
    # Feature half of the 1x1 conv: one GEMM over all B*S rows.
    feat = jnp.dot(x_ref[...], w1x_ref[...],
                   preferred_element_type=f32)                         # (B*S, Cf)
    w2 = w2_ref[...].astype(f32)                                       # (S, Cf)
    # Tiny static per-batch epilogue (B is small & known at trace time).
    for b in range(batch):
        h1_b = jnp.maximum(feat[b * s:(b + 1) * s, :] + lab_half[b:b + 1, :], 0.0)
        z_b = h1_b * w2                                                # (S, Cf)
        logit = jnp.sum(jnp.sum(z_b, axis=1, keepdims=True),
                        axis=0, keepdims=True)                         # (1, 1)
        logit = logit + b2_ref[...]
        o_ref[pl.ds(b, 1), :] = 1.0 / (1.0 + jnp.exp(-logit))          # sigmoid


# --------------------------------------------------------------------------
# Plain-JAX parameter setup (spectral norm as a weight re-parameterization)
# --------------------------------------------------------------------------
def spectral_normalize(w, key, n_iter=3):
    w_mat = w.reshape(w.shape[0], -1)
    u = jax.random.normal(key, (w_mat.shape[0],), dtype=jnp.float32)
    u = u / (jnp.linalg.norm(u) + 1e-12)
    v = None
    for _ in range(n_iter):
        v = w_mat.T @ u
        v = v / (jnp.linalg.norm(v) + 1e-12)
        u = w_mat @ v
        u = u / (jnp.linalg.norm(u) + 1e-12)
    sigma = u @ (w_mat @ v)
    return w / sigma


def init_params(config, key):
    d_dim = config["d_dim"]
    keys = jax.random.split(key, 16)
    ki = iter(range(16))

    def nrm(k, shape):
        return 0.1 * jax.random.normal(k, shape, dtype=jnp.float32)

    params = {}
    # encoder: spectral_norm(Linear(label_dim, encoding_dim)) + ReLU
    enc_w = nrm(keys[next(ki)], (config["encoding_dim"], config["label_dim"]))
    params["enc_w"] = spectral_normalize(enc_w, keys[next(ki)])
    params["enc_b"] = nrm(keys[next(ki)], (config["encoding_dim"],))

    # downsampler: [SN-Conv(4,2,1,no-bias) -> BN -> ReLU] * (d_layers + 1)
    down = []
    ch_in, ch_out = 3, d_dim
    for _ in range(config["d_layers"] + 1):
        w = nrm(keys[next(ki)], (ch_out, ch_in, 4, 4))
        w = spectral_normalize(w, keys[next(ki)])
        gamma = jnp.ones((ch_out,), jnp.float32)
        beta = jnp.zeros((ch_out,), jnp.float32)
        down.append((w, gamma, beta))
        ch_in, ch_out = ch_out, ch_out * 2
    params["down"] = down
    channel = ch_in

    # output head: SN 1x1 conv (no bias) -> ReLU -> SN 4x4 valid conv (+bias) -> Sigmoid
    w1 = nrm(keys[next(ki)], (channel, channel + config["encoding_dim"], 1, 1))
    params["out_w1"] = spectral_normalize(w1, keys[next(ki)])
    w2 = nrm(keys[next(ki)], (1, channel, 4, 4))
    params["out_w2"] = spectral_normalize(w2, keys[next(ki)])
    params["out_b2"] = nrm(keys[next(ki)], (1,))
    return params


# --------------------------------------------------------------------------
# Forward pass (semantics of Discriminator.forward)
# --------------------------------------------------------------------------
def discriminator_forward(params, image_nchw, label, config):
    B = image_nchw.shape[0]
    x = jnp.transpose(image_nchw, (0, 2, 3, 1))        # NCHW -> NHWC

    # downsampler (each layer is one fused pallas_call; activations stay bf16)
    for w, gamma, beta in params["down"]:
        x = conv_bn_relu(x, w, gamma, beta)

    _, Hf, Wf, Cf = x.shape
    S = Hf * Wf
    enc = config["encoding_dim"]
    ldim = config["label_dim"]
    xfeat = x.reshape(B * S, Cf).astype(jnp.bfloat16)   # rows ordered (b, i, j)

    # Split the 1x1 conv weight into feature- and label-channel halves
    # (torch.cat([net, label], dim=1) ordering: features first, labels second).
    w1 = params["out_w1"][:, :, 0, 0]                            # (Cf, Cf + enc)
    w1x = jnp.transpose(w1[:, :Cf]).astype(jnp.bfloat16)         # (Cf,  Cf)
    w1l = jnp.transpose(w1[:, Cf:]).astype(jnp.bfloat16)         # (enc, Cf)
    # Final 4x4 valid conv weight laid out per (spatial, channel) once.
    w2_sc = jnp.transpose(params["out_w2"][0], (1, 2, 0)).reshape(S, Cf)
    w2_sc = w2_sc.astype(jnp.bfloat16)                           # (S, Cf)

    head_kern = functools.partial(_head_kernel, batch=B, s=S)
    head_bytes = (B * S * Cf * 2 + Cf * Cf * 2 + enc * Cf * 2 + S * Cf * 2
                  + B * ldim * 2 + ldim * enc * 2 + enc * 4 + B * 4 + 4)

    out = pl.pallas_call(
        head_kern,
        out_shape=jax.ShapeDtypeStruct((B, 1), jnp.float32),
        in_specs=[pl.BlockSpec(memory_space=pltpu.MemorySpace.VMEM)] * 8,
        out_specs=pl.BlockSpec(memory_space=pltpu.MemorySpace.VMEM),
        compiler_params=pltpu.CompilerParams(
            vmem_limit_bytes=_vmem_limit(head_bytes)),
    )(
        label.astype(jnp.bfloat16),
        jnp.transpose(params["enc_w"]).astype(jnp.bfloat16),     # (label_dim, enc)
        params["enc_b"].reshape(1, enc).astype(jnp.float32),
        xfeat,
        w1x,
        w1l,
        w2_sc,
        params["out_b2"].reshape(1, 1).astype(jnp.float32),
    )
    return out                                          # (B, 1) == net.view(B, 1)


# --------------------------------------------------------------------------
if __name__ == "__main__":
    config = {"d_dim": 4, "label_dim": 8, "encoding_dim": 8, "d_layers": 2}
    # image 32x32: 3 stride-2 convs -> 4x4 feature map; final 4x4 valid conv -> 1x1
    key = jax.random.PRNGKey(0)
    k_param, k_img, k_lab = jax.random.split(key, 3)

    params = init_params(config, k_param)
    image = jax.random.normal(k_img, (2, 3, 32, 32), dtype=jnp.float32)  # NCHW
    label = jax.random.normal(k_lab, (2, config["label_dim"]), dtype=jnp.float32)

    fwd = jax.jit(functools.partial(discriminator_forward, config=config))
    out = fwd(params, image, label)
    out = jax.block_until_ready(out)

    assert out.shape == (2, 1)
    assert bool(jnp.all(jnp.isfinite(out)))
    assert bool(jnp.all((out >= 0.0) & (out <= 1.0)))  # sigmoid range
    print("KERNEL_OK")
</pallas_src>

<mosaic_0001>
module attributes {stable_mosaic.version = 11 : i64} {
  func.func @_conv_bn_relu_kernel(%arg0: i32, %arg1: memref<512x48xbf16, #tpu.memory_space<vmem>>, %arg2: memref<48x128xbf16, #tpu.memory_space<vmem>>, %arg3: memref<1x128xf32, #tpu.memory_space<vmem>>, %arg4: memref<1x128xf32, #tpu.memory_space<vmem>>, %arg5: memref<512x128xbf16, #tpu.memory_space<vmem>>, %arg6: memref<1x128xf32, #tpu.memory_space<vmem>>, %arg7: memref<1x128xf32, #tpu.memory_space<vmem>>) attributes {dimension_semantics = [#tpu.dimension_semantics<arbitrary>], iteration_bounds = array<i64: 1>, scalar_prefetch = 0 : i64, scratch_operands = 2 : i64, tpu.core_type = #tpu.core_type<tc>, window_params = [{transform_indices = @transform_0, window_bounds = array<i64: 512, 48>}, {pipeline_mode = #tpu.pipeline_mode<synchronous>, transform_indices = @transform_1, window_bounds = array<i64: 48, 128>}, {pipeline_mode = #tpu.pipeline_mode<synchronous>, transform_indices = @transform_2, window_bounds = array<i64: 1, 128>}, {pipeline_mode = #tpu.pipeline_mode<synchronous>, transform_indices = @transform_3, window_bounds = array<i64: 1, 128>}, {pipeline_mode = #tpu.pipeline_mode<synchronous>, transform_indices = @transform_4, window_bounds = array<i64: 512, 128>}]} {
    %c0_i32 = arith.constant 0 : i32
    %0 = arith.cmpi eq, %arg0, %c0_i32 : i32
    %1 = arith.extui %0 : i1 to i32
    %c0_i32_0 = arith.constant 0 : i32
    %2 = arith.cmpi ne, %1, %c0_i32_0 : i32
    scf.if %2 {
      %cst_17 = arith.constant 0.000000e+00 : f32
      %25 = vector.broadcast %cst_17 : f32 to vector<1x128xf32>
      %c0_18 = arith.constant 0 : index
      %c0_19 = arith.constant 0 : index
      %26 = vector.load %arg6[%c0_18, %c0_19] : memref<1x128xf32, #tpu.memory_space<vmem>>, vector<1x128xf32>
      tpu.vector_store %arg6[%c0_18, %c0_19], %25 {strides = array<i32>} : memref<1x128xf32, #tpu.memory_space<vmem>>, vector<1x128xf32>,
      %cst_20 = arith.constant 0.000000e+00 : f32
      %27 = vector.broadcast %cst_20 : f32 to vector<1x128xf32>
      %c0_21 = arith.constant 0 : index
      %c0_22 = arith.constant 0 : index
      %28 = vector.load %arg7[%c0_21, %c0_22] : memref<1x128xf32, #tpu.memory_space<vmem>>, vector<1x128xf32>
      tpu.vector_store %arg7[%c0_21, %c0_22], %27 {strides = array<i32>} : memref<1x128xf32, #tpu.memory_space<vmem>>, vector<1x128xf32>,
    } else {
    }
    %c0 = arith.constant 0 : index
    %c0_1 = arith.constant 0 : index
    %3 = vector.load %arg1[%c0, %c0_1] : memref<512x48xbf16, #tpu.memory_space<vmem>>, vector<512x48xbf16>
    %c0_2 = arith.constant 0 : index
    %c0_3 = arith.constant 0 : index
    %4 = vector.load %arg2[%c0_2, %c0_3] : memref<48x128xbf16, #tpu.memory_space<vmem>>, vector<48x128xbf16>
    %cst = arith.constant dense<0.000000e+00> : vector<512x128xf32>
    %5 = tpu.matmul %3, %4, %cst {dimension_numbers = #tpu.dot_dimension_numbers<[1], [0], [0], [1], [0, 0, 1, 1], [], []>} : vector<512x48xbf16>, vector<48x128xbf16>, vector<512x128xf32> -> vector<512x128xf32>
    %c0_4 = arith.constant 0 : index
    %c0_5 = arith.constant 0 : index
    %6 = vector.load %arg6[%c0_4, %c0_5] : memref<1x128xf32, #tpu.memory_space<vmem>>, vector<1x128xf32>
    %cst_6 = arith.constant dense<0.000000e+00> : vector<128xf32>
    %7 = vector.multi_reduction <add>, %5, %cst_6 [0] : vector<512x128xf32> to vector<128xf32>
    %8 = vector.shape_cast %7 : vector<128xf32> to vector<1x128xf32>
    %9 = arith.addf %6, %8 : vector<1x128xf32>
    %c0_7 = arith.constant 0 : index
    %c0_8 = arith.constant 0 : index
    %10 = vector.load %arg6[%c0_7, %c0_8] : memref<1x128xf32, #tpu.memory_space<vmem>>, vector<1x128xf32>
    tpu.vector_store %arg6[%c0_7, %c0_8], %9 {strides = array<i32>} : memref<1x128xf32, #tpu.memory_space<vmem>>, vector<1x128xf32>,
    %c0_9 = arith.constant 0 : index
    %c0_10 = arith.constant 0 : index
    %11 = vector.load %arg7[%c0_9, %c0_10] : memref<1x128xf32, #tpu.memory_space<vmem>>, vector<1x128xf32>
    %12 = arith.mulf %5, %5 : vector<512x128xf32>
    %cst_11 = arith.constant dense<0.000000e+00> : vector<128xf32>
    %13 = vector.multi_reduction <add>, %12, %cst_11 [0] : vector<512x128xf32> to vector<128xf32>
    %14 = vector.shape_cast %13 : vector<128xf32> to vector<1x128xf32>
    %15 = arith.addf %11, %14 : vector<1x128xf32>
    %c0_12 = arith.constant 0 : index
    %c0_13 = arith.constant 0 : index
    %16 = vector.load %arg7[%c0_12, %c0_13] : memref<1x128xf32, #tpu.memory_space<vmem>>, vector<1x128xf32>
    tpu.vector_store %arg7[%c0_12, %c0_13], %15 {strides = array<i32>} : memref<1x128xf32, #tpu.memory_space<vmem>>, vector<1x128xf32>,
    %c512_i32 = arith.constant 512 : i32
    %17 = arith.muli %arg0, %c512_i32 : i32
    %18 = tpu.assume_multiple %17, 512 : i32
    %19 = arith.truncf %5 : vector<512x128xf32> to vector<512x128xbf16>
    %20 = arith.index_cast %18 : i32 to index
    %c0_14 = arith.constant 0 : index
    %21 = vector.load %arg5[%20, %c0_14] : memref<512x128xbf16, #tpu.memory_space<vmem>>, vector<512x128xbf16>
    tpu.vector_store %arg5[%20, %c0_14], %19 {strides = array<i32>} : memref<512x128xbf16, #tpu.memory_space<vmem>>, vector<512x128xbf16>,
    %c0_i32_15 = arith.constant 0 : i32
    %22 = arith.cmpi eq, %arg0, %c0_i32_15 : i32
    %23 = arith.extui %22 : i1 to i32
    %c0_i32_16 = arith.constant 0 : i32
    %24 = arith.cmpi ne, %23, %c0_i32_16 : i32
    scf.if %24 {
      %c0_17 = arith.constant 0 : index
      %c0_18 = arith.constant 0 : index
      %25 = vector.load %arg6[%c0_17, %c0_18] : memref<1x128xf32, #tpu.memory_space<vmem>>, vector<1x128xf32>
      %cst_19 = arith.constant 0.001953125 : f32
      %26 = vector.broadcast %cst_19 : f32 to vector<1x128xf32>
      %27 = arith.mulf %25, %26 : vector<1x128xf32>
      %c0_20 = arith.constant 0 : index
      %c0_21 = arith.constant 0 : index
      %28 = vector.load %arg7[%c0_20, %c0_21] : memref<1x128xf32, #tpu.memory_space<vmem>>, vector<1x128xf32>
      %cst_22 = arith.constant 0.001953125 : f32
      %29 = vector.broadcast %cst_22 : f32 to vector<1x128xf32>
      %30 = arith.mulf %28, %29 : vector<1x128xf32>
      %31 = arith.mulf %27, %27 : vector<1x128xf32>
      %32 = arith.subf %30, %31 : vector<1x128xf32>
      %cst_23 = arith.constant 0.000000e+00 : f32
      %33 = vector.broadcast %cst_23 : f32 to vector<1x128xf32>
      %34 = arith.maximumf %32, %33 : vector<1x128xf32>
      %c0_24 = arith.constant 0 : index
      %c0_25 = arith.constant 0 : index
      %35 = vector.load %arg3[%c0_24, %c0_25] : memref<1x128xf32, #tpu.memory_space<vmem>>, vector<1x128xf32>
      %cst_26 = arith.constant 9.99999974E-6 : f32
      %36 = vector.broadcast %cst_26 : f32 to vector<1x128xf32>
      %37 = arith.addf %34, %36 : vector<1x128xf32>
      %38 = math.rsqrt %37 : vector<1x128xf32>
      %39 = arith.mulf %35, %38 : vector<1x128xf32>
      %c0_27 = arith.constant 0 : index
      %c0_28 = arith.constant 0 : index
      %40 = vector.load %arg4[%c0_27, %c0_28] : memref<1x128xf32, #tpu.memory_space<vmem>>, vector<1x128xf32>
      %41 = arith.mulf %27, %39 : vector<1x128xf32>
      %42 = arith.subf %40, %41 : vector<1x128xf32>
      %c0_29 = arith.constant 0 : index
      %c0_30 = arith.constant 0 : index
      %43 = vector.load %arg5[%c0_29, %c0_30] : memref<512x128xbf16, #tpu.memory_space<vmem>>, vector<512x128xbf16>
      %44 = arith.extf %43 : vector<512x128xbf16> to vector<512x128xf32>
      %45 = vector.broadcast %39 : vector<1x128xf32> to vector<512x128xf32>
      %46 = arith.mulf %44, %45 : vector<512x128xf32>
      %47 = vector.broadcast %42 : vector<1x128xf32> to vector<512x128xf32>
      %48 = arith.addf %46, %47 : vector<512x128xf32>
      %cst_31 = arith.constant 0.000000e+00 : f32
      %49 = vector.broadcast %cst_31 : f32 to vector<512x128xf32>
      %50 = arith.maximumf %48, %49 : vector<512x128xf32>
      %51 = arith.truncf %50 : vector<512x128xf32> to vector<512x128xbf16>
      %c0_32 = arith.constant 0 : index
      %c0_33 = arith.constant 0 : index
      %52 = vector.load %arg5[%c0_32, %c0_33] : memref<512x128xbf16, #tpu.memory_space<vmem>>, vector<512x128xbf16>
      tpu.vector_store %arg5[%c0_32, %c0_33], %51 {strides = array<i32>} : memref<512x128xbf16, #tpu.memory_space<vmem>>, vector<512x128xbf16>,
    } else {
    }
    return
  }
  func.func @transform_0(%arg0: i32) -> (i32, i32) {
    %c0_i32 = arith.constant 0 : i32
    %c0_i32_0 = arith.constant 0 : i32
    return %arg0, %c0_i32 : i32, i32
  }
  func.func @transform_1(%arg0: i32) -> (i32, i32) {
    %c0_i32 = arith.constant 0 : i32
    %c0_i32_0 = arith.constant 0 : i32
    %c0_i32_1 = arith.constant 0 : i32
    return %c0_i32, %c0_i32_0 : i32, i32
  }
  func.func @transform_2(%arg0: i32) -> (i32, i32) {
    %c0_i32 = arith.constant 0 : i32
    %c0_i32_0 = arith.constant 0 : i32
    %c0_i32_1 = arith.constant 0 : i32
    return %c0_i32, %c0_i32_0 : i32, i32
  }
  func.func @transform_3(%arg0: i32) -> (i32, i32) {
    %c0_i32 = arith.constant 0 : i32
    %c0_i32_0 = arith.constant 0 : i32
    %c0_i32_1 = arith.constant 0 : i32
    return %c0_i32, %c0_i32_0 : i32, i32
  }
  func.func @transform_4(%arg0: i32) -> (i32, i32) {
    %c0_i32 = arith.constant 0 : i32
    %c0_i32_0 = arith.constant 0 : i32
    %c0_i32_1 = arith.constant 0 : i32
    return %c0_i32, %c0_i32_0 : i32, i32
  }
}

module attributes {stable_mosaic.version = 11 : i64} {
  func.func @_conv_bn_relu_kernel(%arg0: i32, %arg1: memref<128x64xbf16, #tpu.memory_space<vmem>>, %arg2: memref<64x128xbf16, #tpu.memory_space<vmem>>, %arg3: memref<1x128xf32, #tpu.memory_space<vmem>>, %arg4: memref<1x128xf32, #tpu.memory_space<vmem>>, %arg5: memref<128x128xbf16, #tpu.memory_space<vmem>>, %arg6: memref<1x128xf32, #tpu.memory_space<vmem>>, %arg7: memref<1x128xf32, #tpu.memory_space<vmem>>) attributes {dimension_semantics = [#tpu.dimension_semantics<arbitrary>], iteration_bounds = array<i64: 1>, scalar_prefetch = 0 : i64, scratch_operands = 2 : i64, tpu.core_type = #tpu.core_type<tc>, window_params = [{transform_indices = @transform_0, window_bounds = array<i64: 128, 64>}, {pipeline_mode = #tpu.pipeline_mode<synchronous>, transform_indices = @transform_1, window_bounds = array<i64: 64, 128>}, {pipeline_mode = #tpu.pipeline_mode<synchronous>, transform_indices = @transform_2, window_bounds = array<i64: 1, 128>}, {pipeline_mode = #tpu.pipeline_mode<synchronous>, transform_indices = @transform_3, window_bounds = array<i64: 1, 128>}, {pipeline_mode = #tpu.pipeline_mode<synchronous>, transform_indices = @transform_4, window_bounds = array<i64: 128, 128>}]} {
    %c0_i32 = arith.constant 0 : i32
    %0 = arith.cmpi eq, %arg0, %c0_i32 : i32
    %1 = arith.extui %0 : i1 to i32
    %c0_i32_0 = arith.constant 0 : i32
    %2 = arith.cmpi ne, %1, %c0_i32_0 : i32
    scf.if %2 {
      %cst_17 = arith.constant 0.000000e+00 : f32
      %25 = vector.broadcast %cst_17 : f32 to vector<1x128xf32>
      %c0_18 = arith.constant 0 : index
      %c0_19 = arith.constant 0 : index
      %26 = vector.load %arg6[%c0_18, %c0_19] : memref<1x128xf32, #tpu.memory_space<vmem>>, vector<1x128xf32>
      tpu.vector_store %arg6[%c0_18, %c0_19], %25 {strides = array<i32>} : memref<1x128xf32, #tpu.memory_space<vmem>>, vector<1x128xf32>,
      %cst_20 = arith.constant 0.000000e+00 : f32
      %27 = vector.broadcast %cst_20 : f32 to vector<1x128xf32>
      %c0_21 = arith.constant 0 : index
      %c0_22 = arith.constant 0 : index
      %28 = vector.load %arg7[%c0_21, %c0_22] : memref<1x128xf32, #tpu.memory_space<vmem>>, vector<1x128xf32>
      tpu.vector_store %arg7[%c0_21, %c0_22], %27 {strides = array<i32>} : memref<1x128xf32, #tpu.memory_space<vmem>>, vector<1x128xf32>,
    } else {
    }
    %c0 = arith.constant 0 : index
    %c0_1 = arith.constant 0 : index
    %3 = vector.load %arg1[%c0, %c0_1] : memref<128x64xbf16, #tpu.memory_space<vmem>>, vector<128x64xbf16>
    %c0_2 = arith.constant 0 : index
    %c0_3 = arith.constant 0 : index
    %4 = vector.load %arg2[%c0_2, %c0_3] : memref<64x128xbf16, #tpu.memory_space<vmem>>, vector<64x128xbf16>
    %cst = arith.constant dense<0.000000e+00> : vector<128x128xf32>
    %5 = tpu.matmul %3, %4, %cst {dimension_numbers = #tpu.dot_dimension_numbers<[1], [0], [0], [1], [0, 0, 1, 1], [], []>} : vector<128x64xbf16>, vector<64x128xbf16>, vector<128x128xf32> -> vector<128x128xf32>
    %c0_4 = arith.constant 0 : index
    %c0_5 = arith.constant 0 : index
    %6 = vector.load %arg6[%c0_4, %c0_5] : memref<1x128xf32, #tpu.memory_space<vmem>>, vector<1x128xf32>
    %cst_6 = arith.constant dense<0.000000e+00> : vector<128xf32>
    %7 = vector.multi_reduction <add>, %5, %cst_6 [0] : vector<128x128xf32> to vector<128xf32>
    %8 = vector.shape_cast %7 : vector<128xf32> to vector<1x128xf32>
    %9 = arith.addf %6, %8 : vector<1x128xf32>
    %c0_7 = arith.constant 0 : index
    %c0_8 = arith.constant 0 : index
    %10 = vector.load %arg6[%c0_7, %c0_8] : memref<1x128xf32, #tpu.memory_space<vmem>>, vector<1x128xf32>
    tpu.vector_store %arg6[%c0_7, %c0_8], %9 {strides = array<i32>} : memref<1x128xf32, #tpu.memory_space<vmem>>, vector<1x128xf32>,
    %c0_9 = arith.constant 0 : index
    %c0_10 = arith.constant 0 : index
    %11 = vector.load %arg7[%c0_9, %c0_10] : memref<1x128xf32, #tpu.memory_space<vmem>>, vector<1x128xf32>
    %12 = arith.mulf %5, %5 : vector<128x128xf32>
    %cst_11 = arith.constant dense<0.000000e+00> : vector<128xf32>
    %13 = vector.multi_reduction <add>, %12, %cst_11 [0] : vector<128x128xf32> to vector<128xf32>
    %14 = vector.shape_cast %13 : vector<128xf32> to vector<1x128xf32>
    %15 = arith.addf %11, %14 : vector<1x128xf32>
    %c0_12 = arith.constant 0 : index
    %c0_13 = arith.constant 0 : index
    %16 = vector.load %arg7[%c0_12, %c0_13] : memref<1x128xf32, #tpu.memory_space<vmem>>, vector<1x128xf32>
    tpu.vector_store %arg7[%c0_12, %c0_13], %15 {strides = array<i32>} : memref<1x128xf32, #tpu.memory_space<vmem>>, vector<1x128xf32>,
    %c128_i32 = arith.constant 128 : i32
    %17 = arith.muli %arg0, %c128_i32 : i32
    %18 = tpu.assume_multiple %17, 128 : i32
    %19 = arith.truncf %5 : vector<128x128xf32> to vector<128x128xbf16>
    %20 = arith.index_cast %18 : i32 to index
    %c0_14 = arith.constant 0 : index
    %21 = vector.load %arg5[%20, %c0_14] : memref<128x128xbf16, #tpu.memory_space<vmem>>, vector<128x128xbf16>
    tpu.vector_store %arg5[%20, %c0_14], %19 {strides = array<i32>} : memref<128x128xbf16, #tpu.memory_space<vmem>>, vector<128x128xbf16>,
    %c0_i32_15 = arith.constant 0 : i32
    %22 = arith.cmpi eq, %arg0, %c0_i32_15 : i32
    %23 = arith.extui %22 : i1 to i32
    %c0_i32_16 = arith.constant 0 : i32
    %24 = arith.cmpi ne, %23, %c0_i32_16 : i32
    scf.if %24 {
      %c0_17 = arith.constant 0 : index
      %c0_18 = arith.constant 0 : index
      %25 = vector.load %arg6[%c0_17, %c0_18] : memref<1x128xf32, #tpu.memory_space<vmem>>, vector<1x128xf32>
      %cst_19 = arith.constant 7.812500e-03 : f32
      %26 = vector.broadcast %cst_19 : f32 to vector<1x128xf32>
      %27 = arith.mulf %25, %26 : vector<1x128xf32>
      %c0_20 = arith.constant 0 : index
      %c0_21 = arith.constant 0 : index
      %28 = vector.load %arg7[%c0_20, %c0_21] : memref<1x128xf32, #tpu.memory_space<vmem>>, vector<1x128xf32>
      %cst_22 = arith.constant 7.812500e-03 : f32
      %29 = vector.broadcast %cst_22 : f32 to vector<1x128xf32>
      %30 = arith.mulf %28, %29 : vector<1x128xf32>
      %31 = arith.mulf %27, %27 : vector<1x128xf32>
      %32 = arith.subf %30, %31 : vector<1x128xf32>
      %cst_23 = arith.constant 0.000000e+00 : f32
      %33 = vector.broadcast %cst_23 : f32 to vector<1x128xf32>
      %34 = arith.maximumf %32, %33 : vector<1x128xf32>
      %c0_24 = arith.constant 0 : index
      %c0_25 = arith.constant 0 : index
      %35 = vector.load %arg3[%c0_24, %c0_25] : memref<1x128xf32, #tpu.memory_space<vmem>>, vector<1x128xf32>
      %cst_26 = arith.constant 9.99999974E-6 : f32
      %36 = vector.broadcast %cst_26 : f32 to vector<1x128xf32>
      %37 = arith.addf %34, %36 : vector<1x128xf32>
      %38 = math.rsqrt %37 : vector<1x128xf32>
      %39 = arith.mulf %35, %38 : vector<1x128xf32>
      %c0_27 = arith.constant 0 : index
      %c0_28 = arith.constant 0 : index
      %40 = vector.load %arg4[%c0_27, %c0_28] : memref<1x128xf32, #tpu.memory_space<vmem>>, vector<1x128xf32>
      %41 = arith.mulf %27, %39 : vector<1x128xf32>
      %42 = arith.subf %40, %41 : vector<1x128xf32>
      %c0_29 = arith.constant 0 : index
      %c0_30 = arith.constant 0 : index
      %43 = vector.load %arg5[%c0_29, %c0_30] : memref<128x128xbf16, #tpu.memory_space<vmem>>, vector<128x128xbf16>
      %44 = arith.extf %43 : vector<128x128xbf16> to vector<128x128xf32>
      %45 = vector.broadcast %39 : vector<1x128xf32> to vector<128x128xf32>
      %46 = arith.mulf %44, %45 : vector<128x128xf32>
      %47 = vector.broadcast %42 : vector<1x128xf32> to vector<128x128xf32>
      %48 = arith.addf %46, %47 : vector<128x128xf32>
      %cst_31 = arith.constant 0.000000e+00 : f32
      %49 = vector.broadcast %cst_31 : f32 to vector<128x128xf32>
      %50 = arith.maximumf %48, %49 : vector<128x128xf32>
      %51 = arith.truncf %50 : vector<128x128xf32> to vector<128x128xbf16>
      %c0_32 = arith.constant 0 : index
      %c0_33 = arith.constant 0 : index
      %52 = vector.load %arg5[%c0_32, %c0_33] : memref<128x128xbf16, #tpu.memory_space<vmem>>, vector<128x128xbf16>
      tpu.vector_store %arg5[%c0_32, %c0_33], %51 {strides = array<i32>} : memref<128x128xbf16, #tpu.memory_space<vmem>>, vector<128x128xbf16>,
    } else {
    }
    return
  }
  func.func @transform_0(%arg0: i32) -> (i32, i32) {
    %c0_i32 = arith.constant 0 : i32
    %c0_i32_0 = arith.constant 0 : i32
    return %arg0, %c0_i32 : i32, i32
  }
  func.func @transform_1(%arg0: i32) -> (i32, i32) {
    %c0_i32 = arith.constant 0 : i32
    %c0_i32_0 = arith.constant 0 : i32
    %c0_i32_1 = arith.constant 0 : i32
    return %c0_i32, %c0_i32_0 : i32, i32
  }
  func.func @transform_2(%arg0: i32) -> (i32, i32) {
    %c0_i32 = arith.constant 0 : i32
    %c0_i32_0 = arith.constant 0 : i32
    %c0_i32_1 = arith.constant 0 : i32
    return %c0_i32, %c0_i32_0 : i32, i32
  }
  func.func @transform_3(%arg0: i32) -> (i32, i32) {
    %c0_i32 = arith.constant 0 : i32
    %c0_i32_0 = arith.constant 0 : i32
    %c0_i32_1 = arith.constant 0 : i32
    return %c0_i32, %c0_i32_0 : i32, i32
  }
  func.func @transform_4(%arg0: i32) -> (i32, i32) {
    %c0_i32 = arith.constant 0 : i32
    %c0_i32_0 = arith.constant 0 : i32
    %c0_i32_1 = arith.constant 0 : i32
    return %c0_i32, %c0_i32_0 : i32, i32
  }
}

module attributes {stable_mosaic.version = 11 : i64} {
  func.func @_conv_bn_relu_kernel(%arg0: i32, %arg1: memref<32x128xbf16, #tpu.memory_space<vmem>>, %arg2: memref<128x128xbf16, #tpu.memory_space<vmem>>, %arg3: memref<1x128xf32, #tpu.memory_space<vmem>>, %arg4: memref<1x128xf32, #tpu.memory_space<vmem>>, %arg5: memref<32x128xbf16, #tpu.memory_space<vmem>>, %arg6: memref<1x128xf32, #tpu.memory_space<vmem>>, %arg7: memref<1x128xf32, #tpu.memory_space<vmem>>) attributes {dimension_semantics = [#tpu.dimension_semantics<arbitrary>], iteration_bounds = array<i64: 1>, scalar_prefetch = 0 : i64, scratch_operands = 2 : i64, tpu.core_type = #tpu.core_type<tc>, window_params = [{transform_indices = @transform_0, window_bounds = array<i64: 32, 128>}, {pipeline_mode = #tpu.pipeline_mode<synchronous>, transform_indices = @transform_1, window_bounds = array<i64: 128, 128>}, {pipeline_mode = #tpu.pipeline_mode<synchronous>, transform_indices = @transform_2, window_bounds = array<i64: 1, 128>}, {pipeline_mode = #tpu.pipeline_mode<synchronous>, transform_indices = @transform_3, window_bounds = array<i64: 1, 128>}, {pipeline_mode = #tpu.pipeline_mode<synchronous>, transform_indices = @transform_4, window_bounds = array<i64: 32, 128>}]} {
    %c0_i32 = arith.constant 0 : i32
    %0 = arith.cmpi eq, %arg0, %c0_i32 : i32
    %1 = arith.extui %0 : i1 to i32
    %c0_i32_0 = arith.constant 0 : i32
    %2 = arith.cmpi ne, %1, %c0_i32_0 : i32
    scf.if %2 {
      %cst_17 = arith.constant 0.000000e+00 : f32
      %25 = vector.broadcast %cst_17 : f32 to vector<1x128xf32>
      %c0_18 = arith.constant 0 : index
      %c0_19 = arith.constant 0 : index
      %26 = vector.load %arg6[%c0_18, %c0_19] : memref<1x128xf32, #tpu.memory_space<vmem>>, vector<1x128xf32>
      tpu.vector_store %arg6[%c0_18, %c0_19], %25 {strides = array<i32>} : memref<1x128xf32, #tpu.memory_space<vmem>>, vector<1x128xf32>,
      %cst_20 = arith.constant 0.000000e+00 : f32
      %27 = vector.broadcast %cst_20 : f32 to vector<1x128xf32>
      %c0_21 = arith.constant 0 : index
      %c0_22 = arith.constant 0 : index
      %28 = vector.load %arg7[%c0_21, %c0_22] : memref<1x128xf32, #tpu.memory_space<vmem>>, vector<1x128xf32>
      tpu.vector_store %arg7[%c0_21, %c0_22], %27 {strides = array<i32>} : memref<1x128xf32, #tpu.memory_space<vmem>>, vector<1x128xf32>,
    } else {
    }
    %c0 = arith.constant 0 : index
    %c0_1 = arith.constant 0 : index
    %3 = vector.load %arg1[%c0, %c0_1] : memref<32x128xbf16, #tpu.memory_space<vmem>>, vector<32x128xbf16>
    %c0_2 = arith.constant 0 : index
    %c0_3 = arith.constant 0 : index
    %4 = vector.load %arg2[%c0_2, %c0_3] : memref<128x128xbf16, #tpu.memory_space<vmem>>, vector<128x128xbf16>
    %cst = arith.constant dense<0.000000e+00> : vector<32x128xf32>
    %5 = tpu.matmul %3, %4, %cst {dimension_numbers = #tpu.dot_dimension_numbers<[1], [0], [0], [1], [0, 0, 1, 1], [], []>} : vector<32x128xbf16>, vector<128x128xbf16>, vector<32x128xf32> -> vector<32x128xf32>
    %c0_4 = arith.constant 0 : index
    %c0_5 = arith.constant 0 : index
    %6 = vector.load %arg6[%c0_4, %c0_5] : memref<1x128xf32, #tpu.memory_space<vmem>>, vector<1x128xf32>
    %cst_6 = arith.constant dense<0.000000e+00> : vector<128xf32>
    %7 = vector.multi_reduction <add>, %5, %cst_6 [0] : vector<32x128xf32> to vector<128xf32>
    %8 = vector.shape_cast %7 : vector<128xf32> to vector<1x128xf32>
    %9 = arith.addf %6, %8 : vector<1x128xf32>
    %c0_7 = arith.constant 0 : index
    %c0_8 = arith.constant 0 : index
    %10 = vector.load %arg6[%c0_7, %c0_8] : memref<1x128xf32, #tpu.memory_space<vmem>>, vector<1x128xf32>
    tpu.vector_store %arg6[%c0_7, %c0_8], %9 {strides = array<i32>} : memref<1x128xf32, #tpu.memory_space<vmem>>, vector<1x128xf32>,
    %c0_9 = arith.constant 0 : index
    %c0_10 = arith.constant 0 : index
    %11 = vector.load %arg7[%c0_9, %c0_10] : memref<1x128xf32, #tpu.memory_space<vmem>>, vector<1x128xf32>
    %12 = arith.mulf %5, %5 : vector<32x128xf32>
    %cst_11 = arith.constant dense<0.000000e+00> : vector<128xf32>
    %13 = vector.multi_reduction <add>, %12, %cst_11 [0] : vector<32x128xf32> to vector<128xf32>
    %14 = vector.shape_cast %13 : vector<128xf32> to vector<1x128xf32>
    %15 = arith.addf %11, %14 : vector<1x128xf32>
    %c0_12 = arith.constant 0 : index
    %c0_13 = arith.constant 0 : index
    %16 = vector.load %arg7[%c0_12, %c0_13] : memref<1x128xf32, #tpu.memory_space<vmem>>, vector<1x128xf32>
    tpu.vector_store %arg7[%c0_12, %c0_13], %15 {strides = array<i32>} : memref<1x128xf32, #tpu.memory_space<vmem>>, vector<1x128xf32>,
    %c32_i32 = arith.constant 32 : i32
    %17 = arith.muli %arg0, %c32_i32 : i32
    %18 = tpu.assume_multiple %17, 32 : i32
    %19 = arith.truncf %5 : vector<32x128xf32> to vector<32x128xbf16>
    %20 = arith.index_cast %18 : i32 to index
    %c0_14 = arith.constant 0 : index
    %21 = vector.load %arg5[%20, %c0_14] : memref<32x128xbf16, #tpu.memory_space<vmem>>, vector<32x128xbf16>
    tpu.vector_store %arg5[%20, %c0_14], %19 {strides = array<i32>} : memref<32x128xbf16, #tpu.memory_space<vmem>>, vector<32x128xbf16>,
    %c0_i32_15 = arith.constant 0 : i32
    %22 = arith.cmpi eq, %arg0, %c0_i32_15 : i32
    %23 = arith.extui %22 : i1 to i32
    %c0_i32_16 = arith.constant 0 : i32
    %24 = arith.cmpi ne, %23, %c0_i32_16 : i32
    scf.if %24 {
      %c0_17 = arith.constant 0 : index
      %c0_18 = arith.constant 0 : index
      %25 = vector.load %arg6[%c0_17, %c0_18] : memref<1x128xf32, #tpu.memory_space<vmem>>, vector<1x128xf32>
      %cst_19 = arith.constant 3.125000e-02 : f32
      %26 = vector.broadcast %cst_19 : f32 to vector<1x128xf32>
      %27 = arith.mulf %25, %26 : vector<1x128xf32>
      %c0_20 = arith.constant 0 : index
      %c0_21 = arith.constant 0 : index
      %28 = vector.load %arg7[%c0_20, %c0_21] : memref<1x128xf32, #tpu.memory_space<vmem>>, vector<1x128xf32>
      %cst_22 = arith.constant 3.125000e-02 : f32
      %29 = vector.broadcast %cst_22 : f32 to vector<1x128xf32>
      %30 = arith.mulf %28, %29 : vector<1x128xf32>
      %31 = arith.mulf %27, %27 : vector<1x128xf32>
      %32 = arith.subf %30, %31 : vector<1x128xf32>
      %cst_23 = arith.constant 0.000000e+00 : f32
      %33 = vector.broadcast %cst_23 : f32 to vector<1x128xf32>
      %34 = arith.maximumf %32, %33 : vector<1x128xf32>
      %c0_24 = arith.constant 0 : index
      %c0_25 = arith.constant 0 : index
      %35 = vector.load %arg3[%c0_24, %c0_25] : memref<1x128xf32, #tpu.memory_space<vmem>>, vector<1x128xf32>
      %cst_26 = arith.constant 9.99999974E-6 : f32
      %36 = vector.broadcast %cst_26 : f32 to vector<1x128xf32>
      %37 = arith.addf %34, %36 : vector<1x128xf32>
      %38 = math.rsqrt %37 : vector<1x128xf32>
      %39 = arith.mulf %35, %38 : vector<1x128xf32>
      %c0_27 = arith.constant 0 : index
      %c0_28 = arith.constant 0 : index
      %40 = vector.load %arg4[%c0_27, %c0_28] : memref<1x128xf32, #tpu.memory_space<vmem>>, vector<1x128xf32>
      %41 = arith.mulf %27, %39 : vector<1x128xf32>
      %42 = arith.subf %40, %41 : vector<1x128xf32>
      %c0_29 = arith.constant 0 : index
      %c0_30 = arith.constant 0 : index
      %43 = vector.load %arg5[%c0_29, %c0_30] : memref<32x128xbf16, #tpu.memory_space<vmem>>, vector<32x128xbf16>
      %44 = arith.extf %43 : vector<32x128xbf16> to vector<32x128xf32>
      %45 = vector.broadcast %39 : vector<1x128xf32> to vector<32x128xf32>
      %46 = arith.mulf %44, %45 : vector<32x128xf32>
      %47 = vector.broadcast %42 : vector<1x128xf32> to vector<32x128xf32>
      %48 = arith.addf %46, %47 : vector<32x128xf32>
      %cst_31 = arith.constant 0.000000e+00 : f32
      %49 = vector.broadcast %cst_31 : f32 to vector<32x128xf32>
      %50 = arith.maximumf %48, %49 : vector<32x128xf32>
      %51 = arith.truncf %50 : vector<32x128xf32> to vector<32x128xbf16>
      %c0_32 = arith.constant 0 : index
      %c0_33 = arith.constant 0 : index
      %52 = vector.load %arg5[%c0_32, %c0_33] : memref<32x128xbf16, #tpu.memory_space<vmem>>, vector<32x128xbf16>
      tpu.vector_store %arg5[%c0_32, %c0_33], %51 {strides = array<i32>} : memref<32x128xbf16, #tpu.memory_space<vmem>>, vector<32x128xbf16>,
    } else {
    }
    return
  }
  func.func @transform_0(%arg0: i32) -> (i32, i32) {
    %c0_i32 = arith.constant 0 : i32
    %c0_i32_0 = arith.constant 0 : i32
    return %arg0, %c0_i32 : i32, i32
  }
  func.func @transform_1(%arg0: i32) -> (i32, i32) {
    %c0_i32 = arith.constant 0 : i32
    %c0_i32_0 = arith.constant 0 : i32
    %c0_i32_1 = arith.constant 0 : i32
    return %c0_i32, %c0_i32_0 : i32, i32
  }
  func.func @transform_2(%arg0: i32) -> (i32, i32) {
    %c0_i32 = arith.constant 0 : i32
    %c0_i32_0 = arith.constant 0 : i32
    %c0_i32_1 = arith.constant 0 : i32
    return %c0_i32, %c0_i32_0 : i32, i32
  }
  func.func @transform_3(%arg0: i32) -> (i32, i32) {
    %c0_i32 = arith.constant 0 : i32
    %c0_i32_0 = arith.constant 0 : i32
    %c0_i32_1 = arith.constant 0 : i32
    return %c0_i32, %c0_i32_0 : i32, i32
  }
  func.func @transform_4(%arg0: i32) -> (i32, i32) {
    %c0_i32 = arith.constant 0 : i32
    %c0_i32_0 = arith.constant 0 : i32
    %c0_i32_1 = arith.constant 0 : i32
    return %c0_i32, %c0_i32_0 : i32, i32
  }
}

module attributes {stable_mosaic.version = 11 : i64} {
  func.func @_head_kernel(%arg0: memref<2x8xbf16, #tpu.memory_space<vmem>>, %arg1: memref<8x8xbf16, #tpu.memory_space<vmem>>, %arg2: memref<1x8xf32, #tpu.memory_space<vmem>>, %arg3: memref<32x16xbf16, #tpu.memory_space<vmem>>, %arg4: memref<16x16xbf16, #tpu.memory_space<vmem>>, %arg5: memref<8x16xbf16, #tpu.memory_space<vmem>>, %arg6: memref<16x16xbf16, #tpu.memory_space<vmem>>, %arg7: memref<1x1xf32, #tpu.memory_space<vmem>>, %arg8: memref<2x1xf32, #tpu.memory_space<vmem>>) attributes {dimension_semantics = [], scalar_prefetch = 0 : i64, scratch_operands = 0 : i64, tpu.core_type = #tpu.core_type<tc>} {
    %c0 = arith.constant 0 : index
    %c0_0 = arith.constant 0 : index
    %0 = vector.load %arg0[%c0, %c0_0] : memref<2x8xbf16, #tpu.memory_space<vmem>>, vector<2x8xbf16>
    %c0_1 = arith.constant 0 : index
    %c0_2 = arith.constant 0 : index
    %1 = vector.load %arg1[%c0_1, %c0_2] : memref<8x8xbf16, #tpu.memory_space<vmem>>, vector<8x8xbf16>
    %cst = arith.constant dense<0.000000e+00> : vector<2x8xf32>
    %2 = tpu.matmul %0, %1, %cst {dimension_numbers = #tpu.dot_dimension_numbers<[1], [0], [0], [1], [0, 0, 1, 1], [], []>} : vector<2x8xbf16>, vector<8x8xbf16>, vector<2x8xf32> -> vector<2x8xf32>
    %c0_3 = arith.constant 0 : index
    %c0_4 = arith.constant 0 : index
    %3 = vector.load %arg2[%c0_3, %c0_4] : memref<1x8xf32, #tpu.memory_space<vmem>>, vector<1x8xf32>
    %4 = vector.broadcast %3 : vector<1x8xf32> to vector<2x8xf32>
    %5 = arith.addf %2, %4 : vector<2x8xf32>
    %cst_5 = arith.constant 0.000000e+00 : f32
    %6 = vector.broadcast %cst_5 : f32 to vector<2x8xf32>
    %7 = arith.maximumf %5, %6 : vector<2x8xf32>
    %8 = arith.truncf %7 : vector<2x8xf32> to vector<2x8xbf16>
    %c0_6 = arith.constant 0 : index
    %c0_7 = arith.constant 0 : index
    %9 = vector.load %arg5[%c0_6, %c0_7] : memref<8x16xbf16, #tpu.memory_space<vmem>>, vector<8x16xbf16>
    %cst_8 = arith.constant dense<0.000000e+00> : vector<2x16xf32>
    %10 = tpu.matmul %8, %9, %cst_8 {dimension_numbers = #tpu.dot_dimension_numbers<[1], [0], [0], [1], [0, 0, 1, 1], [], []>} : vector<2x8xbf16>, vector<8x16xbf16>, vector<2x16xf32> -> vector<2x16xf32>
    %c0_9 = arith.constant 0 : index
    %c0_10 = arith.constant 0 : index
    %11 = vector.load %arg3[%c0_9, %c0_10] : memref<32x16xbf16, #tpu.memory_space<vmem>>, vector<32x16xbf16>
    %c0_11 = arith.constant 0 : index
    %c0_12 = arith.constant 0 : index
    %12 = vector.load %arg4[%c0_11, %c0_12] : memref<16x16xbf16, #tpu.memory_space<vmem>>, vector<16x16xbf16>
    %cst_13 = arith.constant dense<0.000000e+00> : vector<32x16xf32>
    %13 = tpu.matmul %11, %12, %cst_13 {dimension_numbers = #tpu.dot_dimension_numbers<[1], [0], [0], [1], [0, 0, 1, 1], [], []>} : vector<32x16xbf16>, vector<16x16xbf16>, vector<32x16xf32> -> vector<32x16xf32>
    %c0_14 = arith.constant 0 : index
    %c0_15 = arith.constant 0 : index
    %14 = vector.load %arg6[%c0_14, %c0_15] : memref<16x16xbf16, #tpu.memory_space<vmem>>, vector<16x16xbf16>
    %15 = arith.extf %14 : vector<16x16xbf16> to vector<16x16xf32>
    %16 = vector.extract_strided_slice %13 {offsets = [0, 0], sizes = [16, 16], strides = [1, 1]} : vector<32x16xf32> to vector<16x16xf32>
    %17 = vector.extract_strided_slice %10 {offsets = [0, 0], sizes = [1, 16], strides = [1, 1]} : vector<2x16xf32> to vector<1x16xf32>
    %18 = vector.broadcast %17 : vector<1x16xf32> to vector<16x16xf32>
    %19 = arith.addf %16, %18 : vector<16x16xf32>
    %cst_16 = arith.constant 0.000000e+00 : f32
    %20 = vector.broadcast %cst_16 : f32 to vector<16x16xf32>
    %21 = arith.maximumf %19, %20 : vector<16x16xf32>
    %22 = arith.mulf %21, %15 : vector<16x16xf32>
    %cst_17 = arith.constant dense<0.000000e+00> : vector<16xf32>
    %23 = vector.multi_reduction <add>, %22, %cst_17 [1] : vector<16x16xf32> to vector<16xf32>
    %24 = vector.shape_cast %23 : vector<16xf32> to vector<16x1xf32>
    %cst_18 = arith.constant dense<0.000000e+00> : vector<1xf32>
    %25 = vector.multi_reduction <add>, %24, %cst_18 [0] : vector<16x1xf32> to vector<1xf32>
    %26 = vector.shape_cast %25 : vector<1xf32> to vector<1x1xf32>
    %c0_19 = arith.constant 0 : index
    %c0_20 = arith.constant 0 : index
    %27 = vector.load %arg7[%c0_19, %c0_20] : memref<1x1xf32, #tpu.memory_space<vmem>>, vector<1x1xf32>
    %28 = arith.addf %26, %27 : vector<1x1xf32>
    %cst_21 = arith.constant 0.000000e+00 : f32
    %29 = vector.broadcast %cst_21 : f32 to vector<1x1xf32>
    %30 = arith.subf %29, %28 : vector<1x1xf32>
    %31 = math.exp %30 : vector<1x1xf32>
    %cst_22 = arith.constant 1.000000e+00 : f32
    %32 = vector.broadcast %cst_22 : f32 to vector<1x1xf32>
    %33 = arith.addf %32, %31 : vector<1x1xf32>
    %cst_23 = arith.constant 1.000000e+00 : f32
    %34 = vector.broadcast %cst_23 : f32 to vector<1x1xf32>
    %35 = arith.divf %34, %33 : vector<1x1xf32>
    %c0_24 = arith.constant 0 : index
    %c0_25 = arith.constant 0 : index
    %36 = vector.load %arg8[%c0_24, %c0_25] : memref<2x1xf32, #tpu.memory_space<vmem>>, vector<1x1xf32>
    tpu.vector_store %arg8[%c0_24, %c0_25], %35 {strides = array<i32>} : memref<2x1xf32, #tpu.memory_space<vmem>>, vector<1x1xf32>,
    %37 = vector.extract_strided_slice %13 {offsets = [16, 0], sizes = [16, 16], strides = [1, 1]} : vector<32x16xf32> to vector<16x16xf32>
    %38 = vector.extract_strided_slice %10 {offsets = [1, 0], sizes = [1, 16], strides = [1, 1]} : vector<2x16xf32> to vector<1x16xf32>
    %39 = vector.broadcast %38 : vector<1x16xf32> to vector<16x16xf32>
    %40 = arith.addf %37, %39 : vector<16x16xf32>
    %cst_26 = arith.constant 0.000000e+00 : f32
    %41 = vector.broadcast %cst_26 : f32 to vector<16x16xf32>
    %42 = arith.maximumf %40, %41 : vector<16x16xf32>
    %43 = arith.mulf %42, %15 : vector<16x16xf32>
    %cst_27 = arith.constant dense<0.000000e+00> : vector<16xf32>
    %44 = vector.multi_reduction <add>, %43, %cst_27 [1] : vector<16x16xf32> to vector<16xf32>
    %45 = vector.shape_cast %44 : vector<16xf32> to vector<16x1xf32>
    %cst_28 = arith.constant dense<0.000000e+00> : vector<1xf32>
    %46 = vector.multi_reduction <add>, %45, %cst_28 [0] : vector<16x1xf32> to vector<1xf32>
    %47 = vector.shape_cast %46 : vector<1xf32> to vector<1x1xf32>
    %c0_29 = arith.constant 0 : index
    %c0_30 = arith.constant 0 : index
    %48 = vector.load %arg7[%c0_29, %c0_30] : memref<1x1xf32, #tpu.memory_space<vmem>>, vector<1x1xf32>
    %49 = arith.addf %47, %48 : vector<1x1xf32>
    %cst_31 = arith.constant 0.000000e+00 : f32
    %50 = vector.broadcast %cst_31 : f32 to vector<1x1xf32>
    %51 = arith.subf %50, %49 : vector<1x1xf32>
    %52 = math.exp %51 : vector<1x1xf32>
    %cst_32 = arith.constant 1.000000e+00 : f32
    %53 = vector.broadcast %cst_32 : f32 to vector<1x1xf32>
    %54 = arith.addf %53, %52 : vector<1x1xf32>
    %cst_33 = arith.constant 1.000000e+00 : f32
    %55 = vector.broadcast %cst_33 : f32 to vector<1x1xf32>
    %56 = arith.divf %55, %54 : vector<1x1xf32>
    %c1 = arith.constant 1 : index
    %c0_34 = arith.constant 0 : index
    %57 = vector.load %arg8[%c1, %c0_34] : memref<2x1xf32, #tpu.memory_space<vmem>>, vector<1x1xf32>
    tpu.vector_store %arg8[%c1, %c0_34], %56 {strides = array<i32>} : memref<2x1xf32, #tpu.memory_space<vmem>>, vector<1x1xf32>,
    return
  }
}

</mosaic_0001>

<llo_original>
// kernel: discriminator_forward.4
$region0: #{discriminator_forward.4}
  #allocation0 [shape = 'u32[]', space=smem, size = 0x4, offset = 0x4, fixed_abs, tag = 'smem constant byte address 0x4 - core index']
  #allocation1 [shape = 'u32[144,128]{1,0:T(1,128)}', space=vmem, size = 0x12000, scoped, tag = 'internal scratch']
  #allocation2 [shape = 'f32[1,128]{1,0:T(1,128)}', space=vmem, size = 0x200, scoped, tag = 'scratch operand']
  #allocation3 [shape = 'f32[1,128]{1,0:T(1,128)}', space=vmem, size = 0x200, scoped, tag = 'scratch operand']
  %s0 = inlined_call_operand.vmem [shape: bf16[512,48], index: 0, kind: input, shape index: {}]
  %s1 = inlined_call_operand.vmem [shape: bf16[48,128], index: 1, kind: input, shape index: {}]
  %s2 = inlined_call_operand.vmem [shape: f32[1,128], index: 2, kind: input, shape index: {}]
  %s3 = inlined_call_operand.vmem [shape: f32[1,128], index: 3, kind: input, shape index: {}]
  %s4 = inlined_call_operand.vmem [shape: bf16[512,128], index: 4, kind: output, shape index: {}]
  %s5 = sld [smem:[#allocation0]]
  $region34: #{discriminator_forward.4} parent=0
    _
  %s7 = ssub.s32 1, %s5
  %s8 = scalar_select 0, %s7, %s5
  // Predicated region
  $region2: #{discriminator_forward.4} parent=0 // pred_check
    _
  $region3: #{discriminator_forward.4} parent=0 // pred_check_branch
    %10 = sbr.rel (0) target = $region5
  $region4: #{discriminator_forward.4} parent=0 // pred_region
    _
  $region5: #{discriminator_forward.4} parent=0 // pred_fallthru
    _
  // Predicated region
  $region6: #{discriminator_forward.4} parent=0 // pred_check
    _
  $region7: #{discriminator_forward.4} parent=0 // pred_check_branch
    %12 = sbr.rel (0) target = $region9
  $region8: #{discriminator_forward.4} parent=0 // pred_region
    _
  $region9: #{discriminator_forward.4} parent=0 // pred_fallthru
    _
  // Predicated region
  $region10: #{discriminator_forward.4} parent=0 // pred_check
    _
  $region11: #{discriminator_forward.4} parent=0 // pred_check_branch
    %14 = sbr.rel (0) target = $region13
  $region12: #{discriminator_forward.4} parent=0 // pred_region
    _
  $region13: #{discriminator_forward.4} parent=0 // pred_fallthru
    _
  // Predicated region
  $region14: #{discriminator_forward.4} parent=0 // pred_check
    _
  $region15: #{discriminator_forward.4} parent=0 // pred_check_branch
    %16 = sbr.rel (0) target = $region17
  $region16: #{discriminator_forward.4} parent=0 // pred_region
    _
  $region17: #{discriminator_forward.4} parent=0 // pred_fallthru
    _
  %p18 = scmp.eq.s32.totalorder 0, 0
  // Predicated region
  $region18: #{discriminator_forward.4} parent=0 // pred_check
    %p19 = pneg %p18
  $region19: #{discriminator_forward.4} parent=0 // pred_check_branch
    %21 = sbr.rel (%p19) target = $region21
  $region20: #{discriminator_forward.4} parent=0 // pred_region
    %22 = vst [vmem:[#allocation2] sm:$0x1] 0.0
    %23 = vst [vmem:[#allocation3] sm:$0x1] 0.0
  $region21: #{discriminator_forward.4} parent=0 // pred_fallthru
    _
  %v24 = vld [vmem:[%s0] sm:$0xf]
  %v25 = vld [vmem:[%s0 + $0x4] sm:$0xf]
  %v26 = vld [vmem:[%s0 + $0x8] sm:$0xf]
  %v27 = vld [vmem:[%s0 + $0xc] sm:$0xf]
  %v28 = vld [vmem:[%s0 + $0x10] sm:$0xf]
  %v29 = vld [vmem:[%s0 + $0x14] sm:$0xf]
  %v30 = vld [vmem:[%s0 + $0x18] sm:$0xf]
  %v31 = vld [vmem:[%s0 + $0x1c] sm:$0xf]
  %v32 = vld [vmem:[%s0 + $0x20] sm:$0xf]
  %v33 = vld [vmem:[%s0 + $0x24] sm:$0xf]
  %v34 = vld [vmem:[%s0 + $0x28] sm:$0xf]
  %v35 = vld [vmem:[%s0 + $0x2c] sm:$0xf]
  %v36 = vld [vmem:[%s0 + $0x30] sm:$0xf]
  %v37 = vld [vmem:[%s0 + $0x34] sm:$0xf]
  %v38 = vld [vmem:[%s0 + $0x38] sm:$0xf]
  %v39 = vld [vmem:[%s0 + $0x3c] sm:$0xf]
  %v40 = vld [vmem:[%s0 + $0x40] sm:$0xf]
  %v41 = vld [vmem:[%s0 + $0x44] sm:$0xf]
  %v42 = vld [vmem:[%s0 + $0x48] sm:$0xf]
  %v43 = vld [vmem:[%s0 + $0x4c] sm:$0xf]
  %v44 = vld [vmem:[%s0 + $0x50] sm:$0xf]
  %v45 = vld [vmem:[%s0 + $0x54] sm:$0xf]
  %v46 = vld [vmem:[%s0 + $0x58] sm:$0xf]
  %v47 = vld [vmem:[%s0 + $0x5c] sm:$0xf]
  %v48 = vld [vmem:[%s0 + $0x60] sm:$0xf]
  %v49 = vld [vmem:[%s0 + $0x64] sm:$0xf]
  %v50 = vld [vmem:[%s0 + $0x68] sm:$0xf]
  %v51 = vld [vmem:[%s0 + $0x6c] sm:$0xf]
  %v52 = vld [vmem:[%s0 + $0x70] sm:$0xf]
  %v53 = vld [vmem:[%s0 + $0x74] sm:$0xf]
  %v54 = vld [vmem:[%s0 + $0x78] sm:$0xf]
  %v55 = vld [vmem:[%s0 + $0x7c] sm:$0xf]
  %v56 = vld [vmem:[%s0 + $0x80] sm:$0xf]
  %v57 = vld [vmem:[%s0 + $0x84] sm:$0xf]
  %v58 = vld [vmem:[%s0 + $0x88] sm:$0xf]
  %v59 = vld [vmem:[%s0 + $0x8c] sm:$0xf]
  %v60 = vld [vmem:[%s0 + $0x90] sm:$0xf]
  %v61 = vld [vmem:[%s0 + $0x94] sm:$0xf]
  %v62 = vld [vmem:[%s0 + $0x98] sm:$0xf]
  %v63 = vld [vmem:[%s0 + $0x9c] sm:$0xf]
  %v64 = vld [vmem:[%s0 + $0xa0] sm:$0xf]
  %v65 = vld [vmem:[%s0 + $0xa4] sm:$0xf]
  %v66 = vld [vmem:[%s0 + $0xa8] sm:$0xf]
  %v67 = vld [vmem:[%s0 + $0xac] sm:$0xf]
  %v68 = vld [vmem:[%s0 + $0xb0] sm:$0xf]
  %v69 = vld [vmem:[%s0 + $0xb4] sm:$0xf]
  %v70 = vld [vmem:[%s0 + $0xb8] sm:$0xf]
  %v71 = vld [vmem:[%s0 + $0xbc] sm:$0xf]
  %v72 = vld [vmem:[%s0 + $0xc0] sm:$0xf]
  %v73 = vld [vmem:[%s0 + $0xc4] sm:$0xf]
  %v74 = vld [vmem:[%s0 + $0xc8] sm:$0xf]
  %v75 = vld [vmem:[%s0 + $0xcc] sm:$0xf]
  %v76 = vld [vmem:[%s0 + $0xd0] sm:$0xf]
  %v77 = vld [vmem:[%s0 + $0xd4] sm:$0xf]
  %v78 = vld [vmem:[%s0 + $0xd8] sm:$0xf]
  %v79 = vld [vmem:[%s0 + $0xdc] sm:$0xf]
  %v80 = vld [vmem:[%s0 + $0xe0] sm:$0xf]
  %v81 = vld [vmem:[%s0 + $0xe4] sm:$0xf]
  %v82 = vld [vmem:[%s0 + $0xe8] sm:$0xf]
  %v83 = vld [vmem:[%s0 + $0xec] sm:$0xf]
  %v84 = vld [vmem:[%s0 + $0xf0] sm:$0xf]
  %v85 = vld [vmem:[%s0 + $0xf4] sm:$0xf]
  %v86 = vld [vmem:[%s0 + $0xf8] sm:$0xf]
  %v87 = vld [vmem:[%s0 + $0xfc] sm:$0xf]
  %v88 = vld [vmem:[%s1] sm:$0xf]
  %v89 = vld [vmem:[%s1 + $0x4] sm:$0xf]
  %v90 = vld [vmem:[%s1 + $0x8] sm:$0xf]
  %v91 = vld [vmem:[%s1 + $0xc] sm:$0xf]
  %v92 = vld [vmem:[%s1 + $0x10] sm:$0xf]
  %v93 = vld [vmem:[%s1 + $0x14] sm:$0xf]
  %v158 = vunpack.c.l.b16 %v24
  %v159 = vunpack.c.l.b16 %v25
  %v160 = vunpack.c.l.b16 %v26
  %v161 = vunpack.c.l.b16 %v27
  %v162 = vunpack.c.l.b16 %v28
  %v163 = vunpack.c.l.b16 %v29
  %v164 = vunpack.c.l.b16 %v30
  %v165 = vunpack.c.l.b16 %v31
  %v166 = vunpack.c.l.b16 %v32
  %v167 = vunpack.c.l.b16 %v33
  %v168 = vunpack.c.l.b16 %v34
  %v169 = vunpack.c.l.b16 %v35
  %v170 = vunpack.c.l.b16 %v36
  %v171 = vunpack.c.l.b16 %v37
  %v172 = vunpack.c.l.b16 %v38
  %v173 = vunpack.c.l.b16 %v39
  %v174 = vunpack.c.l.b16 %v40
  %v175 = vunpack.c.l.b16 %v41
  %v176 = vunpack.c.l.b16 %v42
  %v177 = vunpack.c.l.b16 %v43
  %v178 = vunpack.c.l.b16 %v44
  %v179 = vunpack.c.l.b16 %v45
  %v180 = vunpack.c.l.b16 %v46
  %v181 = vunpack.c.l.b16 %v47
  %v182 = vunpack.c.l.b16 %v48
  %v183 = vunpack.c.l.b16 %v49
  %v184 = vunpack.c.l.b16 %v50
  %v185 = vunpack.c.l.b16 %v51
  %v186 = vunpack.c.l.b16 %v52
  %v187 = vunpack.c.l.b16 %v53
  %v188 = vunpack.c.l.b16 %v54
  %v189 = vunpack.c.l.b16 %v55
  %v190 = vunpack.c.l.b16 %v56
  %v191 = vunpack.c.l.b16 %v57
  %v192 = vunpack.c.l.b16 %v58
  %v193 = vunpack.c.l.b16 %v59
  %v194 = vunpack.c.l.b16 %v60
  %v195 = vunpack.c.l.b16 %v61
  %v196 = vunpack.c.l.b16 %v62
  %v197 = vunpack.c.l.b16 %v63
  %v198 = vunpack.c.l.b16 %v64
  %v199 = vunpack.c.l.b16 %v65
  %v200 = vunpack.c.l.b16 %v66
  %v201 = vunpack.c.l.b16 %v67
  %v202 = vunpack.c.l.b16 %v68
  %v203 = vunpack.c.l.b16 %v69
  %v204 = vunpack.c.l.b16 %v70
  %v205 = vunpack.c.l.b16 %v71
  %v206 = vunpack.c.l.b16 %v72
  %v207 = vunpack.c.l.b16 %v73
  %v208 = vunpack.c.l.b16 %v74
  %v209 = vunpack.c.l.b16 %v75
  %v210 = vunpack.c.l.b16 %v76
  %v211 = vunpack.c.l.b16 %v77
  %v212 = vunpack.c.l.b16 %v78
  %v213 = vunpack.c.l.b16 %v79
  %v214 = vunpack.c.l.b16 %v80
  %v215 = vunpack.c.l.b16 %v81
  %v216 = vunpack.c.l.b16 %v82
  %v217 = vunpack.c.l.b16 %v83
  %v218 = vunpack.c.l.b16 %v84
  %v219 = vunpack.c.l.b16 %v85
  %v220 = vunpack.c.l.b16 %v86
  %v221 = vunpack.c.l.b16 %v87
  %v222 = vpack.c.b16 %v159, %v158
  %v223 = vpack.c.b16 %v161, %v160
  %v224 = vpack.c.b16 %v163, %v162
  %v225 = vpack.c.b16 %v165, %v164
  %v226 = vpack.c.b16 %v167, %v166
  %v227 = vpack.c.b16 %v169, %v168
  %v228 = vpack.c.b16 %v171, %v170
  %v229 = vpack.c.b16 %v173, %v172
  %v230 = vpack.c.b16 %v175, %v174
  %v231 = vpack.c.b16 %v177, %v176
  %v232 = vpack.c.b16 %v179, %v178
  %v233 = vpack.c.b16 %v181, %v180
  %v234 = vpack.c.b16 %v183, %v182
  %v235 = vpack.c.b16 %v185, %v184
  %v236 = vpack.c.b16 %v187, %v186
  %v237 = vpack.c.b16 %v189, %v188
  %v238 = vpack.c.b16 %v191, %v190
  %v239 = vpack.c.b16 %v193, %v192
  %v240 = vpack.c.b16 %v195, %v194
  %v241 = vpack.c.b16 %v197, %v196
  %v242 = vpack.c.b16 %v199, %v198
  %v243 = vpack.c.b16 %v201, %v200
  %v244 = vpack.c.b16 %v203, %v202
  %v245 = vpack.c.b16 %v205, %v204
  %v246 = vpack.c.b16 %v207, %v206
  %v247 = vpack.c.b16 %v209, %v208
  %v248 = vpack.c.b16 %v211, %v210
  %v249 = vpack.c.b16 %v213, %v212
  %v250 = vpack.c.b16 %v215, %v214
  %v251 = vpack.c.b16 %v217, %v216
  %v252 = vpack.c.b16 %v219, %v218
  %v253 = vpack.c.b16 %v221, %v220
  %v260 = vunpack.c.l.b16 %v88
  %v261 = vunpack.c.l.b16 %v89
  %v262 = vunpack.c.l.b16 %v90
  %v263 = vunpack.c.l.b16 %v91
  %v264 = vunpack.c.l.b16 %v92
  %v265 = vunpack.c.l.b16 %v93
  %v266 = vpack.c.b16 %v261, %v260
  %v267 = vpack.c.b16 %v263, %v262
  %v268 = vpack.c.b16 %v265, %v264
  %vm272 = vcmask 392192
  %v274 = vsel %vm272, %v222, 0
  %v277 = vsel %vm272, %v223, 0
  %v280 = vsel %vm272, %v224, 0
  %v283 = vsel %vm272, %v225, 0
  %v286 = vsel %vm272, %v226, 0
  %v289 = vsel %vm272, %v227, 0
  %v292 = vsel %vm272, %v228, 0
  %v295 = vsel %vm272, %v229, 0
  %v298 = vsel %vm272, %v230, 0
  %v301 = vsel %vm272, %v231, 0
  %v304 = vsel %vm272, %v232, 0
  %v307 = vsel %vm272, %v233, 0
  %v310 = vsel %vm272, %v234, 0
  %v313 = vsel %vm272, %v235, 0
  %v316 = vsel %vm272, %v236, 0
  %v319 = vsel %vm272, %v237, 0
  %v322 = vsel %vm272, %v238, 0
  %v325 = vsel %vm272, %v239, 0
  %v328 = vsel %vm272, %v240, 0
  %v331 = vsel %vm272, %v241, 0
  %v334 = vsel %vm272, %v242, 0
  %v337 = vsel %vm272, %v243, 0
  %v340 = vsel %vm272, %v244, 0
  %v343 = vsel %vm272, %v245, 0
  %v346 = vsel %vm272, %v246, 0
  %v349 = vsel %vm272, %v247, 0
  %v352 = vsel %vm272, %v248, 0
  %v355 = vsel %vm272, %v249, 0
  %v358 = vsel %vm272, %v250, 0
  %v361 = vsel %vm272, %v251, 0
  %v364 = vsel %vm272, %v252, 0
  %v367 = vsel %vm272, %v253, 0
  %369 = vmatprep.subr.bf16.mxu0 0
  %370 = vmatpush1.bf16.msra.mxu0 %v266
  %371 = vmatprep.subr.bf16.mxu0 0
  %372 = vmatpush1.bf16.msra.mxu0 %v267
  %373 = vmatprep.subr.bf16.mxu0 0
  %374 = vmatpush1.bf16.msra.mxu0 %v268
  %375 = vmatprep.subr.bf16.mxu0 0
  %376 = vmatpush1.bf16.msra.mxu0 0
  %377 = vmatprep.subr.bf16.mxu0 0
  %378 = vmatpush1.bf16.msra.mxu0 0
  %379 = vmatprep.subr.bf16.mxu0 0
  %380 = vmatpush1.bf16.msra.mxu0 0
  %381 = vmatprep.subr.bf16.mxu0 0
  %382 = vmatpush1.bf16.msra.mxu0 0
  %383 = vmatprep.subr.bf16.mxu0 0
  %384 = vmatpush1.bf16.msra.mxu0 0
  %385 = vmatprep.subr.bf16.mxu0 0
  %386 = vmatpush1.bf16.msra.mxu0 0
  %387 = vmatprep.subr.bf16.mxu0 0
  %388 = vmatpush1.bf16.msra.mxu0 0
  %389 = vmatprep.subr.bf16.mxu0 0
  %390 = vmatpush1.bf16.msra.mxu0 0
  %391 = vmatprep.subr.bf16.mxu0 0
  %392 = vmatpush1.bf16.msra.mxu0 0
  %393 = vmatprep.subr.bf16.mxu0 0
  %394 = vmatpush1.bf16.msra.mxu0 0
  %395 = vmatprep.subr.bf16.mxu0 0
  %396 = vmatpush1.bf16.msra.mxu0 0
  %397 = vmatprep.subr.bf16.mxu0 0
  %398 = vmatpush1.bf16.msra.mxu0 0
  %399 = vmatprep.subr.bf16.mxu0 0
  %400 = vmatpush1.bf16.msra.mxu0 0
  %401 = vmatprep.mubr.bf16.mxu0 0
  %402 = vmatmul.mubr.bf16.gmra.mrb[0].mxu0 %v274
  %v403 = vpop.f32.mrb[0].mxu0
  %v404 = vadd.f32 0.0, %v403
  %v405 = vpop.f32.mrb[0].mxu0
  %v406 = vpop.f32.mrb[0].mxu0
  %v407 = vadd.f32 0.0, %v406
  %v408 = vpop.f32.mrb[0].mxu0
  %409 = vmatprep.mubr.bf16.mxu0 0
  %410 = vmatmul.mubr.bf16.gmra.mrb[0].mxu0 %v277
  %v411 = vpop.f32.mrb[0].mxu0
  %v412 = vadd.f32 0.0, %v411
  %v413 = vpop.f32.mrb[0].mxu0
  %v414 = vpop.f32.mrb[0].mxu0
  %v415 = vadd.f32 0.0, %v414
  %v416 = vpop.f32.mrb[0].mxu0
  %417 = vmatprep.mubr.bf16.mxu0 0
  %418 = vmatmul.mubr.bf16.gmra.mrb[0].mxu0 %v280
  %v419 = vpop.f32.mrb[0].mxu0
  %v420 = vadd.f32 0.0, %v419
  %v421 = vpop.f32.mrb[0].mxu0
  %v422 = vpop.f32.mrb[0].mxu0
  %v423 = vadd.f32 0.0, %v422
  %v424 = vpop.f32.mrb[0].mxu0
  %425 = vmatprep.mubr.bf16.mxu0 0
  %426 = vmatmul.mubr.bf16.gmra.mrb[0].mxu0 %v283
  %v427 = vpop.f32.mrb[0].mxu0
  %v428 = vadd.f32 0.0, %v427
  %v429 = vpop.f32.mrb[0].mxu0
  %v430 = vpop.f32.mrb[0].mxu0
  %v431 = vadd.f32 0.0, %v430
  %v432 = vpop.f32.mrb[0].mxu0
  %433 = vmatprep.mubr.bf16.mxu0 0
  %434 = vmatmul.mubr.bf16.gmra.mrb[0].mxu0 %v286
  %v435 = vpop.f32.mrb[0].mxu0
  %v436 = vadd.f32 0.0, %v435
  %v437 = vpop.f32.mrb[0].mxu0
  %v438 = vpop.f32.mrb[0].mxu0
  %v439 = vadd.f32 0.0, %v438
  %v440 = vpop.f32.mrb[0].mxu0
  %441 = vmatprep.mubr.bf16.mxu0 0
  %442 = vmatmul.mubr.bf16.gmra.mrb[0].mxu0 %v289
  %v443 = vpop.f32.mrb[0].mxu0
  %v444 = vadd.f32 0.0, %v443
  %v445 = vpop.f32.mrb[0].mxu0
  %v446 = vpop.f32.mrb[0].mxu0
  %v447 = vadd.f32 0.0, %v446
  %v448 = vpop.f32.mrb[0].mxu0
  %449 = vmatprep.mubr.bf16.mxu0 0
  %450 = vmatmul.mubr.bf16.gmra.mrb[0].mxu0 %v292
  %v451 = vpop.f32.mrb[0].mxu0
  %v452 = vadd.f32 0.0, %v451
  %v453 = vpop.f32.mrb[0].mxu0
  %v454 = vpop.f32.mrb[0].mxu0
  %v455 = vadd.f32 0.0, %v454
  %v456 = vpop.f32.mrb[0].mxu0
  %457 = vmatprep.mubr.bf16.mxu0 0
  %458 = vmatmul.mubr.bf16.gmra.mrb[0].mxu0 %v295
  %v459 = vpop.f32.mrb[0].mxu0
  %v460 = vadd.f32 0.0, %v459
  %v461 = vpop.f32.mrb[0].mxu0
  %v462 = vpop.f32.mrb[0].mxu0
  %v463 = vadd.f32 0.0, %v462
  %v464 = vpop.f32.mrb[0].mxu0
  %465 = vmatprep.mubr.bf16.mxu0 0
  %466 = vmatmul.mubr.bf16.gmra.mrb[0].mxu0 %v298
  %v467 = vpop.f32.mrb[0].mxu0
  %v468 = vadd.f32 0.0, %v467
  %v469 = vpop.f32.mrb[0].mxu0
  %v470 = vpop.f32.mrb[0].mxu0
  %v471 = vadd.f32 0.0, %v470
  %v472 = vpop.f32.mrb[0].mxu0
  %473 = vmatprep.mubr.bf16.mxu0 0
  %474 = vmatmul.mubr.bf16.gmra.mrb[0].mxu0 %v301
  %v475 = vpop.f32.mrb[0].mxu0
  %v476 = vadd.f32 0.0, %v475
  %v477 = vpop.f32.mrb[0].mxu0
  %v478 = vpop.f32.mrb[0].mxu0
  %v479 = vadd.f32 0.0, %v478
  %v480 = vpop.f32.mrb[0].mxu0
  %481 = vmatprep.mubr.bf16.mxu0 0
  %482 = vmatmul.mubr.bf16.gmra.mrb[0].mxu0 %v304
  %v483 = vpop.f32.mrb[0].mxu0
  %v484 = vadd.f32 0.0, %v483
  %v485 = vpop.f32.mrb[0].mxu0
  %v486 = vpop.f32.mrb[0].mxu0
  %v487 = vadd.f32 0.0, %v486
  %v488 = vpop.f32.mrb[0].mxu0
  %489 = vmatprep.mubr.bf16.mxu0 0
  %490 = vmatmul.mubr.bf16.gmra.mrb[0].mxu0 %v307
  %v491 = vpop.f32.mrb[0].mxu0
  %v492 = vadd.f32 0.0, %v491
  %v493 = vpop.f32.mrb[0].mxu0
  %v494 = vpop.f32.mrb[0].mxu0
  %v495 = vadd.f32 0.0, %v494
  %v496 = vpop.f32.mrb[0].mxu0
  %497 = vmatprep.mubr.bf16.mxu0 0
  %498 = vmatmul.mubr.bf16.gmra.mrb[0].mxu0 %v310
  %v499 = vpop.f32.mrb[0].mxu0
  %v500 = vadd.f32 0.0, %v499
  %v501 = vpop.f32.mrb[0].mxu0
  %v502 = vpop.f32.mrb[0].mxu0
  %v503 = vadd.f32 0.0, %v502
  %v504 = vpop.f32.mrb[0].mxu0
  %505 = vmatprep.mubr.bf16.mxu0 0
  %506 = vmatmul.mubr.bf16.gmra.mrb[0].mxu0 %v313
  %v507 = vpop.f32.mrb[0].mxu0
  %v508 = vadd.f32 0.0, %v507
  %v509 = vpop.f32.mrb[0].mxu0
  %v510 = vpop.f32.mrb[0].mxu0
  %v511 = vadd.f32 0.0, %v510
  %v512 = vpop.f32.mrb[0].mxu0
  %513 = vmatprep.mubr.bf16.mxu0 0
  %514 = vmatmul.mubr.bf16.gmra.mrb[0].mxu0 %v316
  %v515 = vpop.f32.mrb[0].mxu0
  %v516 = vadd.f32 0.0, %v515
  %v517 = vpop.f32.mrb[0].mxu0
  %v518 = vpop.f32.mrb[0].mxu0
  %v519 = vadd.f32 0.0, %v518
  %v520 = vpop.f32.mrb[0].mxu0
  %521 = vmatprep.mubr.bf16.mxu0 0
  %522 = vmatmul.mubr.bf16.gmra.mrb[0].mxu0 %v319
  %v523 = vpop.f32.mrb[0].mxu0
  %v524 = vadd.f32 0.0, %v523
  %v525 = vpop.f32.mrb[0].mxu0
  %v526 = vpop.f32.mrb[0].mxu0
  %v527 = vadd.f32 0.0, %v526
  %v528 = vpop.f32.mrb[0].mxu0
  %529 = vmatprep.mubr.bf16.mxu0 0
  %530 = vmatmul.mubr.bf16.gmra.mrb[0].mxu0 %v322
  %v531 = vpop.f32.mrb[0].mxu0
  %v532 = vadd.f32 0.0, %v531
  %v533 = vpop.f32.mrb[0].mxu0
  %v534 = vpop.f32.mrb[0].mxu0
  %v535 = vadd.f32 0.0, %v534
  %v536 = vpop.f32.mrb[0].mxu0
  %537 = vmatprep.mubr.bf16.mxu0 0
  %538 = vmatmul.mubr.bf16.gmra.mrb[0].mxu0 %v325
  %v539 = vpop.f32.mrb[0].mxu0
  %v540 = vadd.f32 0.0, %v539
  %v541 = vpop.f32.mrb[0].mxu0
  %v542 = vpop.f32.mrb[0].mxu0
  %v543 = vadd.f32 0.0, %v542
  %v544 = vpop.f32.mrb[0].mxu0
  %545 = vmatprep.mubr.bf16.mxu0 0
  %546 = vmatmul.mubr.bf16.gmra.mrb[0].mxu0 %v328
  %v547 = vpop.f32.mrb[0].mxu0
  %v548 = vadd.f32 0.0, %v547
  %v549 = vpop.f32.mrb[0].mxu0
  %v550 = vpop.f32.mrb[0].mxu0
  %v551 = vadd.f32 0.0, %v550
  %v552 = vpop.f32.mrb[0].mxu0
  %553 = vmatprep.mubr.bf16.mxu0 0
  %554 = vmatmul.mubr.bf16.gmra.mrb[0].mxu0 %v331
  %v555 = vpop.f32.mrb[0].mxu0
  %v556 = vadd.f32 0.0, %v555
  %v557 = vpop.f32.mrb[0].mxu0
  %v558 = vpop.f32.mrb[0].mxu0
  %v559 = vadd.f32 0.0, %v558
  %v560 = vpop.f32.mrb[0].mxu0
  %561 = vmatprep.mubr.bf16.mxu0 0
  %562 = vmatmul.mubr.bf16.gmra.mrb[0].mxu0 %v334
  %v563 = vpop.f32.mrb[0].mxu0
  %v564 = vadd.f32 0.0, %v563
  %v565 = vpop.f32.mrb[0].mxu0
  %v566 = vpop.f32.mrb[0].mxu0
  %v567 = vadd.f32 0.0, %v566
  %v568 = vpop.f32.mrb[0].mxu0
  %569 = vmatprep.mubr.bf16.mxu0 0
  %570 = vmatmul.mubr.bf16.gmra.mrb[0].mxu0 %v337
  %v571 = vpop.f32.mrb[0].mxu0
  %v572 = vadd.f32 0.0, %v571
  %v573 = vpop.f32.mrb[0].mxu0
  %v574 = vpop.f32.mrb[0].mxu0
  %v575 = vadd.f32 0.0, %v574
  %v576 = vpop.f32.mrb[0].mxu0
  %577 = vmatprep.mubr.bf16.mxu0 0
  %578 = vmatmul.mubr.bf16.gmra.mrb[0].mxu0 %v340
  %v579 = vpop.f32.mrb[0].mxu0
  %v580 = vadd.f32 0.0, %v579
  %v581 = vpop.f32.mrb[0].mxu0
  %v582 = vpop.f32.mrb[0].mxu0
  %v583 = vadd.f32 0.0, %v582
  %v584 = vpop.f32.mrb[0].mxu0
  %585 = vmatprep.mubr.bf16.mxu0 0
  %586 = vmatmul.mubr.bf16.gmra.mrb[0].mxu0 %v343
  %v587 = vpop.f32.mrb[0].mxu0
  %v588 = vadd.f32 0.0, %v587
  %v589 = vpop.f32.mrb[0].mxu0
  %v590 = vpop.f32.mrb[0].mxu0
  %v591 = vadd.f32 0.0, %v590
  %v592 = vpop.f32.mrb[0].mxu0
  %593 = vmatprep.mubr.bf16.mxu0 0
  %594 = vmatmul.mubr.bf16.gmra.mrb[0].mxu0 %v346
  %v595 = vpop.f32.mrb[0].mxu0
  %v596 = vadd.f32 0.0, %v595
  %v597 = vpop.f32.mrb[0].mxu0
  %v598 = vpop.f32.mrb[0].mxu0
  %v599 = vadd.f32 0.0, %v598
  %v600 = vpop.f32.mrb[0].mxu0
  %601 = vmatprep.mubr.bf16.mxu0 0
  %602 = vmatmul.mubr.bf16.gmra.mrb[0].mxu0 %v349
  %v603 = vpop.f32.mrb[0].mxu0
  %v604 = vadd.f32 0.0, %v603
  %v605 = vpop.f32.mrb[0].mxu0
  %v606 = vpop.f32.mrb[0].mxu0
  %v607 = vadd.f32 0.0, %v606
  %v608 = vpop.f32.mrb[0].mxu0
  %609 = vmatprep.mubr.bf16.mxu0 0
  %610 = vmatmul.mubr.bf16.gmra.mrb[0].mxu0 %v352
  %v611 = vpop.f32.mrb[0].mxu0
  %v612 = vadd.f32 0.0, %v611
  %v613 = vpop.f32.mrb[0].mxu0
  %v614 = vpop.f32.mrb[0].mxu0
  %v615 = vadd.f32 0.0, %v614
  %v616 = vpop.f32.mrb[0].mxu0
  %617 = vmatprep.mubr.bf16.mxu0 0
  %618 = vmatmul.mubr.bf16.gmra.mrb[0].mxu0 %v355
  %v619 = vpop.f32.mrb[0].mxu0
  %v620 = vadd.f32 0.0, %v619
  %v621 = vpop.f32.mrb[0].mxu0
  %v622 = vpop.f32.mrb[0].mxu0
  %v623 = vadd.f32 0.0, %v622
  %v624 = vpop.f32.mrb[0].mxu0
  %625 = vmatprep.mubr.bf16.mxu0 0
  %626 = vmatmul.mubr.bf16.gmra.mrb[0].mxu0 %v358
  %v627 = vpop.f32.mrb[0].mxu0
  %v628 = vadd.f32 0.0, %v627
  %v629 = vpop.f32.mrb[0].mxu0
  %v630 = vpop.f32.mrb[0].mxu0
  %v631 = vadd.f32 0.0, %v630
  %v632 = vpop.f32.mrb[0].mxu0
  %633 = vmatprep.mubr.bf16.mxu0 0
  %634 = vmatmul.mubr.bf16.gmra.mrb[0].mxu0 %v361
  %v635 = vpop.f32.mrb[0].mxu0
  %v636 = vadd.f32 0.0, %v635
  %v637 = vpop.f32.mrb[0].mxu0
  %v638 = vpop.f32.mrb[0].mxu0
  %v639 = vadd.f32 0.0, %v638
  %v640 = vpop.f32.mrb[0].mxu0
  %641 = vmatprep.mubr.bf16.mxu0 0
  %642 = vmatmul.mubr.bf16.gmra.mrb[0].mxu0 %v364
  %v643 = vpop.f32.mrb[0].mxu0
  %v644 = vadd.f32 0.0, %v643
  %v645 = vpop.f32.mrb[0].mxu0
  %v646 = vpop.f32.mrb[0].mxu0
  %v647 = vadd.f32 0.0, %v646
  %v648 = vpop.f32.mrb[0].mxu0
  %649 = vmatprep.mubr.bf16.mxu0 0
  %650 = vmatmul.mubr.bf16.gmra.mrb[0].mxu0 %v367
  %v651 = vpop.f32.mrb[0].mxu0
  %v652 = vadd.f32 0.0, %v651
  %v653 = vpop.f32.mrb[0].mxu0
  %v654 = vpop.f32.mrb[0].mxu0
  %v655 = vadd.f32 0.0, %v654
  %v656 = vpop.f32.mrb[0].mxu0
  %657 = vdwg.mxu0
  %v658 = vld [vmem:[#allocation2] sm:$0x1]
  %v659 = vadd.f32 %v404, %v407
  %v660 = vadd.f32 %v659, %v412
  %v661 = vadd.f32 %v660, %v415
  %v662 = vadd.f32 %v661, %v420
  %v663 = vadd.f32 %v662, %v423
  %v664 = vadd.f32 %v663, %v428
  %v665 = vadd.f32 %v664, %v431
  %v666 = vadd.f32 %v665, %v436
  %v667 = vadd.f32 %v666, %v439
  %v668 = vadd.f32 %v667, %v444
  %v669 = vadd.f32 %v668, %v447
  %v670 = vadd.f32 %v669, %v452
  %v671 = vadd.f32 %v670, %v455
  %v672 = vadd.f32 %v671, %v460
  %v673 = vadd.f32 %v672, %v463
  %v674 = vadd.f32 %v673, %v468
  %v675 = vadd.f32 %v674, %v471
  %v676 = vadd.f32 %v675, %v476
  %v677 = vadd.f32 %v676, %v479
  %v678 = vadd.f32 %v677, %v484
  %v679 = vadd.f32 %v678, %v487
  %v680 = vadd.f32 %v679, %v492
  %v681 = vadd.f32 %v680, %v495
  %v682 = vadd.f32 %v681, %v500
  %v683 = vadd.f32 %v682, %v503
  %v684 = vadd.f32 %v683, %v508
  %v685 = vadd.f32 %v684, %v511
  %v686 = vadd.f32 %v685, %v516
  %v687 = vadd.f32 %v686, %v519
  %v688 = vadd.f32 %v687, %v524
  %v689 = vadd.f32 %v688, %v527
  %v690 = vadd.f32 %v689, %v532
  %v691 = vadd.f32 %v690, %v535
  %v692 = vadd.f32 %v691, %v540
  %v693 = vadd.f32 %v692, %v543
  %v694 = vadd.f32 %v693, %v548
  %v695 = vadd.f32 %v694, %v551
  %v696 = vadd.f32 %v695, %v556
  %v697 = vadd.f32 %v696, %v559
  %v698 = vadd.f32 %v697, %v564
  %v699 = vadd.f32 %v698, %v567
  %v700 = vadd.f32 %v699, %v572
  %v701 = vadd.f32 %v700, %v575
  %v702 = vadd.f32 %v701, %v580
  %v703 = vadd.f32 %v702, %v583
  %v704 = vadd.f32 %v703, %v588
  %v705 = vadd.f32 %v704, %v591
  %v706 = vadd.f32 %v705, %v596
  %v707 = vadd.f32 %v706, %v599
  %v708 = vadd.f32 %v707, %v604
  %v709 = vadd.f32 %v708, %v607
  %v710 = vadd.f32 %v709, %v612
  %v711 = vadd.f32 %v710, %v615
  %v712 = vadd.f32 %v711, %v620
  %v713 = vadd.f32 %v712, %v623
  %v714 = vadd.f32 %v713, %v628
  %v715 = vadd.f32 %v714, %v631
  %v716 = vadd.f32 %v715, %v636
  %v717 = vadd.f32 %v716, %v639
  %v718 = vadd.f32 %v717, %v644
  %v719 = vadd.f32 %v718, %v647
  %v720 = vadd.f32 %v719, %v652
  %v721 = vadd.f32 %v720, %v655
  %v722 = vrot.slane %v721, 4
  %v723 = vadd.f32 %v721, %v722
  %v724 = vrot.slane %v723, 2
  %v725 = vadd.f32 %v723, %v724
  %v726 = vrot.slane %v725, 1
  %v727 = vadd.f32 %v725, %v726
  %v728 = vadd.f32 %v658, %v727
  %729 = vst [vmem:[#allocation2] sm:$0x1] %v728
  %v730 = vld [vmem:[#allocation3] sm:$0x1]
  %v731 = vmul.f32 %v404, %v404
  %v732 = vmul.f32 %v407, %v407
  %v733 = vmul.f32 %v412, %v412
  %v734 = vmul.f32 %v415, %v415
  %v735 = vmul.f32 %v420, %v420
  %v736 = vmul.f32 %v423, %v423
  %v737 = vmul.f32 %v428, %v428
  %v738 = vmul.f32 %v431, %v431
  %v739 = vmul.f32 %v436, %v436
  %v740 = vmul.f32 %v439, %v439
  %v741 = vmul.f32 %v444, %v444
  %v742 = vmul.f32 %v447, %v447
  %v743 = vmul.f32 %v452, %v452
  %v744 = vmul.f32 %v455, %v455
  %v745 = vmul.f32 %v460, %v460
  %v746 = vmul.f32 %v463, %v463
  %v747 = vmul.f32 %v468, %v468
  %v748 = vmul.f32 %v471, %v471
  %v749 = vmul.f32 %v476, %v476
  %v750 = vmul.f32 %v479, %v479
  %v751 = vmul.f32 %v484, %v484
  %v752 = vmul.f32 %v487, %v487
  %v753 = vmul.f32 %v492, %v492
  %v754 = vmul.f32 %v495, %v495
  %v755 = vmul.f32 %v500, %v500
  %v756 = vmul.f32 %v503, %v503
  %v757 = vmul.f32 %v508, %v508
  %v758 = vmul.f32 %v511, %v511
  %v759 = vmul.f32 %v516, %v516
  %v760 = vmul.f32 %v519, %v519
  %v761 = vmul.f32 %v524, %v524
  %v762 = vmul.f32 %v527, %v527
  %v763 = vmul.f32 %v532, %v532
  %v764 = vmul.f32 %v535, %v535
  %v765 = vmul.f32 %v540, %v540
  %v766 = vmul.f32 %v543, %v543
  %v767 = vmul.f32 %v548, %v548
  %v768 = vmul.f32 %v551, %v551
  %v769 = vmul.f32 %v556, %v556
  %v770 = vmul.f32 %v559, %v559
  %v771 = vmul.f32 %v564, %v564
  %v772 = vmul.f32 %v567, %v567
  %v773 = vmul.f32 %v572, %v572
  %v774 = vmul.f32 %v575, %v575
  %v775 = vmul.f32 %v580, %v580
  %v776 = vmul.f32 %v583, %v583
  %v777 = vmul.f32 %v588, %v588
  %v778 = vmul.f32 %v591, %v591
  %v779 = vmul.f32 %v596, %v596
  %v780 = vmul.f32 %v599, %v599
  %v781 = vmul.f32 %v604, %v604
  %v782 = vmul.f32 %v607, %v607
  %v783 = vmul.f32 %v612, %v612
  %v784 = vmul.f32 %v615, %v615
  %v785 = vmul.f32 %v620, %v620
  %v786 = vmul.f32 %v623, %v623
  %v787 = vmul.f32 %v628, %v628
  %v788 = vmul.f32 %v631, %v631
  %v789 = vmul.f32 %v636, %v636
  %v790 = vmul.f32 %v639, %v639
  %v791 = vmul.f32 %v644, %v644
  %v792 = vmul.f32 %v647, %v647
  %v793 = vmul.f32 %v652, %v652
  %v794 = vmul.f32 %v655, %v655
  %v795 = vadd.f32 %v731, %v732
  %v796 = vadd.f32 %v795, %v733
  %v797 = vadd.f32 %v796, %v734
  %v798 = vadd.f32 %v797, %v735
  %v799 = vadd.f32 %v798, %v736
  %v800 = vadd.f32 %v799, %v737
  %v801 = vadd.f32 %v800, %v738
  %v802 = vadd.f32 %v801, %v739
  %v803 = vadd.f32 %v802, %v740
  %v804 = vadd.f32 %v803, %v741
  %v805 = vadd.f32 %v804, %v742
  %v806 = vadd.f32 %v805, %v743
  %v807 = vadd.f32 %v806, %v744
  %v808 = vadd.f32 %v807, %v745
  %v809 = vadd.f32 %v808, %v746
  %v810 = vadd.f32 %v809, %v747
  %v811 = vadd.f32 %v810, %v748
  %v812 = vadd.f32 %v811, %v749
  %v813 = vadd.f32 %v812, %v750
  %v814 = vadd.f32 %v813, %v751
  %v815 = vadd.f32 %v814, %v752
  %v816 = vadd.f32 %v815, %v753
  %v817 = vadd.f32 %v816, %v754
  %v818 = vadd.f32 %v817, %v755
  %v819 = vadd.f32 %v818, %v756
  %v820 = vadd.f32 %v819, %v757
  %v821 = vadd.f32 %v820, %v758
  %v822 = vadd.f32 %v821, %v759
  %v823 = vadd.f32 %v822, %v760
  %v824 = vadd.f32 %v823, %v761
  %v825 = vadd.f32 %v824, %v762
  %v826 = vadd.f32 %v825, %v763
  %v827 = vadd.f32 %v826, %v764
  %v828 = vadd.f32 %v827, %v765
  %v829 = vadd.f32 %v828, %v766
  %v830 = vadd.f32 %v829, %v767
  %v831 = vadd.f32 %v830, %v768
  %v832 = vadd.f32 %v831, %v769
  %v833 = vadd.f32 %v832, %v770
  %v834 = vadd.f32 %v833, %v771
  %v835 = vadd.f32 %v834, %v772
  %v836 = vadd.f32 %v835, %v773
  %v837 = vadd.f32 %v836, %v774
  %v838 = vadd.f32 %v837, %v775
  %v839 = vadd.f32 %v838, %v776
  %v840 = vadd.f32 %v839, %v777
  %v841 = vadd.f32 %v840, %v778
  %v842 = vadd.f32 %v841, %v779
  %v843 = vadd.f32 %v842, %v780
  %v844 = vadd.f32 %v843, %v781
  %v845 = vadd.f32 %v844, %v782
  %v846 = vadd.f32 %v845, %v783
  %v847 = vadd.f32 %v846, %v784
  %v848 = vadd.f32 %v847, %v785
  %v849 = vadd.f32 %v848, %v786
  %v850 = vadd.f32 %v849, %v787
  %v851 = vadd.f32 %v850, %v788
  %v852 = vadd.f32 %v851, %v789
  %v853 = vadd.f32 %v852, %v790
  %v854 = vadd.f32 %v853, %v791
  %v855 = vadd.f32 %v854, %v792
  %v856 = vadd.f32 %v855, %v793
  %v857 = vadd.f32 %v856, %v794
  %v858 = vrot.slane %v857, 4
  %v859 = vadd.f32 %v857, %v858
  %v860 = vrot.slane %v859, 2
  %v861 = vadd.f32 %v859, %v860
  %v862 = vrot.slane %v861, 1
  %v863 = vadd.f32 %v861, %v862
  %v864 = vadd.f32 %v730, %v863
  %865 = vst [vmem:[#allocation3] sm:$0x1] %v864
  %s866 = smul.u32 0, 512
  %v867 = vpack.c.bf16 %v407, %v404
  %v868 = vpack.c.bf16 %v415, %v412
  %v869 = vpack.c.bf16 %v423, %v420
  %v870 = vpack.c.bf16 %v431, %v428
  %v871 = vpack.c.bf16 %v439, %v436
  %v872 = vpack.c.bf16 %v447, %v444
  %v873 = vpack.c.bf16 %v455, %v452
  %v874 = vpack.c.bf16 %v463, %v460
  %v875 = vpack.c.bf16 %v471, %v468
  %v876 = vpack.c.bf16 %v479, %v476
  %v877 = vpack.c.bf16 %v487, %v484
  %v878 = vpack.c.bf16 %v495, %v492
  %v879 = vpack.c.bf16 %v503, %v500
  %v880 = vpack.c.bf16 %v511, %v508
  %v881 = vpack.c.bf16 %v519, %v516
  %v882 = vpack.c.bf16 %v527, %v524
  %v883 = vpack.c.bf16 %v535, %v532
  %v884 = vpack.c.bf16 %v543, %v540
  %v885 = vpack.c.bf16 %v551, %v548
  %v886 = vpack.c.bf16 %v559, %v556
  %v887 = vpack.c.bf16 %v567, %v564
  %v888 = vpack.c.bf16 %v575, %v572
  %v889 = vpack.c.bf16 %v583, %v580
  %v890 = vpack.c.bf16 %v591, %v588
  %v891 = vpack.c.bf16 %v599, %v596
  %v892 = vpack.c.bf16 %v607, %v604
  %v893 = vpack.c.bf16 %v615, %v612
  %v894 = vpack.c.bf16 %v623, %v620
  %v895 = vpack.c.bf16 %v631, %v628
  %v896 = vpack.c.bf16 %v639, %v636
  %v897 = vpack.c.bf16 %v647, %v644
  %v898 = vpack.c.bf16 %v655, %v652
  %v931 = vunpack.c.l.b16 %v867
  %v932 = vunpack.c.h.b16 %v867
  %v933 = vunpack.c.l.b16 %v868
  %v934 = vunpack.c.h.b16 %v868
  %v935 = vunpack.c.l.b16 %v869
  %v936 = vunpack.c.h.b16 %v869
  %v937 = vunpack.c.l.b16 %v870
  %v938 = vunpack.c.h.b16 %v870
  %v939 = vunpack.c.l.b16 %v871
  %v940 = vunpack.c.h.b16 %v871
  %v941 = vunpack.c.l.b16 %v872
  %v942 = vunpack.c.h.b16 %v872
  %v943 = vunpack.c.l.b16 %v873
  %v944 = vunpack.c.h.b16 %v873
  %v945 = vunpack.c.l.b16 %v874
  %v946 = vunpack.c.h.b16 %v874
  %v947 = vunpack.c.l.b16 %v875
  %v948 = vunpack.c.h.b16 %v875
  %v949 = vunpack.c.l.b16 %v876
  %v950 = vunpack.c.h.b16 %v876
  %v951 = vunpack.c.l.b16 %v877
  %v952 = vunpack.c.h.b16 %v877
  %v953 = vunpack.c.l.b16 %v878
  %v954 = vunpack.c.h.b16 %v878
  %v955 = vunpack.c.l.b16 %v879
  %v956 = vunpack.c.h.b16 %v879
  %v957 = vunpack.c.l.b16 %v880
  %v958 = vunpack.c.h.b16 %v880
  %v959 = vunpack.c.l.b16 %v881
  %v960 = vunpack.c.h.b16 %v881
  %v961 = vunpack.c.l.b16 %v882
  %v962 = vunpack.c.h.b16 %v882
  %v963 = vunpack.c.l.b16 %v883
  %v964 = vunpack.c.h.b16 %v883
  %v965 = vunpack.c.l.b16 %v884
  %v966 = vunpack.c.h.b16 %v884
  %v967 = vunpack.c.l.b16 %v885
  %v968 = vunpack.c.h.b16 %v885
  %v969 = vunpack.c.l.b16 %v886
  %v970 = vunpack.c.h.b16 %v886
  %v971 = vunpack.c.l.b16 %v887
  %v972 = vunpack.c.h.b16 %v887
  %v973 = vunpack.c.l.b16 %v888
  %v974 = vunpack.c.h.b16 %v888
  %v975 = vunpack.c.l.b16 %v889
  %v976 = vunpack.c.h.b16 %v889
  %v977 = vunpack.c.l.b16 %v890
  %v978 = vunpack.c.h.b16 %v890
  %v979 = vunpack.c.l.b16 %v891
  %v980 = vunpack.c.h.b16 %v891
  %v981 = vunpack.c.l.b16 %v892
  %v982 = vunpack.c.h.b16 %v892
  %v983 = vunpack.c.l.b16 %v893
  %v984 = vunpack.c.h.b16 %v893
  %v985 = vunpack.c.l.b16 %v894
  %v986 = vunpack.c.h.b16 %v894
  %v987 = vunpack.c.l.b16 %v895
  %v988 = vunpack.c.h.b16 %v895
  %v989 = vunpack.c.l.b16 %v896
  %v990 = vunpack.c.h.b16 %v896
  %v991 = vunpack.c.l.b16 %v897
  %v992 = vunpack.c.h.b16 %v897
  %v993 = vunpack.c.l.b16 %v898
  %v994 = vunpack.c.h.b16 %v898
  %v995 = vpack.c.b16 %v931, %v931
  %v996 = vpack.c.b16 %v932, %v932
  %v997 = vpack.c.b16 %v933, %v933
  %v998 = vpack.c.b16 %v934, %v934
  %v999 = vpack.c.b16 %v935, %v935
  %v1000 = vpack.c.b16 %v936, %v936
  %v1001 = vpack.c.b16 %v937, %v937
  %v1002 = vpack.c.b16 %v938, %v938
  %v1003 = vpack.c.b16 %v939, %v939
  %v1004 = vpack.c.b16 %v940, %v940
  %v1005 = vpack.c.b16 %v941, %v941
  %v1006 = vpack.c.b16 %v942, %v942
  %v1007 = vpack.c.b16 %v943, %v943
  %v1008 = vpack.c.b16 %v944, %v944
  %v1009 = vpack.c.b16 %v945, %v945
  %v1010 = vpack.c.b16 %v946, %v946
  %v1011 = vpack.c.b16 %v947, %v947
  %v1012 = vpack.c.b16 %v948, %v948
  %v1013 = vpack.c.b16 %v949, %v949
  %v1014 = vpack.c.b16 %v950, %v950
  %v1015 = vpack.c.b16 %v951, %v951
  %v1016 = vpack.c.b16 %v952, %v952
  %v1017 = vpack.c.b16 %v953, %v953
  %v1018 = vpack.c.b16 %v954, %v954
  %v1019 = vpack.c.b16 %v955, %v955
  %v1020 = vpack.c.b16 %v956, %v956
  %v1021 = vpack.c.b16 %v957, %v957
  %v1022 = vpack.c.b16 %v958, %v958
  %v1023 = vpack.c.b16 %v959, %v959
  %v1024 = vpack.c.b16 %v960, %v960
  %v1025 = vpack.c.b16 %v961, %v961
  %v1026 = vpack.c.b16 %v962, %v962
  %v1027 = vpack.c.b16 %v963, %v963
  %v1028 = vpack.c.b16 %v964, %v964
  %v1029 = vpack.c.b16 %v965, %v965
  %v1030 = vpack.c.b16 %v966, %v966
  %v1031 = vpack.c.b16 %v967, %v967
  %v1032 = vpack.c.b16 %v968, %v968
  %v1033 = vpack.c.b16 %v969, %v969
  %v1034 = vpack.c.b16 %v970, %v970
  %v1035 = vpack.c.b16 %v971, %v971
  %v1036 = vpack.c.b16 %v972, %v972
  %v1037 = vpack.c.b16 %v973, %v973
  %v1038 = vpack.c.b16 %v974, %v974
  %v1039 = vpack.c.b16 %v975, %v975
  %v1040 = vpack.c.b16 %v976, %v976
  %v1041 = vpack.c.b16 %v977, %v977
  %v1042 = vpack.c.b16 %v978, %v978
  %v1043 = vpack.c.b16 %v979, %v979
  %v1044 = vpack.c.b16 %v980, %v980
  %v1045 = vpack.c.b16 %v981, %v981
  %v1046 = vpack.c.b16 %v982, %v982
  %v1047 = vpack.c.b16 %v983, %v983
  %v1048 = vpack.c.b16 %v984, %v984
  %v1049 = vpack.c.b16 %v985, %v985
  %v1050 = vpack.c.b16 %v986, %v986
  %v1051 = vpack.c.b16 %v987, %v987
  %v1052 = vpack.c.b16 %v988, %v988
  %v1053 = vpack.c.b16 %v989, %v989
  %v1054 = vpack.c.b16 %v990, %v990
  %v1055 = vpack.c.b16 %v991, %v991
  %v1056 = vpack.c.b16 %v992, %v992
  %v1057 = vpack.c.b16 %v993, %v993
  %v1058 = vpack.c.b16 %v994, %v994
  %s1123 = sshra.s32 %s866, 3
  %s1124 = sand.u32 %s866, 7
  %s1125 = smul.addr %s1123, 4
  %s1126 = scalar_lea.vmem %s4, %s1125
  %1127 = vst [vmem:[%s1126] sm:$0xf] %v995
  %1128 = vst [vmem:[%s1126 + $0x4] sm:$0xf] %v996
  %1129 = vst [vmem:[%s1126 + $0x8] sm:$0xf] %v997
  %1130 = vst [vmem:[%s1126 + $0xc] sm:$0xf] %v998
  %1131 = vst [vmem:[%s1126 + $0x10] sm:$0xf] %v999
  %1132 = vst [vmem:[%s1126 + $0x14] sm:$0xf] %v1000
  %1133 = vst [vmem:[%s1126 + $0x18] sm:$0xf] %v1001
  %1134 = vst [vmem:[%s1126 + $0x1c] sm:$0xf] %v1002
  %1135 = vst [vmem:[%s1126 + $0x20] sm:$0xf] %v1003
  %1136 = vst [vmem:[%s1126 + $0x24] sm:$0xf] %v1004
  %1137 = vst [vmem:[%s1126 + $0x28] sm:$0xf] %v1005
  %1138 = vst [vmem:[%s1126 + $0x2c] sm:$0xf] %v1006
  %1139 = vst [vmem:[%s1126 + $0x30] sm:$0xf] %v1007
  %1140 = vst [vmem:[%s1126 + $0x34] sm:$0xf] %v1008
  %1141 = vst [vmem:[%s1126 + $0x38] sm:$0xf] %v1009
  %1142 = vst [vmem:[%s1126 + $0x3c] sm:$0xf] %v1010
  %1143 = vst [vmem:[%s1126 + $0x40] sm:$0xf] %v1011
  %1144 = vst [vmem:[%s1126 + $0x44] sm:$0xf] %v1012
  %1145 = vst [vmem:[%s1126 + $0x48] sm:$0xf] %v1013
  %1146 = vst [vmem:[%s1126 + $0x4c] sm:$0xf] %v1014
  %1147 = vst [vmem:[%s1126 + $0x50] sm:$0xf] %v1015
  %1148 = vst [vmem:[%s1126 + $0x54] sm:$0xf] %v1016
  %1149 = vst [vmem:[%s1126 + $0x58] sm:$0xf] %v1017
  %1150 = vst [vmem:[%s1126 + $0x5c] sm:$0xf] %v1018
  %1151 = vst [vmem:[%s1126 + $0x60] sm:$0xf] %v1019
  %1152 = vst [vmem:[%s1126 + $0x64] sm:$0xf] %v1020
  %1153 = vst [vmem:[%s1126 + $0x68] sm:$0xf] %v1021
  %1154 = vst [vmem:[%s1126 + $0x6c] sm:$0xf] %v1022
  %1155 = vst [vmem:[%s1126 + $0x70] sm:$0xf] %v1023
  %1156 = vst [vmem:[%s1126 + $0x74] sm:$0xf] %v1024
  %1157 = vst [vmem:[%s1126 + $0x78] sm:$0xf] %v1025
  %1158 = vst [vmem:[%s1126 + $0x7c] sm:$0xf] %v1026
  %1159 = vst [vmem:[%s1126 + $0x80] sm:$0xf] %v1027
  %1160 = vst [vmem:[%s1126 + $0x84] sm:$0xf] %v1028
  %1161 = vst [vmem:[%s1126 + $0x88] sm:$0xf] %v1029
  %1162 = vst [vmem:[%s1126 + $0x8c] sm:$0xf] %v1030
  %1163 = vst [vmem:[%s1126 + $0x90] sm:$0xf] %v1031
  %1164 = vst [vmem:[%s1126 + $0x94] sm:$0xf] %v1032
  %1165 = vst [vmem:[%s1126 + $0x98] sm:$0xf] %v1033
  %1166 = vst [vmem:[%s1126 + $0x9c] sm:$0xf] %v1034
  %1167 = vst [vmem:[%s1126 + $0xa0] sm:$0xf] %v1035
  %1168 = vst [vmem:[%s1126 + $0xa4] sm:$0xf] %v1036
  %1169 = vst [vmem:[%s1126 + $0xa8] sm:$0xf] %v1037
  %1170 = vst [vmem:[%s1126 + $0xac] sm:$0xf] %v1038
  %1171 = vst [vmem:[%s1126 + $0xb0] sm:$0xf] %v1039
  %1172 = vst [vmem:[%s1126 + $0xb4] sm:$0xf] %v1040
  %1173 = vst [vmem:[%s1126 + $0xb8] sm:$0xf] %v1041
  %1174 = vst [vmem:[%s1126 + $0xbc] sm:$0xf] %v1042
  %1175 = vst [vmem:[%s1126 + $0xc0] sm:$0xf] %v1043
  %1176 = vst [vmem:[%s1126 + $0xc4] sm:$0xf] %v1044
  %1177 = vst [vmem:[%s1126 + $0xc8] sm:$0xf] %v1045
  %1178 = vst [vmem:[%s1126 + $0xcc] sm:$0xf] %v1046
  %1179 = vst [vmem:[%s1126 + $0xd0] sm:$0xf] %v1047
  %1180 = vst [vmem:[%s1126 + $0xd4] sm:$0xf] %v1048
  %1181 = vst [vmem:[%s1126 + $0xd8] sm:$0xf] %v1049
  %1182 = vst [vmem:[%s1126 + $0xdc] sm:$0xf] %v1050
  %1183 = vst [vmem:[%s1126 + $0xe0] sm:$0xf] %v1051
  %1184 = vst [vmem:[%s1126 + $0xe4] sm:$0xf] %v1052
  %1185 = vst [vmem:[%s1126 + $0xe8] sm:$0xf] %v1053
  %1186 = vst [vmem:[%s1126 + $0xec] sm:$0xf] %v1054
  %1187 = vst [vmem:[%s1126 + $0xf0] sm:$0xf] %v1055
  %1188 = vst [vmem:[%s1126 + $0xf4] sm:$0xf] %v1056
  %1189 = vst [vmem:[%s1126 + $0xf8] sm:$0xf] %v1057
  %1190 = vst [vmem:[%s1126 + $0xfc] sm:$0xf] %v1058
  // Predicated region
  $region22: #{discriminator_forward.4} parent=0 // pred_check
    %p1191 = pneg %p18
  $region23: #{discriminator_forward.4} parent=0 // pred_check_branch
    %1193 = sbr.rel (%p1191) target = $region25
  $region24: #{discriminator_forward.4} parent=0 // pred_region
    %v1194 = vld [vmem:[#allocation2] sm:$0x1]
    %v1195 = vmul.f32 %v1194, 0.001953125
    %v1196 = vld [vmem:[#allocation3] sm:$0x1]
    %v1197 = vmul.f32 %v1196, 0.001953125
    %v1198 = vmul.f32 %v1195, %v1195
    %v1199 = vsub.f32 %v1197, %v1198
    %v1200 = vmax.f32 %v1199, 0.0
    %v1201 = vld [vmem:[%s2] sm:$0x1]
    %v1202 = vadd.f32 %v1200, 1e-05
    %v1203 = vrsqrt.pop %v1202
    %v1204 = vmul.f32 %v1201, %v1203
    %v1205 = vld [vmem:[%s3] sm:$0x1]
    %v1206 = vmul.f32 %v1195, %v1204
    %v1207 = vsub.f32 %v1205, %v1206
    %v1208 = vld [vmem:[%s4] sm:$0xf]
    %v1209 = vld [vmem:[%s4 + $0x4] sm:$0xf]
    %v1210 = vld [vmem:[%s4 + $0x8] sm:$0xf]
    %v1211 = vld [vmem:[%s4 + $0xc] sm:$0xf]
    %v1212 = vld [vmem:[%s4 + $0x10] sm:$0xf]
    %v1213 = vld [vmem:[%s4 + $0x14] sm:$0xf]
    %v1214 = vld [vmem:[%s4 + $0x18] sm:$0xf]
    %v1215 = vld [vmem:[%s4 + $0x1c] sm:$0xf]
    %v1216 = vld [vmem:[%s4 + $0x20] sm:$0xf]
    %v1217 = vld [vmem:[%s4 + $0x24] sm:$0xf]
    %v1218 = vld [vmem:[%s4 + $0x28] sm:$0xf]
    %v1219 = vld [vmem:[%s4 + $0x2c] sm:$0xf]
    %v1220 = vld [vmem:[%s4 + $0x30] sm:$0xf]
    %v1221 = vld [vmem:[%s4 + $0x34] sm:$0xf]
    %v1222 = vld [vmem:[%s4 + $0x38] sm:$0xf]
    %v1223 = vld [vmem:[%s4 + $0x3c] sm:$0xf]
    %v1224 = vld [vmem:[%s4 + $0x40] sm:$0xf]
    %v1225 = vld [vmem:[%s4 + $0x44] sm:$0xf]
    %v1226 = vld [vmem:[%s4 + $0x48] sm:$0xf]
    %v1227 = vld [vmem:[%s4 + $0x4c] sm:$0xf]
    %v1228 = vld [vmem:[%s4 + $0x50] sm:$0xf]
    %v1229 = vld [vmem:[%s4 + $0x54] sm:$0xf]
    %v1230 = vld [vmem:[%s4 + $0x58] sm:$0xf]
    %v1231 = vld [vmem:[%s4 + $0x5c] sm:$0xf]
    %v1232 = vld [vmem:[%s4 + $0x60] sm:$0xf]
    %v1233 = vld [vmem:[%s4 + $0x64] sm:$0xf]
    %v1234 = vld [vmem:[%s4 + $0x68] sm:$0xf]
    %v1235 = vld [vmem:[%s4 + $0x6c] sm:$0xf]
    %v1236 = vld [vmem:[%s4 + $0x70] sm:$0xf]
    %v1237 = vld [vmem:[%s4 + $0x74] sm:$0xf]
    %v1238 = vld [vmem:[%s4 + $0x78] sm:$0xf]
    %v1239 = vld [vmem:[%s4 + $0x7c] sm:$0xf]
    %v1240 = vld [vmem:[%s4 + $0x80] sm:$0xf]
    %v1241 = vld [vmem:[%s4 + $0x84] sm:$0xf]
    %v1242 = vld [vmem:[%s4 + $0x88] sm:$0xf]
    %v1243 = vld [vmem:[%s4 + $0x8c] sm:$0xf]
    %v1244 = vld [vmem:[%s4 + $0x90] sm:$0xf]
    %v1245 = vld [vmem:[%s4 + $0x94] sm:$0xf]
    %v1246 = vld [vmem:[%s4 + $0x98] sm:$0xf]
    %v1247 = vld [vmem:[%s4 + $0x9c] sm:$0xf]
    %v1248 = vld [vmem:[%s4 + $0xa0] sm:$0xf]
    %v1249 = vld [vmem:[%s4 + $0xa4] sm:$0xf]
    %v1250 = vld [vmem:[%s4 + $0xa8] sm:$0xf]
    %v1251 = vld [vmem:[%s4 + $0xac] sm:$0xf]
    %v1252 = vld [vmem:[%s4 + $0xb0] sm:$0xf]
    %v1253 = vld [vmem:[%s4 + $0xb4] sm:$0xf]
    %v1254 = vld [vmem:[%s4 + $0xb8] sm:$0xf]
    %v1255 = vld [vmem:[%s4 + $0xbc] sm:$0xf]
    %v1256 = vld [vmem:[%s4 + $0xc0] sm:$0xf]
    %v1257 = vld [vmem:[%s4 + $0xc4] sm:$0xf]
    %v1258 = vld [vmem:[%s4 + $0xc8] sm:$0xf]
    %v1259 = vld [vmem:[%s4 + $0xcc] sm:$0xf]
    %v1260 = vld [vmem:[%s4 + $0xd0] sm:$0xf]
    %v1261 = vld [vmem:[%s4 + $0xd4] sm:$0xf]
    %v1262 = vld [vmem:[%s4 + $0xd8] sm:$0xf]
    %v1263 = vld [vmem:[%s4 + $0xdc] sm:$0xf]
    %v1264 = vld [vmem:[%s4 + $0xe0] sm:$0xf]
    %v1265 = vld [vmem:[%s4 + $0xe4] sm:$0xf]
    %v1266 = vld [vmem:[%s4 + $0xe8] sm:$0xf]
    %v1267 = vld [vmem:[%s4 + $0xec] sm:$0xf]
    %v1268 = vld [vmem:[%s4 + $0xf0] sm:$0xf]
    %v1269 = vld [vmem:[%s4 + $0xf4] sm:$0xf]
    %v1270 = vld [vmem:[%s4 + $0xf8] sm:$0xf]
    %v1271 = vld [vmem:[%s4 + $0xfc] sm:$0xf]
    %v1272 = vunpack.c.l.bf16 %v1208
    %v1273 = vunpack.c.l.bf16 %v1209
    %v1274 = vunpack.c.l.bf16 %v1210
    %v1275 = vunpack.c.l.bf16 %v1211
    %v1276 = vunpack.c.l.bf16 %v1212
    %v1277 = vunpack.c.l.bf16 %v1213
    %v1278 = vunpack.c.l.bf16 %v1214
    %v1279 = vunpack.c.l.bf16 %v1215
    %v1280 = vunpack.c.l.bf16 %v1216
    %v1281 = vunpack.c.l.bf16 %v1217
    %v1282 = vunpack.c.l.bf16 %v1218
    %v1283 = vunpack.c.l.bf16 %v1219
    %v1284 = vunpack.c.l.bf16 %v1220
    %v1285 = vunpack.c.l.bf16 %v1221
    %v1286 = vunpack.c.l.bf16 %v1222
    %v1287 = vunpack.c.l.bf16 %v1223
    %v1288 = vunpack.c.l.bf16 %v1224
    %v1289 = vunpack.c.l.bf16 %v1225
    %v1290 = vunpack.c.l.bf16 %v1226
    %v1291 = vunpack.c.l.bf16 %v1227
    %v1292 = vunpack.c.l.bf16 %v1228
    %v1293 = vunpack.c.l.bf16 %v1229
    %v1294 = vunpack.c.l.bf16 %v1230
    %v1295 = vunpack.c.l.bf16 %v1231
    %v1296 = vunpack.c.l.bf16 %v1232
    %v1297 = vunpack.c.l.bf16 %v1233
    %v1298 = vunpack.c.l.bf16 %v1234
    %v1299 = vunpack.c.l.bf16 %v1235
    %v1300 = vunpack.c.l.bf16 %v1236
    %v1301 = vunpack.c.l.bf16 %v1237
    %v1302 = vunpack.c.l.bf16 %v1238
    %v1303 = vunpack.c.l.bf16 %v1239
    %v1304 = vunpack.c.l.bf16 %v1240
    %v1305 = vunpack.c.l.bf16 %v1241
    %v1306 = vunpack.c.l.bf16 %v1242
    %v1307 = vunpack.c.l.bf16 %v1243
    %v1308 = vunpack.c.l.bf16 %v1244
    %v1309 = vunpack.c.l.bf16 %v1245
    %v1310 = vunpack.c.l.bf16 %v1246
    %v1311 = vunpack.c.l.bf16 %v1247
    %v1312 = vunpack.c.l.bf16 %v1248
    %v1313 = vunpack.c.l.bf16 %v1249
    %v1314 = vunpack.c.l.bf16 %v1250
    %v1315 = vunpack.c.l.bf16 %v1251
    %v1316 = vunpack.c.l.bf16 %v1252
    %v1317 = vunpack.c.l.bf16 %v1253
    %v1318 = vunpack.c.l.bf16 %v1254
    %v1319 = vunpack.c.l.bf16 %v1255
    %v1320 = vunpack.c.l.bf16 %v1256
    %v1321 = vunpack.c.l.bf16 %v1257
    %v1322 = vunpack.c.l.bf16 %v1258
    %v1323 = vunpack.c.l.bf16 %v1259
    %v1324 = vunpack.c.l.bf16 %v1260
    %v1325 = vunpack.c.l.bf16 %v1261
    %v1326 = vunpack.c.l.bf16 %v1262
    %v1327 = vunpack.c.l.bf16 %v1263
    %v1328 = vunpack.c.l.bf16 %v1264
    %v1329 = vunpack.c.l.bf16 %v1265
    %v1330 = vunpack.c.l.bf16 %v1266
    %v1331 = vunpack.c.l.bf16 %v1267
    %v1332 = vunpack.c.l.bf16 %v1268
    %v1333 = vunpack.c.l.bf16 %v1269
    %v1334 = vunpack.c.l.bf16 %v1270
    %v1335 = vunpack.c.l.bf16 %v1271
    %v1337 = vlaneseq
    %v1338 = vshrl.u32 %v1337, 7
    %v1339 = vsub.s32 0, %v1338
    %v1340 = vrot.slane %v1204, %v1339
    %v1342 = vmul.f32 %v1272, %v1340
    %v1343 = vmul.f32 %v1273, %v1340
    %v1344 = vmul.f32 %v1274, %v1340
    %v1345 = vmul.f32 %v1275, %v1340
    %v1346 = vmul.f32 %v1276, %v1340
    %v1347 = vmul.f32 %v1277, %v1340
    %v1348 = vmul.f32 %v1278, %v1340
    %v1349 = vmul.f32 %v1279, %v1340
    %v1350 = vmul.f32 %v1280, %v1340
    %v1351 = vmul.f32 %v1281, %v1340
    %v1352 = vmul.f32 %v1282, %v1340
    %v1353 = vmul.f32 %v1283, %v1340
    %v1354 = vmul.f32 %v1284, %v1340
    %v1355 = vmul.f32 %v1285, %v1340
    %v1356 = vmul.f32 %v1286, %v1340
    %v1357 = vmul.f32 %v1287, %v1340
    %v1358 = vmul.f32 %v1288, %v1340
    %v1359 = vmul.f32 %v1289, %v1340
    %v1360 = vmul.f32 %v1290, %v1340
    %v1361 = vmul.f32 %v1291, %v1340
    %v1362 = vmul.f32 %v1292, %v1340
    %v1363 = vmul.f32 %v1293, %v1340
    %v1364 = vmul.f32 %v1294, %v1340
    %v1365 = vmul.f32 %v1295, %v1340
    %v1366 = vmul.f32 %v1296, %v1340
    %v1367 = vmul.f32 %v1297, %v1340
    %v1368 = vmul.f32 %v1298, %v1340
    %v1369 = vmul.f32 %v1299, %v1340
    %v1370 = vmul.f32 %v1300, %v1340
    %v1371 = vmul.f32 %v1301, %v1340
    %v1372 = vmul.f32 %v1302, %v1340
    %v1373 = vmul.f32 %v1303, %v1340
    %v1374 = vmul.f32 %v1304, %v1340
    %v1375 = vmul.f32 %v1305, %v1340
    %v1376 = vmul.f32 %v1306, %v1340
    %v1377 = vmul.f32 %v1307, %v1340
    %v1378 = vmul.f32 %v1308, %v1340
    %v1379 = vmul.f32 %v1309, %v1340
    %v1380 = vmul.f32 %v1310, %v1340
    %v1381 = vmul.f32 %v1311, %v1340
    %v1382 = vmul.f32 %v1312, %v1340
    %v1383 = vmul.f32 %v1313, %v1340
    %v1384 = vmul.f32 %v1314, %v1340
    %v1385 = vmul.f32 %v1315, %v1340
    %v1386 = vmul.f32 %v1316, %v1340
    %v1387 = vmul.f32 %v1317, %v1340
    %v1388 = vmul.f32 %v1318, %v1340
    %v1389 = vmul.f32 %v1319, %v1340
    %v1390 = vmul.f32 %v1320, %v1340
    %v1391 = vmul.f32 %v1321, %v1340
    %v1392 = vmul.f32 %v1322, %v1340
    %v1393 = vmul.f32 %v1323, %v1340
    %v1394 = vmul.f32 %v1324, %v1340
    %v1395 = vmul.f32 %v1325, %v1340
    %v1396 = vmul.f32 %v1326, %v1340
    %v1397 = vmul.f32 %v1327, %v1340
    %v1398 = vmul.f32 %v1328, %v1340
    %v1399 = vmul.f32 %v1329, %v1340
    %v1400 = vmul.f32 %v1330, %v1340
    %v1401 = vmul.f32 %v1331, %v1340
    %v1402 = vmul.f32 %v1332, %v1340
    %v1403 = vmul.f32 %v1333, %v1340
    %v1404 = vmul.f32 %v1334, %v1340
    %v1405 = vmul.f32 %v1335, %v1340
    %v1407 = vlaneseq
    %v1408 = vshrl.u32 %v1407, 7
    %v1409 = vsub.s32 0, %v1408
    %v1410 = vrot.slane %v1207, %v1409
    %v1412 = vadd.f32 %v1342, %v1410
    %v1413 = vadd.f32 %v1343, %v1410
    %v1414 = vadd.f32 %v1344, %v1410
    %v1415 = vadd.f32 %v1345, %v1410
    %v1416 = vadd.f32 %v1346, %v1410
    %v1417 = vadd.f32 %v1347, %v1410
    %v1418 = vadd.f32 %v1348, %v1410
    %v1419 = vadd.f32 %v1349, %v1410
    %v1420 = vadd.f32 %v1350, %v1410
    %v1421 = vadd.f32 %v1351, %v1410
    %v1422 = vadd.f32 %v1352, %v1410
    %v1423 = vadd.f32 %v1353, %v1410
    %v1424 = vadd.f32 %v1354, %v1410
    %v1425 = vadd.f32 %v1355, %v1410
    %v1426 = vadd.f32 %v1356, %v1410
    %v1427 = vadd.f32 %v1357, %v1410
    %v1428 = vadd.f32 %v1358, %v1410
    %v1429 = vadd.f32 %v1359, %v1410
    %v1430 = vadd.f32 %v1360, %v1410
    %v1431 = vadd.f32 %v1361, %v1410
    %v1432 = vadd.f32 %v1362, %v1410
    %v1433 = vadd.f32 %v1363, %v1410
    %v1434 = vadd.f32 %v1364, %v1410
    %v1435 = vadd.f32 %v1365, %v1410
    %v1436 = vadd.f32 %v1366, %v1410
    %v1437 = vadd.f32 %v1367, %v1410
    %v1438 = vadd.f32 %v1368, %v1410
    %v1439 = vadd.f32 %v1369, %v1410
    %v1440 = vadd.f32 %v1370, %v1410
    %v1441 = vadd.f32 %v1371, %v1410
    %v1442 = vadd.f32 %v1372, %v1410
    %v1443 = vadd.f32 %v1373, %v1410
    %v1444 = vadd.f32 %v1374, %v1410
    %v1445 = vadd.f32 %v1375, %v1410
    %v1446 = vadd.f32 %v1376, %v1410
    %v1447 = vadd.f32 %v1377, %v1410
    %v1448 = vadd.f32 %v1378, %v1410
    %v1449 = vadd.f32 %v1379, %v1410
    %v1450 = vadd.f32 %v1380, %v1410
    %v1451 = vadd.f32 %v1381, %v1410
    %v1452 = vadd.f32 %v1382, %v1410
    %v1453 = vadd.f32 %v1383, %v1410
    %v1454 = vadd.f32 %v1384, %v1410
    %v1455 = vadd.f32 %v1385, %v1410
    %v1456 = vadd.f32 %v1386, %v1410
    %v1457 = vadd.f32 %v1387, %v1410
    %v1458 = vadd.f32 %v1388, %v1410
    %v1459 = vadd.f32 %v1389, %v1410
    %v1460 = vadd.f32 %v1390, %v1410
    %v1461 = vadd.f32 %v1391, %v1410
    %v1462 = vadd.f32 %v1392, %v1410
    %v1463 = vadd.f32 %v1393, %v1410
    %v1464 = vadd.f32 %v1394, %v1410
    %v1465 = vadd.f32 %v1395, %v1410
    %v1466 = vadd.f32 %v1396, %v1410
    %v1467 = vadd.f32 %v1397, %v1410
    %v1468 = vadd.f32 %v1398, %v1410
    %v1469 = vadd.f32 %v1399, %v1410
    %v1470 = vadd.f32 %v1400, %v1410
    %v1471 = vadd.f32 %v1401, %v1410
    %v1472 = vadd.f32 %v1402, %v1410
    %v1473 = vadd.f32 %v1403, %v1410
    %v1474 = vadd.f32 %v1404, %v1410
    %v1475 = vadd.f32 %v1405, %v1410
    %v1476 = vmax.f32 %v1412, 0.0
    %v1477 = vmax.f32 %v1413, 0.0
    %v1478 = vmax.f32 %v1414, 0.0
    %v1479 = vmax.f32 %v1415, 0.0
    %v1480 = vmax.f32 %v1416, 0.0
    %v1481 = vmax.f32 %v1417, 0.0
    %v1482 = vmax.f32 %v1418, 0.0
    %v1483 = vmax.f32 %v1419, 0.0
    %v1484 = vmax.f32 %v1420, 0.0
    %v1485 = vmax.f32 %v1421, 0.0
    %v1486 = vmax.f32 %v1422, 0.0
    %v1487 = vmax.f32 %v1423, 0.0
    %v1488 = vmax.f32 %v1424, 0.0
    %v1489 = vmax.f32 %v1425, 0.0
    %v1490 = vmax.f32 %v1426, 0.0
    %v1491 = vmax.f32 %v1427, 0.0
    %v1492 = vmax.f32 %v1428, 0.0
    %v1493 = vmax.f32 %v1429, 0.0
    %v1494 = vmax.f32 %v1430, 0.0
    %v1495 = vmax.f32 %v1431, 0.0
    %v1496 = vmax.f32 %v1432, 0.0
    %v1497 = vmax.f32 %v1433, 0.0
    %v1498 = vmax.f32 %v1434, 0.0
    %v1499 = vmax.f32 %v1435, 0.0
    %v1500 = vmax.f32 %v1436, 0.0
    %v1501 = vmax.f32 %v1437, 0.0
    %v1502 = vmax.f32 %v1438, 0.0
    %v1503 = vmax.f32 %v1439, 0.0
    %v1504 = vmax.f32 %v1440, 0.0
    %v1505 = vmax.f32 %v1441, 0.0
    %v1506 = vmax.f32 %v1442, 0.0
    %v1507 = vmax.f32 %v1443, 0.0
    %v1508 = vmax.f32 %v1444, 0.0
    %v1509 = vmax.f32 %v1445, 0.0
    %v1510 = vmax.f32 %v1446, 0.0
    %v1511 = vmax.f32 %v1447, 0.0
    %v1512 = vmax.f32 %v1448, 0.0
    %v1513 = vmax.f32 %v1449, 0.0
    %v1514 = vmax.f32 %v1450, 0.0
    %v1515 = vmax.f32 %v1451, 0.0
    %v1516 = vmax.f32 %v1452, 0.0
    %v1517 = vmax.f32 %v1453, 0.0
    %v1518 = vmax.f32 %v1454, 0.0
    %v1519 = vmax.f32 %v1455, 0.0
    %v1520 = vmax.f32 %v1456, 0.0
    %v1521 = vmax.f32 %v1457, 0.0
    %v1522 = vmax.f32 %v1458, 0.0
    %v1523 = vmax.f32 %v1459, 0.0
    %v1524 = vmax.f32 %v1460, 0.0
    %v1525 = vmax.f32 %v1461, 0.0
    %v1526 = vmax.f32 %v1462, 0.0
    %v1527 = vmax.f32 %v1463, 0.0
    %v1528 = vmax.f32 %v1464, 0.0
    %v1529 = vmax.f32 %v1465, 0.0
    %v1530 = vmax.f32 %v1466, 0.0
    %v1531 = vmax.f32 %v1467, 0.0
    %v1532 = vmax.f32 %v1468, 0.0
    %v1533 = vmax.f32 %v1469, 0.0
    %v1534 = vmax.f32 %v1470, 0.0
    %v1535 = vmax.f32 %v1471, 0.0
    %v1536 = vmax.f32 %v1472, 0.0
    %v1537 = vmax.f32 %v1473, 0.0
    %v1538 = vmax.f32 %v1474, 0.0
    %v1539 = vmax.f32 %v1475, 0.0
    %v1540 = vpack.c.bf16 %v1477, %v1476
    %v1541 = vpack.c.bf16 %v1479, %v1478
    %v1542 = vpack.c.bf16 %v1481, %v1480
    %v1543 = vpack.c.bf16 %v1483, %v1482
    %v1544 = vpack.c.bf16 %v1485, %v1484
    %v1545 = vpack.c.bf16 %v1487, %v1486
    %v1546 = vpack.c.bf16 %v1489, %v1488
    %v1547 = vpack.c.bf16 %v1491, %v1490
    %v1548 = vpack.c.bf16 %v1493, %v1492
    %v1549 = vpack.c.bf16 %v1495, %v1494
    %v1550 = vpack.c.bf16 %v1497, %v1496
    %v1551 = vpack.c.bf16 %v1499, %v1498
    %v1552 = vpack.c.bf16 %v1501, %v1500
    %v1553 = vpack.c.bf16 %v1503, %v1502
    %v1554 = vpack.c.bf16 %v1505, %v1504
    %v1555 = vpack.c.bf16 %v1507, %v1506
    %v1556 = vpack.c.bf16 %v1509, %v1508
    %v1557 = vpack.c.bf16 %v1511, %v1510
    %v1558 = vpack.c.bf16 %v1513, %v1512
    %v1559 = vpack.c.bf16 %v1515, %v1514
    %v1560 = vpack.c.bf16 %v1517, %v1516
    %v1561 = vpack.c.bf16 %v1519, %v1518
    %v1562 = vpack.c.bf16 %v1521, %v1520
    %v1563 = vpack.c.bf16 %v1523, %v1522
    %v1564 = vpack.c.bf16 %v1525, %v1524
    %v1565 = vpack.c.bf16 %v1527, %v1526
    %v1566 = vpack.c.bf16 %v1529, %v1528
    %v1567 = vpack.c.bf16 %v1531, %v1530
    %v1568 = vpack.c.bf16 %v1533, %v1532
    %v1569 = vpack.c.bf16 %v1535, %v1534
    %v1570 = vpack.c.bf16 %v1537, %v1536
    %v1571 = vpack.c.bf16 %v1539, %v1538
    %v1604 = vunpack.c.l.b16 %v1540
    %v1605 = vunpack.c.h.b16 %v1540
    %v1606 = vunpack.c.l.b16 %v1541
    %v1607 = vunpack.c.h.b16 %v1541
    %v1608 = vunpack.c.l.b16 %v1542
    %v1609 = vunpack.c.h.b16 %v1542
    %v1610 = vunpack.c.l.b16 %v1543
    %v1611 = vunpack.c.h.b16 %v1543
    %v1612 = vunpack.c.l.b16 %v1544
    %v1613 = vunpack.c.h.b16 %v1544
    %v1614 = vunpack.c.l.b16 %v1545
    %v1615 = vunpack.c.h.b16 %v1545
    %v1616 = vunpack.c.l.b16 %v1546
    %v1617 = vunpack.c.h.b16 %v1546
    %v1618 = vunpack.c.l.b16 %v1547
    %v1619 = vunpack.c.h.b16 %v1547
    %v1620 = vunpack.c.l.b16 %v1548
    %v1621 = vunpack.c.h.b16 %v1548
    %v1622 = vunpack.c.l.b16 %v1549
    %v1623 = vunpack.c.h.b16 %v1549
    %v1624 = vunpack.c.l.b16 %v1550
    %v1625 = vunpack.c.h.b16 %v1550
    %v1626 = vunpack.c.l.b16 %v1551
    %v1627 = vunpack.c.h.b16 %v1551
    %v1628 = vunpack.c.l.b16 %v1552
    %v1629 = vunpack.c.h.b16 %v1552
    %v1630 = vunpack.c.l.b16 %v1553
    %v1631 = vunpack.c.h.b16 %v1553
    %v1632 = vunpack.c.l.b16 %v1554
    %v1633 = vunpack.c.h.b16 %v1554
    %v1634 = vunpack.c.l.b16 %v1555
    %v1635 = vunpack.c.h.b16 %v1555
    %v1636 = vunpack.c.l.b16 %v1556
    %v1637 = vunpack.c.h.b16 %v1556
    %v1638 = vunpack.c.l.b16 %v1557
    %v1639 = vunpack.c.h.b16 %v1557
    %v1640 = vunpack.c.l.b16 %v1558
    %v1641 = vunpack.c.h.b16 %v1558
    %v1642 = vunpack.c.l.b16 %v1559
    %v1643 = vunpack.c.h.b16 %v1559
    %v1644 = vunpack.c.l.b16 %v1560
    %v1645 = vunpack.c.h.b16 %v1560
    %v1646 = vunpack.c.l.b16 %v1561
    %v1647 = vunpack.c.h.b16 %v1561
    %v1648 = vunpack.c.l.b16 %v1562
    %v1649 = vunpack.c.h.b16 %v1562
    %v1650 = vunpack.c.l.b16 %v1563
    %v1651 = vunpack.c.h.b16 %v1563
    %v1652 = vunpack.c.l.b16 %v1564
    %v1653 = vunpack.c.h.b16 %v1564
    %v1654 = vunpack.c.l.b16 %v1565
    %v1655 = vunpack.c.h.b16 %v1565
    %v1656 = vunpack.c.l.b16 %v1566
    %v1657 = vunpack.c.h.b16 %v1566
    %v1658 = vunpack.c.l.b16 %v1567
    %v1659 = vunpack.c.h.b16 %v1567
    %v1660 = vunpack.c.l.b16 %v1568
    %v1661 = vunpack.c.h.b16 %v1568
    %v1662 = vunpack.c.l.b16 %v1569
    %v1663 = vunpack.c.h.b16 %v1569
    %v1664 = vunpack.c.l.b16 %v1570
    %v1665 = vunpack.c.h.b16 %v1570
    %v1666 = vunpack.c.l.b16 %v1571
    %v1667 = vunpack.c.h.b16 %v1571
    %v1668 = vpack.c.b16 %v1604, %v1604
    %v1669 = vpack.c.b16 %v1605, %v1605
    %v1670 = vpack.c.b16 %v1606, %v1606
    %v1671 = vpack.c.b16 %v1607, %v1607
    %v1672 = vpack.c.b16 %v1608, %v1608
    %v1673 = vpack.c.b16 %v1609, %v1609
    %v1674 = vpack.c.b16 %v1610, %v1610
    %v1675 = vpack.c.b16 %v1611, %v1611
    %v1676 = vpack.c.b16 %v1612, %v1612
    %v1677 = vpack.c.b16 %v1613, %v1613
    %v1678 = vpack.c.b16 %v1614, %v1614
    %v1679 = vpack.c.b16 %v1615, %v1615
    %v1680 = vpack.c.b16 %v1616, %v1616
    %v1681 = vpack.c.b16 %v1617, %v1617
    %v1682 = vpack.c.b16 %v1618, %v1618
    %v1683 = vpack.c.b16 %v1619, %v1619
    %v1684 = vpack.c.b16 %v1620, %v1620
    %v1685 = vpack.c.b16 %v1621, %v1621
    %v1686 = vpack.c.b16 %v1622, %v1622
    %v1687 = vpack.c.b16 %v1623, %v1623
    %v1688 = vpack.c.b16 %v1624, %v1624
    %v1689 = vpack.c.b16 %v1625, %v1625
    %v1690 = vpack.c.b16 %v1626, %v1626
    %v1691 = vpack.c.b16 %v1627, %v1627
    %v1692 = vpack.c.b16 %v1628, %v1628
    %v1693 = vpack.c.b16 %v1629, %v1629
    %v1694 = vpack.c.b16 %v1630, %v1630
    %v1695 = vpack.c.b16 %v1631, %v1631
    %v1696 = vpack.c.b16 %v1632, %v1632
    %v1697 = vpack.c.b16 %v1633, %v1633
    %v1698 = vpack.c.b16 %v1634, %v1634
    %v1699 = vpack.c.b16 %v1635, %v1635
    %v1700 = vpack.c.b16 %v1636, %v1636
    %v1701 = vpack.c.b16 %v1637, %v1637
    %v1702 = vpack.c.b16 %v1638, %v1638
    %v1703 = vpack.c.b16 %v1639, %v1639
    %v1704 = vpack.c.b16 %v1640, %v1640
    %v1705 = vpack.c.b16 %v1641, %v1641
    %v1706 = vpack.c.b16 %v1642, %v1642
    %v1707 = vpack.c.b16 %v1643, %v1643
    %v1708 = vpack.c.b16 %v1644, %v1644
    %v1709 = vpack.c.b16 %v1645, %v1645
    %v1710 = vpack.c.b16 %v1646, %v1646
    %v1711 = vpack.c.b16 %v1647, %v1647
    %v1712 = vpack.c.b16 %v1648, %v1648
    %v1713 = vpack.c.b16 %v1649, %v1649
    %v1714 = vpack.c.b16 %v1650, %v1650
    %v1715 = vpack.c.b16 %v1651, %v1651
    %v1716 = vpack.c.b16 %v1652, %v1652
    %v1717 = vpack.c.b16 %v1653, %v1653
    %v1718 = vpack.c.b16 %v1654, %v1654
    %v1719 = vpack.c.b16 %v1655, %v1655
    %v1720 = vpack.c.b16 %v1656, %v1656
    %v1721 = vpack.c.b16 %v1657, %v1657
    %v1722 = vpack.c.b16 %v1658, %v1658
    %v1723 = vpack.c.b16 %v1659, %v1659
    %v1724 = vpack.c.b16 %v1660, %v1660
    %v1725 = vpack.c.b16 %v1661, %v1661
    %v1726 = vpack.c.b16 %v1662, %v1662
    %v1727 = vpack.c.b16 %v1663, %v1663
    %v1728 = vpack.c.b16 %v1664, %v1664
    %v1729 = vpack.c.b16 %v1665, %v1665
    %v1730 = vpack.c.b16 %v1666, %v1666
    %v1731 = vpack.c.b16 %v1667, %v1667
    %1796 = vst [vmem:[%s4] sm:$0xf] %v1668
    %1797 = vst [vmem:[%s4 + $0x4] sm:$0xf] %v1669
    %1798 = vst [vmem:[%s4 + $0x8] sm:$0xf] %v1670
    %1799 = vst [vmem:[%s4 + $0xc] sm:$0xf] %v1671
    %1800 = vst [vmem:[%s4 + $0x10] sm:$0xf] %v1672
    %1801 = vst [vmem:[%s4 + $0x14] sm:$0xf] %v1673
    %1802 = vst [vmem:[%s4 + $0x18] sm:$0xf] %v1674
    %1803 = vst [vmem:[%s4 + $0x1c] sm:$0xf] %v1675
    %1804 = vst [vmem:[%s4 + $0x20] sm:$0xf] %v1676
    %1805 = vst [vmem:[%s4 + $0x24] sm:$0xf] %v1677
    %1806 = vst [vmem:[%s4 + $0x28] sm:$0xf] %v1678
    %1807 = vst [vmem:[%s4 + $0x2c] sm:$0xf] %v1679
    %1808 = vst [vmem:[%s4 + $0x30] sm:$0xf] %v1680
    %1809 = vst [vmem:[%s4 + $0x34] sm:$0xf] %v1681
    %1810 = vst [vmem:[%s4 + $0x38] sm:$0xf] %v1682
    %1811 = vst [vmem:[%s4 + $0x3c] sm:$0xf] %v1683
    %1812 = vst [vmem:[%s4 + $0x40] sm:$0xf] %v1684
    %1813 = vst [vmem:[%s4 + $0x44] sm:$0xf] %v1685
    %1814 = vst [vmem:[%s4 + $0x48] sm:$0xf] %v1686
    %1815 = vst [vmem:[%s4 + $0x4c] sm:$0xf] %v1687
    %1816 = vst [vmem:[%s4 + $0x50] sm:$0xf] %v1688
    %1817 = vst [vmem:[%s4 + $0x54] sm:$0xf] %v1689
    %1818 = vst [vmem:[%s4 + $0x58] sm:$0xf] %v1690
    %1819 = vst [vmem:[%s4 + $0x5c] sm:$0xf] %v1691
    %1820 = vst [vmem:[%s4 + $0x60] sm:$0xf] %v1692
    %1821 = vst [vmem:[%s4 + $0x64] sm:$0xf] %v1693
    %1822 = vst [vmem:[%s4 + $0x68] sm:$0xf] %v1694
    %1823 = vst [vmem:[%s4 + $0x6c] sm:$0xf] %v1695
    %1824 = vst [vmem:[%s4 + $0x70] sm:$0xf] %v1696
    %1825 = vst [vmem:[%s4 + $0x74] sm:$0xf] %v1697
    %1826 = vst [vmem:[%s4 + $0x78] sm:$0xf] %v1698
    %1827 = vst [vmem:[%s4 + $0x7c] sm:$0xf] %v1699
    %1828 = vst [vmem:[%s4 + $0x80] sm:$0xf] %v1700
    %1829 = vst [vmem:[%s4 + $0x84] sm:$0xf] %v1701
    %1830 = vst [vmem:[%s4 + $0x88] sm:$0xf] %v1702
    %1831 = vst [vmem:[%s4 + $0x8c] sm:$0xf] %v1703
    %1832 = vst [vmem:[%s4 + $0x90] sm:$0xf] %v1704
    %1833 = vst [vmem:[%s4 + $0x94] sm:$0xf] %v1705
    %1834 = vst [vmem:[%s4 + $0x98] sm:$0xf] %v1706
    %1835 = vst [vmem:[%s4 + $0x9c] sm:$0xf] %v1707
    %1836 = vst [vmem:[%s4 + $0xa0] sm:$0xf] %v1708
    %1837 = vst [vmem:[%s4 + $0xa4] sm:$0xf] %v1709
    %1838 = vst [vmem:[%s4 + $0xa8] sm:$0xf] %v1710
    %1839 = vst [vmem:[%s4 + $0xac] sm:$0xf] %v1711
    %1840 = vst [vmem:[%s4 + $0xb0] sm:$0xf] %v1712
    %1841 = vst [vmem:[%s4 + $0xb4] sm:$0xf] %v1713
    %1842 = vst [vmem:[%s4 + $0xb8] sm:$0xf] %v1714
    %1843 = vst [vmem:[%s4 + $0xbc] sm:$0xf] %v1715
    %1844 = vst [vmem:[%s4 + $0xc0] sm:$0xf] %v1716
    %1845 = vst [vmem:[%s4 + $0xc4] sm:$0xf] %v1717
    %1846 = vst [vmem:[%s4 + $0xc8] sm:$0xf] %v1718
    %1847 = vst [vmem:[%s4 + $0xcc] sm:$0xf] %v1719
    %1848 = vst [vmem:[%s4 + $0xd0] sm:$0xf] %v1720
    %1849 = vst [vmem:[%s4 + $0xd4] sm:$0xf] %v1721
    %1850 = vst [vmem:[%s4 + $0xd8] sm:$0xf] %v1722
    %1851 = vst [vmem:[%s4 + $0xdc] sm:$0xf] %v1723
    %1852 = vst [vmem:[%s4 + $0xe0] sm:$0xf] %v1724
    %1853 = vst [vmem:[%s4 + $0xe4] sm:$0xf] %v1725
    %1854 = vst [vmem:[%s4 + $0xe8] sm:$0xf] %v1726
    %1855 = vst [vmem:[%s4 + $0xec] sm:$0xf] %v1727
    %1856 = vst [vmem:[%s4 + $0xf0] sm:$0xf] %v1728
    %1857 = vst [vmem:[%s4 + $0xf4] sm:$0xf] %v1729
    %1858 = vst [vmem:[%s4 + $0xf8] sm:$0xf] %v1730
    %1859 = vst [vmem:[%s4 + $0xfc] sm:$0xf] %v1731
  $region25: #{discriminator_forward.4} parent=0 // pred_fallthru
    _
  // Predicated region
  $region26: #{discriminator_forward.4} parent=0 // pred_check
    _
  $region27: #{discriminator_forward.4} parent=0 // pred_check_branch
    %1861 = sbr.rel (0) target = $region29
  $region28: #{discriminator_forward.4} parent=0 // pred_region
    _
  $region29: #{discriminator_forward.4} parent=0 // pred_fallthru
    _
  // Predicated region
  $region30: #{discriminator_forward.4} parent=0 // pred_check
    _
  $region31: #{discriminator_forward.4} parent=0 // pred_check_branch
    %1863 = sbr.rel (0) target = $region33
  $region32: #{discriminator_forward.4} parent=0 // pred_region
    _
  $region33: #{discriminator_forward.4} parent=0 // pred_fallthru
    _

// kernel: discriminator_forward.5
$region0: #{discriminator_forward.5}
  #allocation0 [shape = 'u32[]', space=smem, size = 0x4, offset = 0x4, fixed_abs, tag = 'smem constant byte address 0x4 - core index']
  #allocation1 [shape = 'u32[144,128]{1,0:T(1,128)}', space=vmem, size = 0x12000, scoped, tag = 'internal scratch']
  #allocation2 [shape = 'f32[1,128]{1,0:T(1,128)}', space=vmem, size = 0x200, scoped, tag = 'scratch operand']
  #allocation3 [shape = 'f32[1,128]{1,0:T(1,128)}', space=vmem, size = 0x200, scoped, tag = 'scratch operand']
  %s0 = inlined_call_operand.vmem [shape: bf16[128,64], index: 0, kind: input, shape index: {}]
  %s1 = inlined_call_operand.vmem [shape: bf16[64,128], index: 1, kind: input, shape index: {}]
  %s2 = inlined_call_operand.vmem [shape: f32[1,128], index: 2, kind: input, shape index: {}]
  %s3 = inlined_call_operand.vmem [shape: f32[1,128], index: 3, kind: input, shape index: {}]
  %s4 = inlined_call_operand.vmem [shape: bf16[128,128], index: 4, kind: output, shape index: {}]
  %s5 = sld [smem:[#allocation0]]
  $region34: #{discriminator_forward.5} parent=0
    _
  %s7 = ssub.s32 1, %s5
  %s8 = scalar_select 0, %s7, %s5
  // Predicated region
  $region2: #{discriminator_forward.5} parent=0 // pred_check
    _
  $region3: #{discriminator_forward.5} parent=0 // pred_check_branch
    %10 = sbr.rel (0) target = $region5
  $region4: #{discriminator_forward.5} parent=0 // pred_region
    _
  $region5: #{discriminator_forward.5} parent=0 // pred_fallthru
    _
  // Predicated region
  $region6: #{discriminator_forward.5} parent=0 // pred_check
    _
  $region7: #{discriminator_forward.5} parent=0 // pred_check_branch
    %12 = sbr.rel (0) target = $region9
  $region8: #{discriminator_forward.5} parent=0 // pred_region
    _
  $region9: #{discriminator_forward.5} parent=0 // pred_fallthru
    _
  // Predicated region
  $region10: #{discriminator_forward.5} parent=0 // pred_check
    _
  $region11: #{discriminator_forward.5} parent=0 // pred_check_branch
    %14 = sbr.rel (0) target = $region13
  $region12: #{discriminator_forward.5} parent=0 // pred_region
    _
  $region13: #{discriminator_forward.5} parent=0 // pred_fallthru
    _
  // Predicated region
  $region14: #{discriminator_forward.5} parent=0 // pred_check
    _
  $region15: #{discriminator_forward.5} parent=0 // pred_check_branch
    %16 = sbr.rel (0) target = $region17
  $region16: #{discriminator_forward.5} parent=0 // pred_region
    _
  $region17: #{discriminator_forward.5} parent=0 // pred_fallthru
    _
  %p18 = scmp.eq.s32.totalorder 0, 0
  // Predicated region
  $region18: #{discriminator_forward.5} parent=0 // pred_check
    %p19 = pneg %p18
  $region19: #{discriminator_forward.5} parent=0 // pred_check_branch
    %21 = sbr.rel (%p19) target = $region21
  $region20: #{discriminator_forward.5} parent=0 // pred_region
    %22 = vst [vmem:[#allocation2] sm:$0x1] 0.0
    %23 = vst [vmem:[#allocation3] sm:$0x1] 0.0
  $region21: #{discriminator_forward.5} parent=0 // pred_fallthru
    _
  %v24 = vld [vmem:[%s0] sm:$0xf]
  %v25 = vld [vmem:[%s0 + $0x4] sm:$0xf]
  %v26 = vld [vmem:[%s0 + $0x8] sm:$0xf]
  %v27 = vld [vmem:[%s0 + $0xc] sm:$0xf]
  %v28 = vld [vmem:[%s0 + $0x10] sm:$0xf]
  %v29 = vld [vmem:[%s0 + $0x14] sm:$0xf]
  %v30 = vld [vmem:[%s0 + $0x18] sm:$0xf]
  %v31 = vld [vmem:[%s0 + $0x1c] sm:$0xf]
  %v32 = vld [vmem:[%s0 + $0x20] sm:$0xf]
  %v33 = vld [vmem:[%s0 + $0x24] sm:$0xf]
  %v34 = vld [vmem:[%s0 + $0x28] sm:$0xf]
  %v35 = vld [vmem:[%s0 + $0x2c] sm:$0xf]
  %v36 = vld [vmem:[%s0 + $0x30] sm:$0xf]
  %v37 = vld [vmem:[%s0 + $0x34] sm:$0xf]
  %v38 = vld [vmem:[%s0 + $0x38] sm:$0xf]
  %v39 = vld [vmem:[%s0 + $0x3c] sm:$0xf]
  %v40 = vld [vmem:[%s1] sm:$0xf]
  %v41 = vld [vmem:[%s1 + $0x4] sm:$0xf]
  %v42 = vld [vmem:[%s1 + $0x8] sm:$0xf]
  %v43 = vld [vmem:[%s1 + $0xc] sm:$0xf]
  %v44 = vld [vmem:[%s1 + $0x10] sm:$0xf]
  %v45 = vld [vmem:[%s1 + $0x14] sm:$0xf]
  %v46 = vld [vmem:[%s1 + $0x18] sm:$0xf]
  %v47 = vld [vmem:[%s1 + $0x1c] sm:$0xf]
  %v64 = vunpack.c.l.b16 %v24
  %v65 = vunpack.c.l.b16 %v25
  %v66 = vunpack.c.l.b16 %v26
  %v67 = vunpack.c.l.b16 %v27
  %v68 = vunpack.c.l.b16 %v28
  %v69 = vunpack.c.l.b16 %v29
  %v70 = vunpack.c.l.b16 %v30
  %v71 = vunpack.c.l.b16 %v31
  %v72 = vunpack.c.l.b16 %v32
  %v73 = vunpack.c.l.b16 %v33
  %v74 = vunpack.c.l.b16 %v34
  %v75 = vunpack.c.l.b16 %v35
  %v76 = vunpack.c.l.b16 %v36
  %v77 = vunpack.c.l.b16 %v37
  %v78 = vunpack.c.l.b16 %v38
  %v79 = vunpack.c.l.b16 %v39
  %v80 = vpack.c.b16 %v65, %v64
  %v81 = vpack.c.b16 %v67, %v66
  %v82 = vpack.c.b16 %v69, %v68
  %v83 = vpack.c.b16 %v71, %v70
  %v84 = vpack.c.b16 %v73, %v72
  %v85 = vpack.c.b16 %v75, %v74
  %v86 = vpack.c.b16 %v77, %v76
  %v87 = vpack.c.b16 %v79, %v78
  %v96 = vunpack.c.l.b16 %v40
  %v97 = vunpack.c.l.b16 %v41
  %v98 = vunpack.c.l.b16 %v42
  %v99 = vunpack.c.l.b16 %v43
  %v100 = vunpack.c.l.b16 %v44
  %v101 = vunpack.c.l.b16 %v45
  %v102 = vunpack.c.l.b16 %v46
  %v103 = vunpack.c.l.b16 %v47
  %v104 = vpack.c.b16 %v97, %v96
  %v105 = vpack.c.b16 %v99, %v98
  %v106 = vpack.c.b16 %v101, %v100
  %v107 = vpack.c.b16 %v103, %v102
  %vm112 = vcmask 523264
  %v114 = vsel %vm112, %v80, 0
  %v117 = vsel %vm112, %v81, 0
  %v120 = vsel %vm112, %v82, 0
  %v123 = vsel %vm112, %v83, 0
  %v126 = vsel %vm112, %v84, 0
  %v129 = vsel %vm112, %v85, 0
  %v132 = vsel %vm112, %v86, 0
  %v135 = vsel %vm112, %v87, 0
  %137 = vmatprep.subr.bf16.mxu0 0
  %138 = vmatpush1.bf16.msra.mxu0 %v104
  %139 = vmatprep.subr.bf16.mxu0 0
  %140 = vmatpush1.bf16.msra.mxu0 %v105
  %141 = vmatprep.subr.bf16.mxu0 0
  %142 = vmatpush1.bf16.msra.mxu0 %v106
  %143 = vmatprep.subr.bf16.mxu0 0
  %144 = vmatpush1.bf16.msra.mxu0 %v107
  %145 = vmatprep.subr.bf16.mxu0 0
  %146 = vmatpush1.bf16.msra.mxu0 0
  %147 = vmatprep.subr.bf16.mxu0 0
  %148 = vmatpush1.bf16.msra.mxu0 0
  %149 = vmatprep.subr.bf16.mxu0 0
  %150 = vmatpush1.bf16.msra.mxu0 0
  %151 = vmatprep.subr.bf16.mxu0 0
  %152 = vmatpush1.bf16.msra.mxu0 0
  %153 = vmatprep.subr.bf16.mxu0 0
  %154 = vmatpush1.bf16.msra.mxu0 0
  %155 = vmatprep.subr.bf16.mxu0 0
  %156 = vmatpush1.bf16.msra.mxu0 0
  %157 = vmatprep.subr.bf16.mxu0 0
  %158 = vmatpush1.bf16.msra.mxu0 0
  %159 = vmatprep.subr.bf16.mxu0 0
  %160 = vmatpush1.bf16.msra.mxu0 0
  %161 = vmatprep.subr.bf16.mxu0 0
  %162 = vmatpush1.bf16.msra.mxu0 0
  %163 = vmatprep.subr.bf16.mxu0 0
  %164 = vmatpush1.bf16.msra.mxu0 0
  %165 = vmatprep.subr.bf16.mxu0 0
  %166 = vmatpush1.bf16.msra.mxu0 0
  %167 = vmatprep.subr.bf16.mxu0 0
  %168 = vmatpush1.bf16.msra.mxu0 0
  %169 = vmatprep.mubr.bf16.mxu0 0
  %170 = vmatmul.mubr.bf16.gmra.mrb[0].mxu0 %v114
  %v171 = vpop.f32.mrb[0].mxu0
  %v172 = vadd.f32 0.0, %v171
  %v173 = vpop.f32.mrb[0].mxu0
  %v174 = vpop.f32.mrb[0].mxu0
  %v175 = vadd.f32 0.0, %v174
  %v176 = vpop.f32.mrb[0].mxu0
  %177 = vmatprep.mubr.bf16.mxu0 0
  %178 = vmatmul.mubr.bf16.gmra.mrb[0].mxu0 %v117
  %v179 = vpop.f32.mrb[0].mxu0
  %v180 = vadd.f32 0.0, %v179
  %v181 = vpop.f32.mrb[0].mxu0
  %v182 = vpop.f32.mrb[0].mxu0
  %v183 = vadd.f32 0.0, %v182
  %v184 = vpop.f32.mrb[0].mxu0
  %185 = vmatprep.mubr.bf16.mxu0 0
  %186 = vmatmul.mubr.bf16.gmra.mrb[0].mxu0 %v120
  %v187 = vpop.f32.mrb[0].mxu0
  %v188 = vadd.f32 0.0, %v187
  %v189 = vpop.f32.mrb[0].mxu0
  %v190 = vpop.f32.mrb[0].mxu0
  %v191 = vadd.f32 0.0, %v190
  %v192 = vpop.f32.mrb[0].mxu0
  %193 = vmatprep.mubr.bf16.mxu0 0
  %194 = vmatmul.mubr.bf16.gmra.mrb[0].mxu0 %v123
  %v195 = vpop.f32.mrb[0].mxu0
  %v196 = vadd.f32 0.0, %v195
  %v197 = vpop.f32.mrb[0].mxu0
  %v198 = vpop.f32.mrb[0].mxu0
  %v199 = vadd.f32 0.0, %v198
  %v200 = vpop.f32.mrb[0].mxu0
  %201 = vmatprep.mubr.bf16.mxu0 0
  %202 = vmatmul.mubr.bf16.gmra.mrb[0].mxu0 %v126
  %v203 = vpop.f32.mrb[0].mxu0
  %v204 = vadd.f32 0.0, %v203
  %v205 = vpop.f32.mrb[0].mxu0
  %v206 = vpop.f32.mrb[0].mxu0
  %v207 = vadd.f32 0.0, %v206
  %v208 = vpop.f32.mrb[0].mxu0
  %209 = vmatprep.mubr.bf16.mxu0 0
  %210 = vmatmul.mubr.bf16.gmra.mrb[0].mxu0 %v129
  %v211 = vpop.f32.mrb[0].mxu0
  %v212 = vadd.f32 0.0, %v211
  %v213 = vpop.f32.mrb[0].mxu0
  %v214 = vpop.f32.mrb[0].mxu0
  %v215 = vadd.f32 0.0, %v214
  %v216 = vpop.f32.mrb[0].mxu0
  %217 = vmatprep.mubr.bf16.mxu0 0
  %218 = vmatmul.mubr.bf16.gmra.mrb[0].mxu0 %v132
  %v219 = vpop.f32.mrb[0].mxu0
  %v220 = vadd.f32 0.0, %v219
  %v221 = vpop.f32.mrb[0].mxu0
  %v222 = vpop.f32.mrb[0].mxu0
  %v223 = vadd.f32 0.0, %v222
  %v224 = vpop.f32.mrb[0].mxu0
  %225 = vmatprep.mubr.bf16.mxu0 0
  %226 = vmatmul.mubr.bf16.gmra.mrb[0].mxu0 %v135
  %v227 = vpop.f32.mrb[0].mxu0
  %v228 = vadd.f32 0.0, %v227
  %v229 = vpop.f32.mrb[0].mxu0
  %v230 = vpop.f32.mrb[0].mxu0
  %v231 = vadd.f32 0.0, %v230
  %v232 = vpop.f32.mrb[0].mxu0
  %233 = vdwg.mxu0
  %v234 = vld [vmem:[#allocation2] sm:$0x1]
  %v235 = vadd.f32 %v172, %v175
  %v236 = vadd.f32 %v235, %v180
  %v237 = vadd.f32 %v236, %v183
  %v238 = vadd.f32 %v237, %v188
  %v239 = vadd.f32 %v238, %v191
  %v240 = vadd.f32 %v239, %v196
  %v241 = vadd.f32 %v240, %v199
  %v242 = vadd.f32 %v241, %v204
  %v243 = vadd.f32 %v242, %v207
  %v244 = vadd.f32 %v243, %v212
  %v245 = vadd.f32 %v244, %v215
  %v246 = vadd.f32 %v245, %v220
  %v247 = vadd.f32 %v246, %v223
  %v248 = vadd.f32 %v247, %v228
  %v249 = vadd.f32 %v248, %v231
  %v250 = vrot.slane %v249, 4
  %v251 = vadd.f32 %v249, %v250
  %v252 = vrot.slane %v251, 2
  %v253 = vadd.f32 %v251, %v252
  %v254 = vrot.slane %v253, 1
  %v255 = vadd.f32 %v253, %v254
  %v256 = vadd.f32 %v234, %v255
  %257 = vst [vmem:[#allocation2] sm:$0x1] %v256
  %v258 = vld [vmem:[#allocation3] sm:$0x1]
  %v259 = vmul.f32 %v172, %v172
  %v260 = vmul.f32 %v175, %v175
  %v261 = vmul.f32 %v180, %v180
  %v262 = vmul.f32 %v183, %v183
  %v263 = vmul.f32 %v188, %v188
  %v264 = vmul.f32 %v191, %v191
  %v265 = vmul.f32 %v196, %v196
  %v266 = vmul.f32 %v199, %v199
  %v267 = vmul.f32 %v204, %v204
  %v268 = vmul.f32 %v207, %v207
  %v269 = vmul.f32 %v212, %v212
  %v270 = vmul.f32 %v215, %v215
  %v271 = vmul.f32 %v220, %v220
  %v272 = vmul.f32 %v223, %v223
  %v273 = vmul.f32 %v228, %v228
  %v274 = vmul.f32 %v231, %v231
  %v275 = vadd.f32 %v259, %v260
  %v276 = vadd.f32 %v275, %v261
  %v277 = vadd.f32 %v276, %v262
  %v278 = vadd.f32 %v277, %v263
  %v279 = vadd.f32 %v278, %v264
  %v280 = vadd.f32 %v279, %v265
  %v281 = vadd.f32 %v280, %v266
  %v282 = vadd.f32 %v281, %v267
  %v283 = vadd.f32 %v282, %v268
  %v284 = vadd.f32 %v283, %v269
  %v285 = vadd.f32 %v284, %v270
  %v286 = vadd.f32 %v285, %v271
  %v287 = vadd.f32 %v286, %v272
  %v288 = vadd.f32 %v287, %v273
  %v289 = vadd.f32 %v288, %v274
  %v290 = vrot.slane %v289, 4
  %v291 = vadd.f32 %v289, %v290
  %v292 = vrot.slane %v291, 2
  %v293 = vadd.f32 %v291, %v292
  %v294 = vrot.slane %v293, 1
  %v295 = vadd.f32 %v293, %v294
  %v296 = vadd.f32 %v258, %v295
  %297 = vst [vmem:[#allocation3] sm:$0x1] %v296
  %s298 = smul.u32 0, 128
  %v299 = vpack.c.bf16 %v175, %v172
  %v300 = vpack.c.bf16 %v183, %v180
  %v301 = vpack.c.bf16 %v191, %v188
  %v302 = vpack.c.bf16 %v199, %v196
  %v303 = vpack.c.bf16 %v207, %v204
  %v304 = vpack.c.bf16 %v215, %v212
  %v305 = vpack.c.bf16 %v223, %v220
  %v306 = vpack.c.bf16 %v231, %v228
  %v315 = vunpack.c.l.b16 %v299
  %v316 = vunpack.c.h.b16 %v299
  %v317 = vunpack.c.l.b16 %v300
  %v318 = vunpack.c.h.b16 %v300
  %v319 = vunpack.c.l.b16 %v301
  %v320 = vunpack.c.h.b16 %v301
  %v321 = vunpack.c.l.b16 %v302
  %v322 = vunpack.c.h.b16 %v302
  %v323 = vunpack.c.l.b16 %v303
  %v324 = vunpack.c.h.b16 %v303
  %v325 = vunpack.c.l.b16 %v304
  %v326 = vunpack.c.h.b16 %v304
  %v327 = vunpack.c.l.b16 %v305
  %v328 = vunpack.c.h.b16 %v305
  %v329 = vunpack.c.l.b16 %v306
  %v330 = vunpack.c.h.b16 %v306
  %v331 = vpack.c.b16 %v315, %v315
  %v332 = vpack.c.b16 %v316, %v316
  %v333 = vpack.c.b16 %v317, %v317
  %v334 = vpack.c.b16 %v318, %v318
  %v335 = vpack.c.b16 %v319, %v319
  %v336 = vpack.c.b16 %v320, %v320
  %v337 = vpack.c.b16 %v321, %v321
  %v338 = vpack.c.b16 %v322, %v322
  %v339 = vpack.c.b16 %v323, %v323
  %v340 = vpack.c.b16 %v324, %v324
  %v341 = vpack.c.b16 %v325, %v325
  %v342 = vpack.c.b16 %v326, %v326
  %v343 = vpack.c.b16 %v327, %v327
  %v344 = vpack.c.b16 %v328, %v328
  %v345 = vpack.c.b16 %v329, %v329
  %v346 = vpack.c.b16 %v330, %v330
  %s363 = sshra.s32 %s298, 3
  %s364 = sand.u32 %s298, 7
  %s365 = smul.addr %s363, 4
  %s366 = scalar_lea.vmem %s4, %s365
  %367 = vst [vmem:[%s366] sm:$0xf] %v331
  %368 = vst [vmem:[%s366 + $0x4] sm:$0xf] %v332
  %369 = vst [vmem:[%s366 + $0x8] sm:$0xf] %v333
  %370 = vst [vmem:[%s366 + $0xc] sm:$0xf] %v334
  %371 = vst [vmem:[%s366 + $0x10] sm:$0xf] %v335
  %372 = vst [vmem:[%s366 + $0x14] sm:$0xf] %v336
  %373 = vst [vmem:[%s366 + $0x18] sm:$0xf] %v337
  %374 = vst [vmem:[%s366 + $0x1c] sm:$0xf] %v338
  %375 = vst [vmem:[%s366 + $0x20] sm:$0xf] %v339
  %376 = vst [vmem:[%s366 + $0x24] sm:$0xf] %v340
  %377 = vst [vmem:[%s366 + $0x28] sm:$0xf] %v341
  %378 = vst [vmem:[%s366 + $0x2c] sm:$0xf] %v342
  %379 = vst [vmem:[%s366 + $0x30] sm:$0xf] %v343
  %380 = vst [vmem:[%s366 + $0x34] sm:$0xf] %v344
  %381 = vst [vmem:[%s366 + $0x38] sm:$0xf] %v345
  %382 = vst [vmem:[%s366 + $0x3c] sm:$0xf] %v346
  // Predicated region
  $region22: #{discriminator_forward.5} parent=0 // pred_check
    %p383 = pneg %p18
  $region23: #{discriminator_forward.5} parent=0 // pred_check_branch
    %385 = sbr.rel (%p383) target = $region25
  $region24: #{discriminator_forward.5} parent=0 // pred_region
    %v386 = vld [vmem:[#allocation2] sm:$0x1]
    %v387 = vmul.f32 %v386, 0.0078125
    %v388 = vld [vmem:[#allocation3] sm:$0x1]
    %v389 = vmul.f32 %v388, 0.0078125
    %v390 = vmul.f32 %v387, %v387
    %v391 = vsub.f32 %v389, %v390
    %v392 = vmax.f32 %v391, 0.0
    %v393 = vld [vmem:[%s2] sm:$0x1]
    %v394 = vadd.f32 %v392, 1e-05
    %v395 = vrsqrt.pop %v394
    %v396 = vmul.f32 %v393, %v395
    %v397 = vld [vmem:[%s3] sm:$0x1]
    %v398 = vmul.f32 %v387, %v396
    %v399 = vsub.f32 %v397, %v398
    %v400 = vld [vmem:[%s4] sm:$0xf]
    %v401 = vld [vmem:[%s4 + $0x4] sm:$0xf]
    %v402 = vld [vmem:[%s4 + $0x8] sm:$0xf]
    %v403 = vld [vmem:[%s4 + $0xc] sm:$0xf]
    %v404 = vld [vmem:[%s4 + $0x10] sm:$0xf]
    %v405 = vld [vmem:[%s4 + $0x14] sm:$0xf]
    %v406 = vld [vmem:[%s4 + $0x18] sm:$0xf]
    %v407 = vld [vmem:[%s4 + $0x1c] sm:$0xf]
    %v408 = vld [vmem:[%s4 + $0x20] sm:$0xf]
    %v409 = vld [vmem:[%s4 + $0x24] sm:$0xf]
    %v410 = vld [vmem:[%s4 + $0x28] sm:$0xf]
    %v411 = vld [vmem:[%s4 + $0x2c] sm:$0xf]
    %v412 = vld [vmem:[%s4 + $0x30] sm:$0xf]
    %v413 = vld [vmem:[%s4 + $0x34] sm:$0xf]
    %v414 = vld [vmem:[%s4 + $0x38] sm:$0xf]
    %v415 = vld [vmem:[%s4 + $0x3c] sm:$0xf]
    %v416 = vunpack.c.l.bf16 %v400
    %v417 = vunpack.c.l.bf16 %v401
    %v418 = vunpack.c.l.bf16 %v402
    %v419 = vunpack.c.l.bf16 %v403
    %v420 = vunpack.c.l.bf16 %v404
    %v421 = vunpack.c.l.bf16 %v405
    %v422 = vunpack.c.l.bf16 %v406
    %v423 = vunpack.c.l.bf16 %v407
    %v424 = vunpack.c.l.bf16 %v408
    %v425 = vunpack.c.l.bf16 %v409
    %v426 = vunpack.c.l.bf16 %v410
    %v427 = vunpack.c.l.bf16 %v411
    %v428 = vunpack.c.l.bf16 %v412
    %v429 = vunpack.c.l.bf16 %v413
    %v430 = vunpack.c.l.bf16 %v414
    %v431 = vunpack.c.l.bf16 %v415
    %v433 = vlaneseq
    %v434 = vshrl.u32 %v433, 7
    %v435 = vsub.s32 0, %v434
    %v436 = vrot.slane %v396, %v435
    %v438 = vmul.f32 %v416, %v436
    %v439 = vmul.f32 %v417, %v436
    %v440 = vmul.f32 %v418, %v436
    %v441 = vmul.f32 %v419, %v436
    %v442 = vmul.f32 %v420, %v436
    %v443 = vmul.f32 %v421, %v436
    %v444 = vmul.f32 %v422, %v436
    %v445 = vmul.f32 %v423, %v436
    %v446 = vmul.f32 %v424, %v436
    %v447 = vmul.f32 %v425, %v436
    %v448 = vmul.f32 %v426, %v436
    %v449 = vmul.f32 %v427, %v436
    %v450 = vmul.f32 %v428, %v436
    %v451 = vmul.f32 %v429, %v436
    %v452 = vmul.f32 %v430, %v436
    %v453 = vmul.f32 %v431, %v436
    %v455 = vlaneseq
    %v456 = vshrl.u32 %v455, 7
    %v457 = vsub.s32 0, %v456
    %v458 = vrot.slane %v399, %v457
    %v460 = vadd.f32 %v438, %v458
    %v461 = vadd.f32 %v439, %v458
    %v462 = vadd.f32 %v440, %v458
    %v463 = vadd.f32 %v441, %v458
    %v464 = vadd.f32 %v442, %v458
    %v465 = vadd.f32 %v443, %v458
    %v466 = vadd.f32 %v444, %v458
    %v467 = vadd.f32 %v445, %v458
    %v468 = vadd.f32 %v446, %v458
    %v469 = vadd.f32 %v447, %v458
    %v470 = vadd.f32 %v448, %v458
    %v471 = vadd.f32 %v449, %v458
    %v472 = vadd.f32 %v450, %v458
    %v473 = vadd.f32 %v451, %v458
    %v474 = vadd.f32 %v452, %v458
    %v475 = vadd.f32 %v453, %v458
    %v476 = vmax.f32 %v460, 0.0
    %v477 = vmax.f32 %v461, 0.0
    %v478 = vmax.f32 %v462, 0.0
    %v479 = vmax.f32 %v463, 0.0
    %v480 = vmax.f32 %v464, 0.0
    %v481 = vmax.f32 %v465, 0.0
    %v482 = vmax.f32 %v466, 0.0
    %v483 = vmax.f32 %v467, 0.0
    %v484 = vmax.f32 %v468, 0.0
    %v485 = vmax.f32 %v469, 0.0
    %v486 = vmax.f32 %v470, 0.0
    %v487 = vmax.f32 %v471, 0.0
    %v488 = vmax.f32 %v472, 0.0
    %v489 = vmax.f32 %v473, 0.0
    %v490 = vmax.f32 %v474, 0.0
    %v491 = vmax.f32 %v475, 0.0
    %v492 = vpack.c.bf16 %v477, %v476
    %v493 = vpack.c.bf16 %v479, %v478
    %v494 = vpack.c.bf16 %v481, %v480
    %v495 = vpack.c.bf16 %v483, %v482
    %v496 = vpack.c.bf16 %v485, %v484
    %v497 = vpack.c.bf16 %v487, %v486
    %v498 = vpack.c.bf16 %v489, %v488
    %v499 = vpack.c.bf16 %v491, %v490
    %v508 = vunpack.c.l.b16 %v492
    %v509 = vunpack.c.h.b16 %v492
    %v510 = vunpack.c.l.b16 %v493
    %v511 = vunpack.c.h.b16 %v493
    %v512 = vunpack.c.l.b16 %v494
    %v513 = vunpack.c.h.b16 %v494
    %v514 = vunpack.c.l.b16 %v495
    %v515 = vunpack.c.h.b16 %v495
    %v516 = vunpack.c.l.b16 %v496
    %v517 = vunpack.c.h.b16 %v496
    %v518 = vunpack.c.l.b16 %v497
    %v519 = vunpack.c.h.b16 %v497
    %v520 = vunpack.c.l.b16 %v498
    %v521 = vunpack.c.h.b16 %v498
    %v522 = vunpack.c.l.b16 %v499
    %v523 = vunpack.c.h.b16 %v499
    %v524 = vpack.c.b16 %v508, %v508
    %v525 = vpack.c.b16 %v509, %v509
    %v526 = vpack.c.b16 %v510, %v510
    %v527 = vpack.c.b16 %v511, %v511
    %v528 = vpack.c.b16 %v512, %v512
    %v529 = vpack.c.b16 %v513, %v513
    %v530 = vpack.c.b16 %v514, %v514
    %v531 = vpack.c.b16 %v515, %v515
    %v532 = vpack.c.b16 %v516, %v516
    %v533 = vpack.c.b16 %v517, %v517
    %v534 = vpack.c.b16 %v518, %v518
    %v535 = vpack.c.b16 %v519, %v519
    %v536 = vpack.c.b16 %v520, %v520
    %v537 = vpack.c.b16 %v521, %v521
    %v538 = vpack.c.b16 %v522, %v522
    %v539 = vpack.c.b16 %v523, %v523
    %556 = vst [vmem:[%s4] sm:$0xf] %v524
    %557 = vst [vmem:[%s4 + $0x4] sm:$0xf] %v525
    %558 = vst [vmem:[%s4 + $0x8] sm:$0xf] %v526
    %559 = vst [vmem:[%s4 + $0xc] sm:$0xf] %v527
    %560 = vst [vmem:[%s4 + $0x10] sm:$0xf] %v528
    %561 = vst [vmem:[%s4 + $0x14] sm:$0xf] %v529
    %562 = vst [vmem:[%s4 + $0x18] sm:$0xf] %v530
    %563 = vst [vmem:[%s4 + $0x1c] sm:$0xf] %v531
    %564 = vst [vmem:[%s4 + $0x20] sm:$0xf] %v532
    %565 = vst [vmem:[%s4 + $0x24] sm:$0xf] %v533
    %566 = vst [vmem:[%s4 + $0x28] sm:$0xf] %v534
    %567 = vst [vmem:[%s4 + $0x2c] sm:$0xf] %v535
    %568 = vst [vmem:[%s4 + $0x30] sm:$0xf] %v536
    %569 = vst [vmem:[%s4 + $0x34] sm:$0xf] %v537
    %570 = vst [vmem:[%s4 + $0x38] sm:$0xf] %v538
    %571 = vst [vmem:[%s4 + $0x3c] sm:$0xf] %v539
  $region25: #{discriminator_forward.5} parent=0 // pred_fallthru
    _
  // Predicated region
  $region26: #{discriminator_forward.5} parent=0 // pred_check
    _
  $region27: #{discriminator_forward.5} parent=0 // pred_check_branch
    %573 = sbr.rel (0) target = $region29
  $region28: #{discriminator_forward.5} parent=0 // pred_region
    _
  $region29: #{discriminator_forward.5} parent=0 // pred_fallthru
    _
  // Predicated region
  $region30: #{discriminator_forward.5} parent=0 // pred_check
    _
  $region31: #{discriminator_forward.5} parent=0 // pred_check_branch
    %575 = sbr.rel (0) target = $region33
  $region32: #{discriminator_forward.5} parent=0 // pred_region
    _
  $region33: #{discriminator_forward.5} parent=0 // pred_fallthru
    _

// kernel: discriminator_forward.6
$region0: #{discriminator_forward.6}
  #allocation0 [shape = 'u32[]', space=smem, size = 0x4, offset = 0x4, fixed_abs, tag = 'smem constant byte address 0x4 - core index']
  #allocation1 [shape = 'u32[144,128]{1,0:T(1,128)}', space=vmem, size = 0x12000, scoped, tag = 'internal scratch']
  #allocation2 [shape = 'f32[1,128]{1,0:T(1,128)}', space=vmem, size = 0x200, scoped, tag = 'scratch operand']
  #allocation3 [shape = 'f32[1,128]{1,0:T(1,128)}', space=vmem, size = 0x200, scoped, tag = 'scratch operand']
  %s0 = inlined_call_operand.vmem [shape: bf16[32,128], index: 0, kind: input, shape index: {}]
  %s1 = inlined_call_operand.vmem [shape: bf16[128,128], index: 1, kind: input, shape index: {}]
  %s2 = inlined_call_operand.vmem [shape: f32[1,128], index: 2, kind: input, shape index: {}]
  %s3 = inlined_call_operand.vmem [shape: f32[1,128], index: 3, kind: input, shape index: {}]
  %s4 = inlined_call_operand.vmem [shape: bf16[32,128], index: 4, kind: output, shape index: {}]
  %s5 = sld [smem:[#allocation0]]
  $region34: #{discriminator_forward.6} parent=0
    _
  %s7 = ssub.s32 1, %s5
  %s8 = scalar_select 0, %s7, %s5
  // Predicated region
  $region2: #{discriminator_forward.6} parent=0 // pred_check
    _
  $region3: #{discriminator_forward.6} parent=0 // pred_check_branch
    %10 = sbr.rel (0) target = $region5
  $region4: #{discriminator_forward.6} parent=0 // pred_region
    _
  $region5: #{discriminator_forward.6} parent=0 // pred_fallthru
    _
  // Predicated region
  $region6: #{discriminator_forward.6} parent=0 // pred_check
    _
  $region7: #{discriminator_forward.6} parent=0 // pred_check_branch
    %12 = sbr.rel (0) target = $region9
  $region8: #{discriminator_forward.6} parent=0 // pred_region
    _
  $region9: #{discriminator_forward.6} parent=0 // pred_fallthru
    _
  // Predicated region
  $region10: #{discriminator_forward.6} parent=0 // pred_check
    _
  $region11: #{discriminator_forward.6} parent=0 // pred_check_branch
    %14 = sbr.rel (0) target = $region13
  $region12: #{discriminator_forward.6} parent=0 // pred_region
    _
  $region13: #{discriminator_forward.6} parent=0 // pred_fallthru
    _
  // Predicated region
  $region14: #{discriminator_forward.6} parent=0 // pred_check
    _
  $region15: #{discriminator_forward.6} parent=0 // pred_check_branch
    %16 = sbr.rel (0) target = $region17
  $region16: #{discriminator_forward.6} parent=0 // pred_region
    _
  $region17: #{discriminator_forward.6} parent=0 // pred_fallthru
    _
  %p18 = scmp.eq.s32.totalorder 0, 0
  // Predicated region
  $region18: #{discriminator_forward.6} parent=0 // pred_check
    %p19 = pneg %p18
  $region19: #{discriminator_forward.6} parent=0 // pred_check_branch
    %21 = sbr.rel (%p19) target = $region21
  $region20: #{discriminator_forward.6} parent=0 // pred_region
    %22 = vst [vmem:[#allocation2] sm:$0x1] 0.0
    %23 = vst [vmem:[#allocation3] sm:$0x1] 0.0
  $region21: #{discriminator_forward.6} parent=0 // pred_fallthru
    _
  %v24 = vld [vmem:[%s0] sm:$0xf]
  %v25 = vld [vmem:[%s0 + $0x4] sm:$0xf]
  %v26 = vld [vmem:[%s0 + $0x8] sm:$0xf]
  %v27 = vld [vmem:[%s0 + $0xc] sm:$0xf]
  %v28 = vld [vmem:[%s1] sm:$0xf]
  %v29 = vld [vmem:[%s1 + $0x4] sm:$0xf]
  %v30 = vld [vmem:[%s1 + $0x8] sm:$0xf]
  %v31 = vld [vmem:[%s1 + $0xc] sm:$0xf]
  %v32 = vld [vmem:[%s1 + $0x10] sm:$0xf]
  %v33 = vld [vmem:[%s1 + $0x14] sm:$0xf]
  %v34 = vld [vmem:[%s1 + $0x18] sm:$0xf]
  %v35 = vld [vmem:[%s1 + $0x1c] sm:$0xf]
  %v36 = vld [vmem:[%s1 + $0x20] sm:$0xf]
  %v37 = vld [vmem:[%s1 + $0x24] sm:$0xf]
  %v38 = vld [vmem:[%s1 + $0x28] sm:$0xf]
  %v39 = vld [vmem:[%s1 + $0x2c] sm:$0xf]
  %v40 = vld [vmem:[%s1 + $0x30] sm:$0xf]
  %v41 = vld [vmem:[%s1 + $0x34] sm:$0xf]
  %v42 = vld [vmem:[%s1 + $0x38] sm:$0xf]
  %v43 = vld [vmem:[%s1 + $0x3c] sm:$0xf]
  %v48 = vunpack.c.l.b16 %v24
  %v49 = vunpack.c.l.b16 %v25
  %v50 = vunpack.c.l.b16 %v26
  %v51 = vunpack.c.l.b16 %v27
  %v52 = vpack.c.b16 %v49, %v48
  %v53 = vpack.c.b16 %v51, %v50
  %v72 = vunpack.c.l.b16 %v28
  %v73 = vunpack.c.l.b16 %v29
  %v74 = vunpack.c.l.b16 %v30
  %v75 = vunpack.c.l.b16 %v31
  %v76 = vunpack.c.l.b16 %v32
  %v77 = vunpack.c.l.b16 %v33
  %v78 = vunpack.c.l.b16 %v34
  %v79 = vunpack.c.l.b16 %v35
  %v80 = vunpack.c.l.b16 %v36
  %v81 = vunpack.c.l.b16 %v37
  %v82 = vunpack.c.l.b16 %v38
  %v83 = vunpack.c.l.b16 %v39
  %v84 = vunpack.c.l.b16 %v40
  %v85 = vunpack.c.l.b16 %v41
  %v86 = vunpack.c.l.b16 %v42
  %v87 = vunpack.c.l.b16 %v43
  %v88 = vpack.c.b16 %v73, %v72
  %v89 = vpack.c.b16 %v75, %v74
  %v90 = vpack.c.b16 %v77, %v76
  %v91 = vpack.c.b16 %v79, %v78
  %v92 = vpack.c.b16 %v81, %v80
  %v93 = vpack.c.b16 %v83, %v82
  %v94 = vpack.c.b16 %v85, %v84
  %v95 = vpack.c.b16 %v87, %v86
  %104 = vmatprep.subr.bf16.mxu0 0
  %105 = vmatpush1.bf16.msra.mxu0 %v88
  %106 = vmatprep.subr.bf16.mxu0 0
  %107 = vmatpush1.bf16.msra.mxu0 %v89
  %108 = vmatprep.subr.bf16.mxu0 0
  %109 = vmatpush1.bf16.msra.mxu0 %v90
  %110 = vmatprep.subr.bf16.mxu0 0
  %111 = vmatpush1.bf16.msra.mxu0 %v91
  %112 = vmatprep.subr.bf16.mxu0 0
  %113 = vmatpush1.bf16.msra.mxu0 %v92
  %114 = vmatprep.subr.bf16.mxu0 0
  %115 = vmatpush1.bf16.msra.mxu0 %v93
  %116 = vmatprep.subr.bf16.mxu0 0
  %117 = vmatpush1.bf16.msra.mxu0 %v94
  %118 = vmatprep.subr.bf16.mxu0 0
  %119 = vmatpush1.bf16.msra.mxu0 %v95
  %120 = vmatprep.subr.bf16.mxu0 0
  %121 = vmatpush1.bf16.msra.mxu0 0
  %122 = vmatprep.subr.bf16.mxu0 0
  %123 = vmatpush1.bf16.msra.mxu0 0
  %124 = vmatprep.subr.bf16.mxu0 0
  %125 = vmatpush1.bf16.msra.mxu0 0
  %126 = vmatprep.subr.bf16.mxu0 0
  %127 = vmatpush1.bf16.msra.mxu0 0
  %128 = vmatprep.subr.bf16.mxu0 0
  %129 = vmatpush1.bf16.msra.mxu0 0
  %130 = vmatprep.subr.bf16.mxu0 0
  %131 = vmatpush1.bf16.msra.mxu0 0
  %132 = vmatprep.subr.bf16.mxu0 0
  %133 = vmatpush1.bf16.msra.mxu0 0
  %134 = vmatprep.subr.bf16.mxu0 0
  %135 = vmatpush1.bf16.msra.mxu0 0
  %136 = vmatprep.mubr.bf16.mxu0 0
  %137 = vmatmul.mubr.bf16.gmra.mrb[0].mxu0 %v52
  %v138 = vpop.f32.mrb[0].mxu0
  %v139 = vadd.f32 0.0, %v138
  %v140 = vpop.f32.mrb[0].mxu0
  %v141 = vpop.f32.mrb[0].mxu0
  %v142 = vadd.f32 0.0, %v141
  %v143 = vpop.f32.mrb[0].mxu0
  %144 = vmatprep.mubr.bf16.mxu0 0
  %145 = vmatmul.mubr.bf16.gmra.mrb[0].mxu0 %v53
  %v146 = vpop.f32.mrb[0].mxu0
  %v147 = vadd.f32 0.0, %v146
  %v148 = vpop.f32.mrb[0].mxu0
  %v149 = vpop.f32.mrb[0].mxu0
  %v150 = vadd.f32 0.0, %v149
  %v151 = vpop.f32.mrb[0].mxu0
  %152 = vdwg.mxu0
  %v153 = vld [vmem:[#allocation2] sm:$0x1]
  %v154 = vadd.f32 %v139, %v142
  %v155 = vadd.f32 %v154, %v147
  %v156 = vadd.f32 %v155, %v150
  %v157 = vrot.slane %v156, 4
  %v158 = vadd.f32 %v156, %v157
  %v159 = vrot.slane %v158, 2
  %v160 = vadd.f32 %v158, %v159
  %v161 = vrot.slane %v160, 1
  %v162 = vadd.f32 %v160, %v161
  %v163 = vadd.f32 %v153, %v162
  %164 = vst [vmem:[#allocation2] sm:$0x1] %v163
  %v165 = vld [vmem:[#allocation3] sm:$0x1]
  %v166 = vmul.f32 %v139, %v139
  %v167 = vmul.f32 %v142, %v142
  %v168 = vmul.f32 %v147, %v147
  %v169 = vmul.f32 %v150, %v150
  %v170 = vadd.f32 %v166, %v167
  %v171 = vadd.f32 %v170, %v168
  %v172 = vadd.f32 %v171, %v169
  %v173 = vrot.slane %v172, 4
  %v174 = vadd.f32 %v172, %v173
  %v175 = vrot.slane %v174, 2
  %v176 = vadd.f32 %v174, %v175
  %v177 = vrot.slane %v176, 1
  %v178 = vadd.f32 %v176, %v177
  %v179 = vadd.f32 %v165, %v178
  %180 = vst [vmem:[#allocation3] sm:$0x1] %v179
  %s181 = smul.u32 0, 32
  %v182 = vpack.c.bf16 %v142, %v139
  %v183 = vpack.c.bf16 %v150, %v147
  %v186 = vunpack.c.l.b16 %v182
  %v187 = vunpack.c.h.b16 %v182
  %v188 = vunpack.c.l.b16 %v183
  %v189 = vunpack.c.h.b16 %v183
  %v190 = vpack.c.b16 %v186, %v186
  %v191 = vpack.c.b16 %v187, %v187
  %v192 = vpack.c.b16 %v188, %v188
  %v193 = vpack.c.b16 %v189, %v189
  %s198 = sshra.s32 %s181, 3
  %s199 = sand.u32 %s181, 7
  %s200 = smul.addr %s198, 4
  %s201 = scalar_lea.vmem %s4, %s200
  %202 = vst [vmem:[%s201] sm:$0xf] %v190
  %203 = vst [vmem:[%s201 + $0x4] sm:$0xf] %v191
  %204 = vst [vmem:[%s201 + $0x8] sm:$0xf] %v192
  %205 = vst [vmem:[%s201 + $0xc] sm:$0xf] %v193
  // Predicated region
  $region22: #{discriminator_forward.6} parent=0 // pred_check
    %p206 = pneg %p18
  $region23: #{discriminator_forward.6} parent=0 // pred_check_branch
    %208 = sbr.rel (%p206) target = $region25
  $region24: #{discriminator_forward.6} parent=0 // pred_region
    %v209 = vld [vmem:[#allocation2] sm:$0x1]
    %v210 = vmul.f32 %v209, 0.03125
    %v211 = vld [vmem:[#allocation3] sm:$0x1]
    %v212 = vmul.f32 %v211, 0.03125
    %v213 = vmul.f32 %v210, %v210
    %v214 = vsub.f32 %v212, %v213
    %v215 = vmax.f32 %v214, 0.0
    %v216 = vld [vmem:[%s2] sm:$0x1]
    %v217 = vadd.f32 %v215, 1e-05
    %v218 = vrsqrt.pop %v217
    %v219 = vmul.f32 %v216, %v218
    %v220 = vld [vmem:[%s3] sm:$0x1]
    %v221 = vmul.f32 %v210, %v219
    %v222 = vsub.f32 %v220, %v221
    %v223 = vld [vmem:[%s4] sm:$0xf]
    %v224 = vld [vmem:[%s4 + $0x4] sm:$0xf]
    %v225 = vld [vmem:[%s4 + $0x8] sm:$0xf]
    %v226 = vld [vmem:[%s4 + $0xc] sm:$0xf]
    %v227 = vunpack.c.l.bf16 %v223
    %v228 = vunpack.c.l.bf16 %v224
    %v229 = vunpack.c.l.bf16 %v225
    %v230 = vunpack.c.l.bf16 %v226
    %v232 = vlaneseq
    %v233 = vshrl.u32 %v232, 7
    %v234 = vsub.s32 0, %v233
    %v235 = vrot.slane %v219, %v234
    %v237 = vmul.f32 %v227, %v235
    %v238 = vmul.f32 %v228, %v235
    %v239 = vmul.f32 %v229, %v235
    %v240 = vmul.f32 %v230, %v235
    %v242 = vlaneseq
    %v243 = vshrl.u32 %v242, 7
    %v244 = vsub.s32 0, %v243
    %v245 = vrot.slane %v222, %v244
    %v247 = vadd.f32 %v237, %v245
    %v248 = vadd.f32 %v238, %v245
    %v249 = vadd.f32 %v239, %v245
    %v250 = vadd.f32 %v240, %v245
    %v251 = vmax.f32 %v247, 0.0
    %v252 = vmax.f32 %v248, 0.0
    %v253 = vmax.f32 %v249, 0.0
    %v254 = vmax.f32 %v250, 0.0
    %v255 = vpack.c.bf16 %v252, %v251
    %v256 = vpack.c.bf16 %v254, %v253
    %v259 = vunpack.c.l.b16 %v255
    %v260 = vunpack.c.h.b16 %v255
    %v261 = vunpack.c.l.b16 %v256
    %v262 = vunpack.c.h.b16 %v256
    %v263 = vpack.c.b16 %v259, %v259
    %v264 = vpack.c.b16 %v260, %v260
    %v265 = vpack.c.b16 %v261, %v261
    %v266 = vpack.c.b16 %v262, %v262
    %271 = vst [vmem:[%s4] sm:$0xf] %v263
    %272 = vst [vmem:[%s4 + $0x4] sm:$0xf] %v264
    %273 = vst [vmem:[%s4 + $0x8] sm:$0xf] %v265
    %274 = vst [vmem:[%s4 + $0xc] sm:$0xf] %v266
  $region25: #{discriminator_forward.6} parent=0 // pred_fallthru
    _
  // Predicated region
  $region26: #{discriminator_forward.6} parent=0 // pred_check
    _
  $region27: #{discriminator_forward.6} parent=0 // pred_check_branch
    %276 = sbr.rel (0) target = $region29
  $region28: #{discriminator_forward.6} parent=0 // pred_region
    _
  $region29: #{discriminator_forward.6} parent=0 // pred_fallthru
    _
  // Predicated region
  $region30: #{discriminator_forward.6} parent=0 // pred_check
    _
  $region31: #{discriminator_forward.6} parent=0 // pred_check_branch
    %278 = sbr.rel (0) target = $region33
  $region32: #{discriminator_forward.6} parent=0 // pred_region
    _
  $region33: #{discriminator_forward.6} parent=0 // pred_fallthru
    _

// kernel: discriminator_forward.7
$region0: #{discriminator_forward.7}
  #allocation0 [shape = 'u32[]', space=smem, size = 0x4, offset = 0x4, fixed_abs, tag = 'smem constant byte address 0x4 - core index']
  #allocation1 [shape = 'u32[144,128]{1,0:T(1,128)}', space=vmem, size = 0x12000, scoped, tag = 'internal scratch']
  #allocation2 [shape = 'f32[1,1]{1,0:T(1,128)S(1)}', space=vmem, size = 0x200, scoped, tag = 'scoped memory for discriminator_forward.7']
  %s0 = inlined_call_operand.vmem [shape: bf16[2,8], index: 0, kind: input, shape index: {}]
  %s1 = inlined_call_operand.vmem [shape: bf16[8,8], index: 1, kind: input, shape index: {}]
  %s2 = inlined_call_operand.vmem [shape: f32[1,8], index: 2, kind: input, shape index: {}]
  %s3 = inlined_call_operand.vmem [shape: bf16[32,16], index: 3, kind: input, shape index: {}]
  %s4 = inlined_call_operand.vmem [shape: bf16[16,16], index: 4, kind: input, shape index: {}]
  %s5 = inlined_call_operand.vmem [shape: bf16[8,16], index: 5, kind: input, shape index: {}]
  %s6 = inlined_call_operand.vmem [shape: bf16[16,16], index: 6, kind: input, shape index: {}]
  %s7 = inlined_call_operand.<no memory space> [shape: f32[1,1], index: 7, kind: input, shape index: {}]
  %s8 = inlined_call_operand.vmem [shape: f32[2,1], index: 8, kind: output, shape index: {}]
  %s9 = sld [smem:[#allocation0]]
  $region42: #{discriminator_forward.7} parent=0
    _
  %s11 = ssub.s32 1, %s9
  %s12 = scalar_select 0, %s11, %s9
  %v13 = vstv %s7
  %14 = vst [vmem:[#allocation2] sm:$0x1] %v13
  // Predicated region
  $region2: #{discriminator_forward.7} parent=0 // pred_check
    _
  $region3: #{discriminator_forward.7} parent=0 // pred_check_branch
    %16 = sbr.rel (0) target = $region5
  $region4: #{discriminator_forward.7} parent=0 // pred_region
    _
  $region5: #{discriminator_forward.7} parent=0 // pred_fallthru
    _
  // Predicated region
  $region6: #{discriminator_forward.7} parent=0 // pred_check
    _
  $region7: #{discriminator_forward.7} parent=0 // pred_check_branch
    %18 = sbr.rel (0) target = $region9
  $region8: #{discriminator_forward.7} parent=0 // pred_region
    _
  $region9: #{discriminator_forward.7} parent=0 // pred_fallthru
    _
  // Predicated region
  $region10: #{discriminator_forward.7} parent=0 // pred_check
    _
  $region11: #{discriminator_forward.7} parent=0 // pred_check_branch
    %20 = sbr.rel (0) target = $region13
  $region12: #{discriminator_forward.7} parent=0 // pred_region
    _
  $region13: #{discriminator_forward.7} parent=0 // pred_fallthru
    _
  // Predicated region
  $region14: #{discriminator_forward.7} parent=0 // pred_check
    _
  $region15: #{discriminator_forward.7} parent=0 // pred_check_branch
    %22 = sbr.rel (0) target = $region17
  $region16: #{discriminator_forward.7} parent=0 // pred_region
    _
  $region17: #{discriminator_forward.7} parent=0 // pred_fallthru
    _
  // Predicated region
  $region18: #{discriminator_forward.7} parent=0 // pred_check
    _
  $region19: #{discriminator_forward.7} parent=0 // pred_check_branch
    %24 = sbr.rel (0) target = $region21
  $region20: #{discriminator_forward.7} parent=0 // pred_region
    _
  $region21: #{discriminator_forward.7} parent=0 // pred_fallthru
    _
  // Predicated region
  $region22: #{discriminator_forward.7} parent=0 // pred_check
    _
  $region23: #{discriminator_forward.7} parent=0 // pred_check_branch
    %26 = sbr.rel (0) target = $region25
  $region24: #{discriminator_forward.7} parent=0 // pred_region
    _
  $region25: #{discriminator_forward.7} parent=0 // pred_fallthru
    _
  // Predicated region
  $region26: #{discriminator_forward.7} parent=0 // pred_check
    _
  $region27: #{discriminator_forward.7} parent=0 // pred_check_branch
    %28 = sbr.rel (0) target = $region29
  $region28: #{discriminator_forward.7} parent=0 // pred_region
    _
  $region29: #{discriminator_forward.7} parent=0 // pred_fallthru
    _
  // Predicated region
  $region30: #{discriminator_forward.7} parent=0 // pred_check
    _
  $region31: #{discriminator_forward.7} parent=0 // pred_check_branch
    %30 = sbr.rel (0) target = $region33
  $region32: #{discriminator_forward.7} parent=0 // pred_region
    _
  $region33: #{discriminator_forward.7} parent=0 // pred_fallthru
    _
  %v32 = vld [vmem:[%s0] sm:$0x1]
  %v33 = vld [vmem:[%s1] sm:$0xf]
  %v34 = vld [vmem:[%s2] sm:$0x1]
  %v36 = vlaneseq
  %v37 = vshrl.u32 %v36, 7
  %v38 = vsub.s32 0, %v37
  %v39 = vrot.slane %v34, %v38
  %vm41 = vcmask 64512
  %v43 = vsel %vm41, %v32, 0
  %vm45 = vcmask 1043456
  %v47 = vsel %vm45, %v33, 0
  %49 = vmatprep.subr.bf16.mxu0 0
  %50 = vmatpush1.bf16.msra.mxu0 %v47
  %51 = vmatprep.subr.bf16.mxu0 0
  %52 = vmatpush1.bf16.msra.mxu0 0
  %53 = vmatprep.subr.bf16.mxu0 0
  %54 = vmatpush1.bf16.msra.mxu0 0
  %55 = vmatprep.subr.bf16.mxu0 0
  %56 = vmatpush1.bf16.msra.mxu0 0
  %57 = vmatprep.subr.bf16.mxu0 0
  %58 = vmatpush1.bf16.msra.mxu0 0
  %59 = vmatprep.subr.bf16.mxu0 0
  %60 = vmatpush1.bf16.msra.mxu0 0
  %61 = vmatprep.subr.bf16.mxu0 0
  %62 = vmatpush1.bf16.msra.mxu0 0
  %63 = vmatprep.subr.bf16.mxu0 0
  %64 = vmatpush1.bf16.msra.mxu0 0
  %65 = vmatprep.subr.bf16.mxu0 0
  %66 = vmatpush1.bf16.msra.mxu0 0
  %67 = vmatprep.subr.bf16.mxu0 0
  %68 = vmatpush1.bf16.msra.mxu0 0
  %69 = vmatprep.subr.bf16.mxu0 0
  %70 = vmatpush1.bf16.msra.mxu0 0
  %71 = vmatprep.subr.bf16.mxu0 0
  %72 = vmatpush1.bf16.msra.mxu0 0
  %73 = vmatprep.subr.bf16.mxu0 0
  %74 = vmatpush1.bf16.msra.mxu0 0
  %75 = vmatprep.subr.bf16.mxu0 0
  %76 = vmatpush1.bf16.msra.mxu0 0
  %77 = vmatprep.subr.bf16.mxu0 0
  %78 = vmatpush1.bf16.msra.mxu0 0
  %79 = vmatprep.subr.bf16.mxu0 0
  %80 = vmatpush1.bf16.msra.mxu0 0
  %81 = vmatprep.mubr.bf16.mxu0 0
  %82 = vmatmul.mubr.bf16.gmra.mrb[0].mxu0 %v43
  %v83 = vpop.f32.mrb[0].mxu0
  %v84 = vadd.f32 %v39, %v83
  %v85 = vpop.f32.mrb[0].mxu0
  %v86 = vpop.f32.mrb[0].mxu0
  %v87 = vpop.f32.mrb[0].mxu0
  %88 = vdwg.mxu0
  %v89 = vmax.f32 %v84, 0.0
  %v90 = vpack.c.bf16 %v89, %v89
  %v91 = vld [vmem:[%s5] sm:$0xf]
  %v93 = vsel %vm41, %v90, 0
  %v96 = vsel %vm45, %v91, 0
  %98 = vmatprep.subr.bf16.mxu0 0
  %99 = vmatpush1.bf16.msra.mxu0 %v96
  %100 = vmatprep.subr.bf16.mxu0 0
  %101 = vmatpush1.bf16.msra.mxu0 0
  %102 = vmatprep.subr.bf16.mxu0 0
  %103 = vmatpush1.bf16.msra.mxu0 0
  %104 = vmatprep.subr.bf16.mxu0 0
  %105 = vmatpush1.bf16.msra.mxu0 0
  %106 = vmatprep.subr.bf16.mxu0 0
  %107 = vmatpush1.bf16.msra.mxu0 0
  %108 = vmatprep.subr.bf16.mxu0 0
  %109 = vmatpush1.bf16.msra.mxu0 0
  %110 = vmatprep.subr.bf16.mxu0 0
  %111 = vmatpush1.bf16.msra.mxu0 0
  %112 = vmatprep.subr.bf16.mxu0 0
  %113 = vmatpush1.bf16.msra.mxu0 0
  %114 = vmatprep.subr.bf16.mxu0 0
  %115 = vmatpush1.bf16.msra.mxu0 0
  %116 = vmatprep.subr.bf16.mxu0 0
  %117 = vmatpush1.bf16.msra.mxu0 0
  %118 = vmatprep.subr.bf16.mxu0 0
  %119 = vmatpush1.bf16.msra.mxu0 0
  %120 = vmatprep.subr.bf16.mxu0 0
  %121 = vmatpush1.bf16.msra.mxu0 0
  %122 = vmatprep.subr.bf16.mxu0 0
  %123 = vmatpush1.bf16.msra.mxu0 0
  %124 = vmatprep.subr.bf16.mxu0 0
  %125 = vmatpush1.bf16.msra.mxu0 0
  %126 = vmatprep.subr.bf16.mxu0 0
  %127 = vmatpush1.bf16.msra.mxu0 0
  %128 = vmatprep.subr.bf16.mxu0 0
  %129 = vmatpush1.bf16.msra.mxu0 0
  %130 = vmatprep.mubr.bf16.mxu0 0
  %131 = vmatmul.mubr.bf16.gmra.mrb[0].mxu0 %v93
  %v132 = vpop.f32.mrb[0].mxu0
  %v133 = vadd.f32 0.0, %v132
  %v134 = vpop.f32.mrb[0].mxu0
  %v135 = vpop.f32.mrb[0].mxu0
  %v136 = vpop.f32.mrb[0].mxu0
  %137 = vdwg.mxu0
  %v138 = vld [vmem:[%s3] sm:$0xf]
  %v139 = vld [vmem:[%s3 + $0x4] sm:$0xf]
  %v140 = vld [vmem:[%s3 + $0x8] sm:$0xf]
  %v141 = vld [vmem:[%s3 + $0xc] sm:$0xf]
  %v142 = vld [vmem:[%s4] sm:$0xf]
  %v143 = vld [vmem:[%s4 + $0x4] sm:$0xf]
  %v148 = vunpack.c.l.b16 %v138
  %v149 = vunpack.c.l.b16 %v139
  %v150 = vunpack.c.l.b16 %v140
  %v151 = vunpack.c.l.b16 %v141
  %v152 = vpack.c.b16 %v149, %v148
  %v153 = vpack.c.b16 %v151, %v150
  %v156 = vunpack.c.l.b16 %v142
  %v157 = vunpack.c.l.b16 %v143
  %v158 = vpack.c.b16 %v157, %v156
  %vm160 = vcmask 130048
  %v162 = vsel %vm160, %v152, 0
  %v165 = vsel %vm160, %v153, 0
  %167 = vmatprep.subr.bf16.mxu0 0
  %168 = vmatpush1.bf16.msra.mxu0 %v158
  %169 = vmatprep.subr.bf16.mxu0 0
  %170 = vmatpush1.bf16.msra.mxu0 0
  %171 = vmatprep.subr.bf16.mxu0 0
  %172 = vmatpush1.bf16.msra.mxu0 0
  %173 = vmatprep.subr.bf16.mxu0 0
  %174 = vmatpush1.bf16.msra.mxu0 0
  %175 = vmatprep.subr.bf16.mxu0 0
  %176 = vmatpush1.bf16.msra.mxu0 0
  %177 = vmatprep.subr.bf16.mxu0 0
  %178 = vmatpush1.bf16.msra.mxu0 0
  %179 = vmatprep.subr.bf16.mxu0 0
  %180 = vmatpush1.bf16.msra.mxu0 0
  %181 = vmatprep.subr.bf16.mxu0 0
  %182 = vmatpush1.bf16.msra.mxu0 0
  %183 = vmatprep.subr.bf16.mxu0 0
  %184 = vmatpush1.bf16.msra.mxu0 0
  %185 = vmatprep.subr.bf16.mxu0 0
  %186 = vmatpush1.bf16.msra.mxu0 0
  %187 = vmatprep.subr.bf16.mxu0 0
  %188 = vmatpush1.bf16.msra.mxu0 0
  %189 = vmatprep.subr.bf16.mxu0 0
  %190 = vmatpush1.bf16.msra.mxu0 0
  %191 = vmatprep.subr.bf16.mxu0 0
  %192 = vmatpush1.bf16.msra.mxu0 0
  %193 = vmatprep.subr.bf16.mxu0 0
  %194 = vmatpush1.bf16.msra.mxu0 0
  %195 = vmatprep.subr.bf16.mxu0 0
  %196 = vmatpush1.bf16.msra.mxu0 0
  %197 = vmatprep.subr.bf16.mxu0 0
  %198 = vmatpush1.bf16.msra.mxu0 0
  %199 = vmatprep.mubr.bf16.mxu0 0
  %200 = vmatmul.mubr.bf16.gmra.mrb[0].mxu0 %v162
  %v201 = vpop.f32.mrb[0].mxu0
  %v202 = vadd.f32 0.0, %v201
  %v203 = vpop.f32.mrb[0].mxu0
  %v204 = vpop.f32.mrb[0].mxu0
  %v205 = vadd.f32 0.0, %v204
  %v206 = vpop.f32.mrb[0].mxu0
  %207 = vmatprep.mubr.bf16.mxu0 0
  %208 = vmatmul.mubr.bf16.gmra.mrb[0].mxu0 %v165
  %v209 = vpop.f32.mrb[0].mxu0
  %v210 = vadd.f32 0.0, %v209
  %v211 = vpop.f32.mrb[0].mxu0
  %v212 = vpop.f32.mrb[0].mxu0
  %v213 = vadd.f32 0.0, %v212
  %v214 = vpop.f32.mrb[0].mxu0
  %215 = vdwg.mxu0
  %v216 = vld [vmem:[%s6] sm:$0xf]
  %v217 = vld [vmem:[%s6 + $0x4] sm:$0xf]
  %v218 = vunpack.c.l.bf16 %v216
  %v219 = vunpack.c.l.bf16 %v217
  %v220 = vlaneseq
  %v221 = vshrl.u32 %v220, 7
  %v222 = vsub.s32 0, %v221
  %v223 = vrot.slane %v133, %v222
  %v224 = vadd.f32 %v202, %v223
  %v225 = vadd.f32 %v205, %v223
  %v226 = vmax.f32 %v224, 0.0
  %v227 = vmax.f32 %v225, 0.0
  %v228 = vmul.f32 %v226, %v218
  %v229 = vmul.f32 %v227, %v219
  %v230 = vsel %vm160, %v228, 0.0
  %231 = vadd.xlane.f32.xlu0 %v230
  %v232 = vpop.xlane.xlu0 %231
  %v233 = vsel %vm160, %v229, 0.0
  %234 = vadd.xlane.f32.xlu0 %v233
  %v235 = vpop.xlane.xlu0 %234
  %v236 = vadd.f32 %v232, %v235
  %v237 = vrot.slane %v236, 4
  %v238 = vadd.f32 %v236, %v237
  %v239 = vrot.slane %v238, 2
  %v240 = vadd.f32 %v238, %v239
  %v241 = vrot.slane %v240, 1
  %v242 = vadd.f32 %v240, %v241
  %v243 = vld [vmem:[#allocation2] sm:$0x1]
  %v244 = vadd.f32 %v242, %v243
  %v245 = vsub.f32 0.0, %v244
  %v246 = vmul.f32 %v245, 1.442695
  %v247 = vpow.pop %v246
  %v248 = vadd.f32 %v247, 1.0
  %v249 = vrcp.pop %v248
  %v250 = vmul.f32 1.0, %v249
  %vm251 = vcmask 0
  %252 = vst.msk [vmem:[%s8] sm:$0x1] %vm251, %v250
  %v253 = vlaneseq
  %v254 = vshrl.u32 %v253, 7
  %v255 = vsub.s32 1, %v254
  %v256 = vrot.slane %v133, %v255
  %v257 = vadd.f32 %v210, %v256
  %v258 = vadd.f32 %v213, %v256
  %v259 = vmax.f32 %v257, 0.0
  %v260 = vmax.f32 %v258, 0.0
  %v261 = vmul.f32 %v259, %v218
  %v262 = vmul.f32 %v260, %v219
  %v263 = vsel %vm160, %v261, 0.0
  %264 = vadd.xlane.f32.xlu0 %v263
  %v265 = vpop.xlane.xlu0 %264
  %v266 = vsel %vm160, %v262, 0.0
  %267 = vadd.xlane.f32.xlu0 %v266
  %v268 = vpop.xlane.xlu0 %267
  %v269 = vadd.f32 %v265, %v268
  %v270 = vrot.slane %v269, 4
  %v271 = vadd.f32 %v269, %v270
  %v272 = vrot.slane %v271, 2
  %v273 = vadd.f32 %v271, %v272
  %v274 = vrot.slane %v273, 1
  %v275 = vadd.f32 %v273, %v274
  %v276 = vld [vmem:[#allocation2] sm:$0x1]
  %v277 = vadd.f32 %v275, %v276
  %v278 = vsub.f32 0.0, %v277
  %v279 = vmul.f32 %v278, 1.442695
  %v280 = vpow.pop %v279
  %v281 = vadd.f32 %v280, 1.0
  %v282 = vrcp.pop %v281
  %v283 = vmul.f32 1.0, %v282
  %284 = vst.msk [vmem:[%s8 + $0x1] sm:$0x1] %vm251, %v283
  // Predicated region
  $region34: #{discriminator_forward.7} parent=0 // pred_check
    _
  $region35: #{discriminator_forward.7} parent=0 // pred_check_branch
    %286 = sbr.rel (0) target = $region37
  $region36: #{discriminator_forward.7} parent=0 // pred_region
    _
  $region37: #{discriminator_forward.7} parent=0 // pred_fallthru
    _
  // Predicated region
  $region38: #{discriminator_forward.7} parent=0 // pred_check
    _
  $region39: #{discriminator_forward.7} parent=0 // pred_check_branch
    %288 = sbr.rel (0) target = $region41
  $region40: #{discriminator_forward.7} parent=0 // pred_region
    _
  $region41: #{discriminator_forward.7} parent=0 // pred_fallthru
    _

</llo_original>
